<compile_context>
chip_gen: v7x
topology: tpu7x:2x2x1
jax: 0.10.0
libtpu: 0.0.40
codegen_flags: <defaults>
</compile_context>

<pallas_src>
import jax
import jax.numpy as jnp
from jax import lax
from jax.experimental import pallas as pl
from jax.experimental.pallas import tpu as pltpu

REPR_DIM = 256
ACTION_DIM = 2
EPS = 1e-5


# ----------------------------- Pallas kernels -----------------------------

def _matmul_affine_relu_kernel(x_ref, w_ref, scale_ref, bias_ref, o_ref):
    # y = relu((x @ w) * scale + bias)   -- conv-as-matmul fused with folded BN + ReLU
    y = jnp.dot(x_ref[...], w_ref[...], preferred_element_type=jnp.float32)
    o_ref[...] = jnp.maximum(y * scale_ref[...] + bias_ref[...], 0.0)


def conv_as_matmul(patches, w2d, scale, bias):
    """patches: [N, K] (K un-padded), w2d: [K, Cout], scale/bias: [1, Cout] -> [N, Cout]."""
    N, K = patches.shape
    Cout = w2d.shape[1]
    # Single block when small; otherwise cdiv-tile M (keeps v7x 64 MiB VMEM safe at scale).
    TM = N if N <= 512 else 512
    Npad = ((N + TM - 1) // TM) * TM
    if Npad != N:
        patches = jnp.pad(patches, ((0, Npad - N), (0, 0)))
    out = pl.pallas_call(
        _matmul_affine_relu_kernel,
        out_shape=jax.ShapeDtypeStruct((Npad, Cout), jnp.float32),
        grid=(Npad // TM,),
        in_specs=[
            pl.BlockSpec((TM, K), lambda i: (i, 0)),
            pl.BlockSpec((K, Cout), lambda i: (0, 0)),      # resident weight
            pl.BlockSpec((1, Cout), lambda i: (0, 0)),
            pl.BlockSpec((1, Cout), lambda i: (0, 0)),
        ],
        out_specs=pl.BlockSpec((TM, Cout), lambda i: (i, 0)),
        compiler_params=pltpu.CompilerParams(
            dimension_semantics=("parallel",),
            vmem_limit_bytes=32 * 1024 * 1024),
    )(patches, w2d, scale, bias)
    return out[:N] if Npad != N else out


def _conv3_pool_fc_kernel(p_ref, w_ref, s_ref, b_ref, pool_ref,
                          w1_ref, s1_ref, b1_ref, w2_ref, b2_ref, o_ref):
    # conv3 (as matmul) + BN + ReLU, AdaptiveAvgPool (as a small pooling matmul),
    # Linear + BN1d(folded) + ReLU, Linear + ReLU -- all in VMEM.
    y = jnp.dot(p_ref[...], w_ref[...], preferred_element_type=jnp.float32)   # [B*S, 256]
    y = jnp.maximum(y * s_ref[...] + b_ref[...], 0.0)
    pooled = jnp.dot(pool_ref[...], y, preferred_element_type=jnp.float32)    # [B, 256]
    h = jnp.dot(pooled, w1_ref[...], preferred_element_type=jnp.float32)
    h = jnp.maximum(h * s1_ref[...] + b1_ref[...], 0.0)
    z = jnp.dot(h, w2_ref[...], preferred_element_type=jnp.float32) + b2_ref[...]
    o_ref[...] = jnp.maximum(z, 0.0)


def conv3_pool_fc(patches, w2d, scale, bias, pool_mat, w1, s1, b1, w2, b2):
    B = pool_mat.shape[0]
    return pl.pallas_call(
        _conv3_pool_fc_kernel,
        out_shape=jax.ShapeDtypeStruct((B, REPR_DIM), jnp.float32),
    )(patches, w2d, scale, bias, pool_mat, w1, s1, b1, w2, b2)


def _rollout_kernel(r0_ref, a_ref, w1r_ref, w1a_ref, b1_ref, w2_ref, b2_ref,
                    o_ref, r_sc):
    # Fused T-1 step predictor rollout: repr carry lives in VMEM scratch, weights resident.
    @pl.when(pl.program_id(0) == 0)
    def _():
        r_sc[...] = r0_ref[...]

    r = r_sc[...]                                      # [B, 256]
    a = a_ref[...]                                     # [B, 2]
    h = jnp.dot(r, w1r_ref[...], preferred_element_type=jnp.float32)
    # concat([r, a]) @ W1 == r @ W1r + a @ W1a; the 2-wide action part is a rank-2 VPU update.
    h = h + a[:, 0:1] * w1a_ref[0:1, :] + a[:, 1:2] * w1a_ref[1:2, :]
    h = jnp.maximum(h + b1_ref[...], 0.0)
    nxt = jnp.dot(h, w2_ref[...], preferred_element_type=jnp.float32) + b2_ref[...]
    r_sc[...] = nxt
    o_ref[...] = nxt


def predictor_rollout(r0, actions_tbf, w1r, w1a, b1, w2, b2):
    """r0: [B, 256], actions_tbf: [T-1, B, 2] -> [T-1, B, 256] (serial rollout)."""
    Tm1, B, _ = actions_tbf.shape
    return pl.pallas_call(
        _rollout_kernel,
        out_shape=jax.ShapeDtypeStruct((Tm1, B, REPR_DIM), jnp.float32),
        grid=(Tm1,),
        in_specs=[
            pl.BlockSpec((B, REPR_DIM), lambda t: (0, 0)),
            pl.BlockSpec((None, B, ACTION_DIM), lambda t: (t, 0, 0)),
            pl.BlockSpec((REPR_DIM, REPR_DIM), lambda t: (0, 0)),   # resident
            pl.BlockSpec((ACTION_DIM, REPR_DIM), lambda t: (0, 0)),  # resident
            pl.BlockSpec((1, REPR_DIM), lambda t: (0, 0)),
            pl.BlockSpec((REPR_DIM, REPR_DIM), lambda t: (0, 0)),   # resident
            pl.BlockSpec((1, REPR_DIM), lambda t: (0, 0)),
        ],
        out_specs=pl.BlockSpec((None, B, REPR_DIM), lambda t: (t, 0, 0)),
        scratch_shapes=[pltpu.VMEM((B, REPR_DIM), jnp.float32)],
        compiler_params=pltpu.CompilerParams(
            dimension_semantics=("arbitrary",)),    # serial carry across t
    )(r0, actions_tbf, w1r, w1a, b1, w2, b2)


# ----------------------------- JAX glue -----------------------------

def im2col(x, k=3, stride=2, pad=1):
    """x: [B, H, W, C] -> patches [B*Ho*Wo, k*k*C] (column order: ky, kx, cin)."""
    B, H, W, C = x.shape
    xp = jnp.pad(x, ((0, 0), (pad, pad), (pad, pad), (0, 0)))
    Ho = (H + 2 * pad - k) // stride + 1
    Wo = (W + 2 * pad - k) // stride + 1
    cols = []
    for ky in range(k):
        for kx in range(k):
            cols.append(lax.slice(
                xp,
                (0, ky, kx, 0),
                (B, ky + stride * (Ho - 1) + 1, kx + stride * (Wo - 1) + 1, C),
                (1, stride, stride, 1)))
    p = jnp.concatenate(cols, axis=-1)              # [B, Ho, Wo, k*k*C]
    return p.reshape(B * Ho * Wo, k * k * C), Ho, Wo


def encoder_forward(params, x_nhwc):
    B = x_nhwc.shape[0]
    x = x_nhwc
    for i in range(3):
        patches, Ho, Wo = im2col(x)
        y = conv_as_matmul(patches,
                           params[f"conv{i}_w2d"],
                           params[f"conv{i}_scale"],
                           params[f"conv{i}_bias"])
        x = y.reshape(B, Ho, Wo, y.shape[-1])
    # conv3 fused with global-average-pool + FC head (activation never leaves VMEM).
    patches, Ho, Wo = im2col(x)
    S = Ho * Wo
    pool_mat = (jnp.kron(jnp.eye(B, dtype=jnp.float32),
                         jnp.ones((1, S), jnp.float32)) / S)   # [B, B*S]
    return conv3_pool_fc(patches,
                         params["conv3_w2d"], params["conv3_scale"], params["conv3_bias"],
                         pool_mat,
                         params["fc1_w"], params["fc1_scale"], params["fc1_bias"],
                         params["fc2_w"], params["fc2_b"])


def jepa_forward(params, states, actions):
    """states: [B, T, C, H, W] (NCHW per frame), actions: [B, T-1, 2] -> [B, T, 256]."""
    B, T, C, H, W = states.shape
    x0 = jnp.transpose(states[:, 0], (0, 2, 3, 1))     # NCHW -> NHWC
    r0 = encoder_forward(params, x0)                   # [B, 256]
    if T > 1:
        actions_tbf = jnp.transpose(actions, (1, 0, 2))  # [T-1, B, 2]
        roll = predictor_rollout(r0, actions_tbf,
                                 params["pred_w1r"], params["pred_w1a"],
                                 params["pred_b1"], params["pred_w2"], params["pred_b2"])
        preds = jnp.concatenate([r0[None], roll], axis=0)   # [T, B, 256]
    else:
        preds = r0[None]
    return jnp.transpose(preds, (1, 0, 2))             # [B, T, 256]


# ----------------------------- deterministic parameter init -----------------------------

def init_params(key):
    params = {}
    chans = [2, 32, 64, 128, 256]
    keys = iter(jax.random.split(key, 64))

    def nxt():
        return next(keys)

    # conv stack: Conv2d(k=3,s=2,p=1) + BatchNorm2d(eval, folded) + ReLU
    for i in range(4):
        cin, cout = chans[i], chans[i + 1]
        w = jax.random.normal(nxt(), (3, 3, cin, cout), jnp.float32) * (1.0 / (9 * cin) ** 0.5)
        b = 0.01 * jax.random.normal(nxt(), (cout,), jnp.float32)
        gamma = 1.0 + 0.1 * jax.random.normal(nxt(), (cout,), jnp.float32)
        beta = 0.1 * jax.random.normal(nxt(), (cout,), jnp.float32)
        mean = 0.1 * jax.random.normal(nxt(), (cout,), jnp.float32)
        var = jax.random.uniform(nxt(), (cout,), jnp.float32, minval=0.5, maxval=1.5)
        s = gamma / jnp.sqrt(var + EPS)
        params[f"conv{i}_w2d"] = w.reshape(9 * cin, cout)        # un-padded K
        params[f"conv{i}_scale"] = s.reshape(1, cout)
        params[f"conv{i}_bias"] = ((b - mean) * s + beta).reshape(1, cout)

    # fc: Linear(256,256) + BN1d(eval, folded) + ReLU + Linear(256,256) + ReLU
    w1 = jax.random.normal(nxt(), (REPR_DIM, REPR_DIM), jnp.float32) * (1.0 / REPR_DIM ** 0.5)
    b1 = 0.01 * jax.random.normal(nxt(), (REPR_DIM,), jnp.float32)
    gamma = 1.0 + 0.1 * jax.random.normal(nxt(), (REPR_DIM,), jnp.float32)
    beta = 0.1 * jax.random.normal(nxt(), (REPR_DIM,), jnp.float32)
    mean = 0.1 * jax.random.normal(nxt(), (REPR_DIM,), jnp.float32)
    var = jax.random.uniform(nxt(), (REPR_DIM,), jnp.float32, minval=0.5, maxval=1.5)
    s = gamma / jnp.sqrt(var + EPS)
    params["fc1_w"] = w1
    params["fc1_scale"] = s.reshape(1, REPR_DIM)
    params["fc1_bias"] = ((b1 - mean) * s + beta).reshape(1, REPR_DIM)
    w2 = jax.random.normal(nxt(), (REPR_DIM, REPR_DIM), jnp.float32) * (1.0 / REPR_DIM ** 0.5)
    b2 = 0.01 * jax.random.normal(nxt(), (REPR_DIM,), jnp.float32)
    params["fc2_w"] = w2
    params["fc2_b"] = b2.reshape(1, REPR_DIM)

    # predictor: Linear(256+2, 256) + ReLU + Linear(256, 256)
    fan_in = REPR_DIM + ACTION_DIM
    params["pred_w1r"] = jax.random.normal(nxt(), (REPR_DIM, REPR_DIM), jnp.float32) * (1.0 / fan_in ** 0.5)
    params["pred_w1a"] = jax.random.normal(nxt(), (ACTION_DIM, REPR_DIM), jnp.float32) * (1.0 / fan_in ** 0.5)
    params["pred_b1"] = (0.01 * jax.random.normal(nxt(), (REPR_DIM,), jnp.float32)).reshape(1, REPR_DIM)
    params["pred_w2"] = jax.random.normal(nxt(), (REPR_DIM, REPR_DIM), jnp.float32) * (1.0 / REPR_DIM ** 0.5)
    params["pred_b2"] = (0.01 * jax.random.normal(nxt(), (REPR_DIM,), jnp.float32)).reshape(1, REPR_DIM)
    return params


# ----------------------------- main -----------------------------

if __name__ == "__main__":
    key = jax.random.PRNGKey(0)
    k_par, k_s, k_a = jax.random.split(key, 3)

    B, T, C, H, W = 2, 4, 2, 32, 32
    states = jax.random.normal(k_s, (B, T, C, H, W), jnp.float32)
    actions = jax.random.normal(k_a, (B, T - 1, ACTION_DIM), jnp.float32)

    params = init_params(k_par)

    fwd = jax.jit(jepa_forward)
    out = jax.block_until_ready(fwd(params, states, actions))

    assert out.shape == (B, T, REPR_DIM), out.shape
    assert bool(jnp.all(jnp.isfinite(out)))
    print("KERNEL_OK")
</pallas_src>

<mosaic_0001>
module attributes {stable_mosaic.version = 11 : i64} {
  func.func @_matmul_affine_relu_kernel(%arg0: i32, %arg1: memref<512x18xf32, #tpu.memory_space<vmem>>, %arg2: memref<18x32xf32, #tpu.memory_space<vmem>>, %arg3: memref<1x32xf32, #tpu.memory_space<vmem>>, %arg4: memref<1x32xf32, #tpu.memory_space<vmem>>, %arg5: memref<512x32xf32, #tpu.memory_space<vmem>>) attributes {dimension_semantics = [#tpu.dimension_semantics<parallel>], iteration_bounds = array<i64: 1>, scalar_prefetch = 0 : i64, scratch_operands = 0 : i64, tpu.core_type = #tpu.core_type<tc>, window_params = [{transform_indices = @transform_0, window_bounds = array<i64: 512, 18>}, {pipeline_mode = #tpu.pipeline_mode<synchronous>, transform_indices = @transform_1, window_bounds = array<i64: 18, 32>}, {pipeline_mode = #tpu.pipeline_mode<synchronous>, transform_indices = @transform_2, window_bounds = array<i64: 1, 32>}, {pipeline_mode = #tpu.pipeline_mode<synchronous>, transform_indices = @transform_3, window_bounds = array<i64: 1, 32>}, {transform_indices = @transform_4, window_bounds = array<i64: 512, 32>}]} {
    %c0 = arith.constant 0 : index
    %c0_0 = arith.constant 0 : index
    %0 = vector.load %arg1[%c0, %c0_0] : memref<512x18xf32, #tpu.memory_space<vmem>>, vector<512x18xf32>
    %c0_1 = arith.constant 0 : index
    %c0_2 = arith.constant 0 : index
    %1 = vector.load %arg2[%c0_1, %c0_2] : memref<18x32xf32, #tpu.memory_space<vmem>>, vector<18x32xf32>
    %cst = arith.constant dense<0.000000e+00> : vector<512x32xf32>
    %2 = tpu.matmul %0, %1, %cst {dimension_numbers = #tpu.dot_dimension_numbers<[1], [0], [0], [1], [0, 0, 1, 1], [], []>} : vector<512x18xf32>, vector<18x32xf32>, vector<512x32xf32> -> vector<512x32xf32>
    %c0_3 = arith.constant 0 : index
    %c0_4 = arith.constant 0 : index
    %3 = vector.load %arg3[%c0_3, %c0_4] : memref<1x32xf32, #tpu.memory_space<vmem>>, vector<1x32xf32>
    %4 = vector.broadcast %3 : vector<1x32xf32> to vector<512x32xf32>
    %5 = arith.mulf %2, %4 : vector<512x32xf32>
    %c0_5 = arith.constant 0 : index
    %c0_6 = arith.constant 0 : index
    %6 = vector.load %arg4[%c0_5, %c0_6] : memref<1x32xf32, #tpu.memory_space<vmem>>, vector<1x32xf32>
    %7 = vector.broadcast %6 : vector<1x32xf32> to vector<512x32xf32>
    %8 = arith.addf %5, %7 : vector<512x32xf32>
    %cst_7 = arith.constant 0.000000e+00 : f32
    %9 = vector.broadcast %cst_7 : f32 to vector<512x32xf32>
    %10 = arith.maximumf %8, %9 : vector<512x32xf32>
    %c0_8 = arith.constant 0 : index
    %c0_9 = arith.constant 0 : index
    %11 = vector.load %arg5[%c0_8, %c0_9] : memref<512x32xf32, #tpu.memory_space<vmem>>, vector<512x32xf32>
    tpu.vector_store %arg5[%c0_8, %c0_9], %10 {strides = array<i32>} : memref<512x32xf32, #tpu.memory_space<vmem>>, vector<512x32xf32>,
    return
  }
  func.func @transform_0(%arg0: i32) -> (i32, i32) {
    %c0_i32 = arith.constant 0 : i32
    %c0_i32_0 = arith.constant 0 : i32
    return %arg0, %c0_i32 : i32, i32
  }
  func.func @transform_1(%arg0: i32) -> (i32, i32) {
    %c0_i32 = arith.constant 0 : i32
    %c0_i32_0 = arith.constant 0 : i32
    %c0_i32_1 = arith.constant 0 : i32
    return %c0_i32, %c0_i32_0 : i32, i32
  }
  func.func @transform_2(%arg0: i32) -> (i32, i32) {
    %c0_i32 = arith.constant 0 : i32
    %c0_i32_0 = arith.constant 0 : i32
    %c0_i32_1 = arith.constant 0 : i32
    return %c0_i32, %c0_i32_0 : i32, i32
  }
  func.func @transform_3(%arg0: i32) -> (i32, i32) {
    %c0_i32 = arith.constant 0 : i32
    %c0_i32_0 = arith.constant 0 : i32
    %c0_i32_1 = arith.constant 0 : i32
    return %c0_i32, %c0_i32_0 : i32, i32
  }
  func.func @transform_4(%arg0: i32) -> (i32, i32) {
    %c0_i32 = arith.constant 0 : i32
    %c0_i32_0 = arith.constant 0 : i32
    return %arg0, %c0_i32 : i32, i32
  }
}

module attributes {stable_mosaic.version = 11 : i64} {
  func.func @_matmul_affine_relu_kernel(%arg0: i32, %arg1: memref<128x288xf32, #tpu.memory_space<vmem>>, %arg2: memref<288x64xf32, #tpu.memory_space<vmem>>, %arg3: memref<1x64xf32, #tpu.memory_space<vmem>>, %arg4: memref<1x64xf32, #tpu.memory_space<vmem>>, %arg5: memref<128x64xf32, #tpu.memory_space<vmem>>) attributes {dimension_semantics = [#tpu.dimension_semantics<parallel>], iteration_bounds = array<i64: 1>, scalar_prefetch = 0 : i64, scratch_operands = 0 : i64, tpu.core_type = #tpu.core_type<tc>, window_params = [{transform_indices = @transform_0, window_bounds = array<i64: 128, 288>}, {pipeline_mode = #tpu.pipeline_mode<synchronous>, transform_indices = @transform_1, window_bounds = array<i64: 288, 64>}, {pipeline_mode = #tpu.pipeline_mode<synchronous>, transform_indices = @transform_2, window_bounds = array<i64: 1, 64>}, {pipeline_mode = #tpu.pipeline_mode<synchronous>, transform_indices = @transform_3, window_bounds = array<i64: 1, 64>}, {transform_indices = @transform_4, window_bounds = array<i64: 128, 64>}]} {
    %c0 = arith.constant 0 : index
    %c0_0 = arith.constant 0 : index
    %0 = vector.load %arg1[%c0, %c0_0] : memref<128x288xf32, #tpu.memory_space<vmem>>, vector<128x288xf32>
    %c0_1 = arith.constant 0 : index
    %c0_2 = arith.constant 0 : index
    %1 = vector.load %arg2[%c0_1, %c0_2] : memref<288x64xf32, #tpu.memory_space<vmem>>, vector<288x64xf32>
    %cst = arith.constant dense<0.000000e+00> : vector<128x64xf32>
    %2 = tpu.matmul %0, %1, %cst {dimension_numbers = #tpu.dot_dimension_numbers<[1], [0], [0], [1], [0, 0, 1, 1], [], []>} : vector<128x288xf32>, vector<288x64xf32>, vector<128x64xf32> -> vector<128x64xf32>
    %c0_3 = arith.constant 0 : index
    %c0_4 = arith.constant 0 : index
    %3 = vector.load %arg3[%c0_3, %c0_4] : memref<1x64xf32, #tpu.memory_space<vmem>>, vector<1x64xf32>
    %4 = vector.broadcast %3 : vector<1x64xf32> to vector<128x64xf32>
    %5 = arith.mulf %2, %4 : vector<128x64xf32>
    %c0_5 = arith.constant 0 : index
    %c0_6 = arith.constant 0 : index
    %6 = vector.load %arg4[%c0_5, %c0_6] : memref<1x64xf32, #tpu.memory_space<vmem>>, vector<1x64xf32>
    %7 = vector.broadcast %6 : vector<1x64xf32> to vector<128x64xf32>
    %8 = arith.addf %5, %7 : vector<128x64xf32>
    %cst_7 = arith.constant 0.000000e+00 : f32
    %9 = vector.broadcast %cst_7 : f32 to vector<128x64xf32>
    %10 = arith.maximumf %8, %9 : vector<128x64xf32>
    %c0_8 = arith.constant 0 : index
    %c0_9 = arith.constant 0 : index
    %11 = vector.load %arg5[%c0_8, %c0_9] : memref<128x64xf32, #tpu.memory_space<vmem>>, vector<128x64xf32>
    tpu.vector_store %arg5[%c0_8, %c0_9], %10 {strides = array<i32>} : memref<128x64xf32, #tpu.memory_space<vmem>>, vector<128x64xf32>,
    return
  }
  func.func @transform_0(%arg0: i32) -> (i32, i32) {
    %c0_i32 = arith.constant 0 : i32
    %c0_i32_0 = arith.constant 0 : i32
    return %arg0, %c0_i32 : i32, i32
  }
  func.func @transform_1(%arg0: i32) -> (i32, i32) {
    %c0_i32 = arith.constant 0 : i32
    %c0_i32_0 = arith.constant 0 : i32
    %c0_i32_1 = arith.constant 0 : i32
    return %c0_i32, %c0_i32_0 : i32, i32
  }
  func.func @transform_2(%arg0: i32) -> (i32, i32) {
    %c0_i32 = arith.constant 0 : i32
    %c0_i32_0 = arith.constant 0 : i32
    %c0_i32_1 = arith.constant 0 : i32
    return %c0_i32, %c0_i32_0 : i32, i32
  }
  func.func @transform_3(%arg0: i32) -> (i32, i32) {
    %c0_i32 = arith.constant 0 : i32
    %c0_i32_0 = arith.constant 0 : i32
    %c0_i32_1 = arith.constant 0 : i32
    return %c0_i32, %c0_i32_0 : i32, i32
  }
  func.func @transform_4(%arg0: i32) -> (i32, i32) {
    %c0_i32 = arith.constant 0 : i32
    %c0_i32_0 = arith.constant 0 : i32
    return %arg0, %c0_i32 : i32, i32
  }
}

module attributes {stable_mosaic.version = 11 : i64} {
  func.func @_matmul_affine_relu_kernel(%arg0: i32, %arg1: memref<32x576xf32, #tpu.memory_space<vmem>>, %arg2: memref<576x128xf32, #tpu.memory_space<vmem>>, %arg3: memref<1x128xf32, #tpu.memory_space<vmem>>, %arg4: memref<1x128xf32, #tpu.memory_space<vmem>>, %arg5: memref<32x128xf32, #tpu.memory_space<vmem>>) attributes {dimension_semantics = [#tpu.dimension_semantics<parallel>], iteration_bounds = array<i64: 1>, scalar_prefetch = 0 : i64, scratch_operands = 0 : i64, tpu.core_type = #tpu.core_type<tc>, window_params = [{transform_indices = @transform_0, window_bounds = array<i64: 32, 576>}, {pipeline_mode = #tpu.pipeline_mode<synchronous>, transform_indices = @transform_1, window_bounds = array<i64: 576, 128>}, {pipeline_mode = #tpu.pipeline_mode<synchronous>, transform_indices = @transform_2, window_bounds = array<i64: 1, 128>}, {pipeline_mode = #tpu.pipeline_mode<synchronous>, transform_indices = @transform_3, window_bounds = array<i64: 1, 128>}, {transform_indices = @transform_4, window_bounds = array<i64: 32, 128>}]} {
    %c0 = arith.constant 0 : index
    %c0_0 = arith.constant 0 : index
    %0 = vector.load %arg1[%c0, %c0_0] : memref<32x576xf32, #tpu.memory_space<vmem>>, vector<32x576xf32>
    %c0_1 = arith.constant 0 : index
    %c0_2 = arith.constant 0 : index
    %1 = vector.load %arg2[%c0_1, %c0_2] : memref<576x128xf32, #tpu.memory_space<vmem>>, vector<576x128xf32>
    %cst = arith.constant dense<0.000000e+00> : vector<32x128xf32>
    %2 = tpu.matmul %0, %1, %cst {dimension_numbers = #tpu.dot_dimension_numbers<[1], [0], [0], [1], [0, 0, 1, 1], [], []>} : vector<32x576xf32>, vector<576x128xf32>, vector<32x128xf32> -> vector<32x128xf32>
    %c0_3 = arith.constant 0 : index
    %c0_4 = arith.constant 0 : index
    %3 = vector.load %arg3[%c0_3, %c0_4] : memref<1x128xf32, #tpu.memory_space<vmem>>, vector<1x128xf32>
    %4 = vector.broadcast %3 : vector<1x128xf32> to vector<32x128xf32>
    %5 = arith.mulf %2, %4 : vector<32x128xf32>
    %c0_5 = arith.constant 0 : index
    %c0_6 = arith.constant 0 : index
    %6 = vector.load %arg4[%c0_5, %c0_6] : memref<1x128xf32, #tpu.memory_space<vmem>>, vector<1x128xf32>
    %7 = vector.broadcast %6 : vector<1x128xf32> to vector<32x128xf32>
    %8 = arith.addf %5, %7 : vector<32x128xf32>
    %cst_7 = arith.constant 0.000000e+00 : f32
    %9 = vector.broadcast %cst_7 : f32 to vector<32x128xf32>
    %10 = arith.maximumf %8, %9 : vector<32x128xf32>
    %c0_8 = arith.constant 0 : index
    %c0_9 = arith.constant 0 : index
    %11 = vector.load %arg5[%c0_8, %c0_9] : memref<32x128xf32, #tpu.memory_space<vmem>>, vector<32x128xf32>
    tpu.vector_store %arg5[%c0_8, %c0_9], %10 {strides = array<i32>} : memref<32x128xf32, #tpu.memory_space<vmem>>, vector<32x128xf32>,
    return
  }
  func.func @transform_0(%arg0: i32) -> (i32, i32) {
    %c0_i32 = arith.constant 0 : i32
    %c0_i32_0 = arith.constant 0 : i32
    return %arg0, %c0_i32 : i32, i32
  }
  func.func @transform_1(%arg0: i32) -> (i32, i32) {
    %c0_i32 = arith.constant 0 : i32
    %c0_i32_0 = arith.constant 0 : i32
    %c0_i32_1 = arith.constant 0 : i32
    return %c0_i32, %c0_i32_0 : i32, i32
  }
  func.func @transform_2(%arg0: i32) -> (i32, i32) {
    %c0_i32 = arith.constant 0 : i32
    %c0_i32_0 = arith.constant 0 : i32
    %c0_i32_1 = arith.constant 0 : i32
    return %c0_i32, %c0_i32_0 : i32, i32
  }
  func.func @transform_3(%arg0: i32) -> (i32, i32) {
    %c0_i32 = arith.constant 0 : i32
    %c0_i32_0 = arith.constant 0 : i32
    %c0_i32_1 = arith.constant 0 : i32
    return %c0_i32, %c0_i32_0 : i32, i32
  }
  func.func @transform_4(%arg0: i32) -> (i32, i32) {
    %c0_i32 = arith.constant 0 : i32
    %c0_i32_0 = arith.constant 0 : i32
    return %arg0, %c0_i32 : i32, i32
  }
}

module attributes {stable_mosaic.version = 11 : i64} {
  func.func @_conv3_pool_fc_kernel(%arg0: memref<8x1152xf32, #tpu.memory_space<vmem>>, %arg1: memref<1152x256xf32, #tpu.memory_space<vmem>>, %arg2: memref<1x256xf32, #tpu.memory_space<vmem>>, %arg3: memref<1x256xf32, #tpu.memory_space<vmem>>, %arg4: memref<2x8xf32, #tpu.memory_space<vmem>>, %arg5: memref<256x256xf32, #tpu.memory_space<vmem>>, %arg6: memref<1x256xf32, #tpu.memory_space<vmem>>, %arg7: memref<1x256xf32, #tpu.memory_space<vmem>>, %arg8: memref<256x256xf32, #tpu.memory_space<vmem>>, %arg9: memref<1x256xf32, #tpu.memory_space<vmem>>, %arg10: memref<2x256xf32, #tpu.memory_space<vmem>>) attributes {dimension_semantics = [], scalar_prefetch = 0 : i64, scratch_operands = 0 : i64, tpu.core_type = #tpu.core_type<tc>} {
    %c0 = arith.constant 0 : index
    %c0_0 = arith.constant 0 : index
    %0 = vector.load %arg0[%c0, %c0_0] : memref<8x1152xf32, #tpu.memory_space<vmem>>, vector<8x1152xf32>
    %c0_1 = arith.constant 0 : index
    %c0_2 = arith.constant 0 : index
    %1 = vector.load %arg1[%c0_1, %c0_2] : memref<1152x256xf32, #tpu.memory_space<vmem>>, vector<1152x256xf32>
    %cst = arith.constant dense<0.000000e+00> : vector<8x256xf32>
    %2 = tpu.matmul %0, %1, %cst {dimension_numbers = #tpu.dot_dimension_numbers<[1], [0], [0], [1], [0, 0, 1, 1], [], []>} : vector<8x1152xf32>, vector<1152x256xf32>, vector<8x256xf32> -> vector<8x256xf32>
    %c0_3 = arith.constant 0 : index
    %c0_4 = arith.constant 0 : index
    %3 = vector.load %arg2[%c0_3, %c0_4] : memref<1x256xf32, #tpu.memory_space<vmem>>, vector<1x256xf32>
    %4 = vector.broadcast %3 : vector<1x256xf32> to vector<8x256xf32>
    %5 = arith.mulf %2, %4 : vector<8x256xf32>
    %c0_5 = arith.constant 0 : index
    %c0_6 = arith.constant 0 : index
    %6 = vector.load %arg3[%c0_5, %c0_6] : memref<1x256xf32, #tpu.memory_space<vmem>>, vector<1x256xf32>
    %7 = vector.broadcast %6 : vector<1x256xf32> to vector<8x256xf32>
    %8 = arith.addf %5, %7 : vector<8x256xf32>
    %cst_7 = arith.constant 0.000000e+00 : f32
    %9 = vector.broadcast %cst_7 : f32 to vector<8x256xf32>
    %10 = arith.maximumf %8, %9 : vector<8x256xf32>
    %c0_8 = arith.constant 0 : index
    %c0_9 = arith.constant 0 : index
    %11 = vector.load %arg4[%c0_8, %c0_9] : memref<2x8xf32, #tpu.memory_space<vmem>>, vector<2x8xf32>
    %cst_10 = arith.constant dense<0.000000e+00> : vector<2x256xf32>
    %12 = tpu.matmul %11, %10, %cst_10 {dimension_numbers = #tpu.dot_dimension_numbers<[1], [0], [0], [1], [0, 0, 1, 1], [], []>} : vector<2x8xf32>, vector<8x256xf32>, vector<2x256xf32> -> vector<2x256xf32>
    %c0_11 = arith.constant 0 : index
    %c0_12 = arith.constant 0 : index
    %13 = vector.load %arg5[%c0_11, %c0_12] : memref<256x256xf32, #tpu.memory_space<vmem>>, vector<256x256xf32>
    %cst_13 = arith.constant dense<0.000000e+00> : vector<2x256xf32>
    %14 = tpu.matmul %12, %13, %cst_13 {dimension_numbers = #tpu.dot_dimension_numbers<[1], [0], [0], [1], [0, 0, 1, 1], [], []>} : vector<2x256xf32>, vector<256x256xf32>, vector<2x256xf32> -> vector<2x256xf32>
    %c0_14 = arith.constant 0 : index
    %c0_15 = arith.constant 0 : index
    %15 = vector.load %arg6[%c0_14, %c0_15] : memref<1x256xf32, #tpu.memory_space<vmem>>, vector<1x256xf32>
    %16 = vector.broadcast %15 : vector<1x256xf32> to vector<2x256xf32>
    %17 = arith.mulf %14, %16 : vector<2x256xf32>
    %c0_16 = arith.constant 0 : index
    %c0_17 = arith.constant 0 : index
    %18 = vector.load %arg7[%c0_16, %c0_17] : memref<1x256xf32, #tpu.memory_space<vmem>>, vector<1x256xf32>
    %19 = vector.broadcast %18 : vector<1x256xf32> to vector<2x256xf32>
    %20 = arith.addf %17, %19 : vector<2x256xf32>
    %cst_18 = arith.constant 0.000000e+00 : f32
    %21 = vector.broadcast %cst_18 : f32 to vector<2x256xf32>
    %22 = arith.maximumf %20, %21 : vector<2x256xf32>
    %c0_19 = arith.constant 0 : index
    %c0_20 = arith.constant 0 : index
    %23 = vector.load %arg8[%c0_19, %c0_20] : memref<256x256xf32, #tpu.memory_space<vmem>>, vector<256x256xf32>
    %cst_21 = arith.constant dense<0.000000e+00> : vector<2x256xf32>
    %24 = tpu.matmul %22, %23, %cst_21 {dimension_numbers = #tpu.dot_dimension_numbers<[1], [0], [0], [1], [0, 0, 1, 1], [], []>} : vector<2x256xf32>, vector<256x256xf32>, vector<2x256xf32> -> vector<2x256xf32>
    %c0_22 = arith.constant 0 : index
    %c0_23 = arith.constant 0 : index
    %25 = vector.load %arg9[%c0_22, %c0_23] : memref<1x256xf32, #tpu.memory_space<vmem>>, vector<1x256xf32>
    %26 = vector.broadcast %25 : vector<1x256xf32> to vector<2x256xf32>
    %27 = arith.addf %24, %26 : vector<2x256xf32>
    %cst_24 = arith.constant 0.000000e+00 : f32
    %28 = vector.broadcast %cst_24 : f32 to vector<2x256xf32>
    %29 = arith.maximumf %27, %28 : vector<2x256xf32>
    %c0_25 = arith.constant 0 : index
    %c0_26 = arith.constant 0 : index
    %30 = vector.load %arg10[%c0_25, %c0_26] : memref<2x256xf32, #tpu.memory_space<vmem>>, vector<2x256xf32>
    tpu.vector_store %arg10[%c0_25, %c0_26], %29 {strides = array<i32>} : memref<2x256xf32, #tpu.memory_space<vmem>>, vector<2x256xf32>,
    return
  }
}

module attributes {stable_mosaic.version = 11 : i64} {
  func.func @_rollout_kernel(%arg0: i32, %arg1: memref<2x256xf32, #tpu.memory_space<vmem>>, %arg2: memref<1x2x2xf32, #tpu.memory_space<vmem>>, %arg3: memref<256x256xf32, #tpu.memory_space<vmem>>, %arg4: memref<2x256xf32, #tpu.memory_space<vmem>>, %arg5: memref<1x256xf32, #tpu.memory_space<vmem>>, %arg6: memref<256x256xf32, #tpu.memory_space<vmem>>, %arg7: memref<1x256xf32, #tpu.memory_space<vmem>>, %arg8: memref<1x2x256xf32, #tpu.memory_space<vmem>>, %arg9: memref<2x256xf32, #tpu.memory_space<vmem>>) attributes {dimension_semantics = [#tpu.dimension_semantics<arbitrary>], iteration_bounds = array<i64: 3>, scalar_prefetch = 0 : i64, scratch_operands = 1 : i64, tpu.core_type = #tpu.core_type<tc>, window_params = [{pipeline_mode = #tpu.pipeline_mode<synchronous>, transform_indices = @transform_0, window_bounds = array<i64: 2, 256>}, {transform_indices = @transform_1, window_bounds = array<i64: 1, 2, 2>}, {pipeline_mode = #tpu.pipeline_mode<synchronous>, transform_indices = @transform_2, window_bounds = array<i64: 256, 256>}, {pipeline_mode = #tpu.pipeline_mode<synchronous>, transform_indices = @transform_3, window_bounds = array<i64: 2, 256>}, {pipeline_mode = #tpu.pipeline_mode<synchronous>, transform_indices = @transform_4, window_bounds = array<i64: 1, 256>}, {pipeline_mode = #tpu.pipeline_mode<synchronous>, transform_indices = @transform_5, window_bounds = array<i64: 256, 256>}, {pipeline_mode = #tpu.pipeline_mode<synchronous>, transform_indices = @transform_6, window_bounds = array<i64: 1, 256>}, {transform_indices = @transform_7, window_bounds = array<i64: 1, 2, 256>}]} {
    %c0_i32 = arith.constant 0 : i32
    %0 = arith.cmpi eq, %arg0, %c0_i32 : i32
    %1 = arith.extui %0 : i1 to i32
    %c0_i32_0 = arith.constant 0 : i32
    %2 = arith.cmpi ne, %1, %c0_i32_0 : i32
    scf.if %2 {
      %c0_23 = arith.constant 0 : index
      %c0_24 = arith.constant 0 : index
      %34 = vector.load %arg1[%c0_23, %c0_24] : memref<2x256xf32, #tpu.memory_space<vmem>>, vector<2x256xf32>
      %c0_25 = arith.constant 0 : index
      %c0_26 = arith.constant 0 : index
      %35 = vector.load %arg9[%c0_25, %c0_26] : memref<2x256xf32, #tpu.memory_space<vmem>>, vector<2x256xf32>
      tpu.vector_store %arg9[%c0_25, %c0_26], %34 {strides = array<i32>} : memref<2x256xf32, #tpu.memory_space<vmem>>, vector<2x256xf32>,
    } else {
    }
    %c0 = arith.constant 0 : index
    %c0_1 = arith.constant 0 : index
    %3 = vector.load %arg9[%c0, %c0_1] : memref<2x256xf32, #tpu.memory_space<vmem>>, vector<2x256xf32>
    %c0_2 = arith.constant 0 : index
    %c0_3 = arith.constant 0 : index
    %c0_4 = arith.constant 0 : index
    %4 = vector.load %arg2[%c0_2, %c0_3, %c0_4] : memref<1x2x2xf32, #tpu.memory_space<vmem>>, vector<1x2x2xf32>
    %5 = vector.shape_cast %4 : vector<1x2x2xf32> to vector<2x2xf32>
    %c0_5 = arith.constant 0 : index
    %c0_6 = arith.constant 0 : index
    %6 = vector.load %arg3[%c0_5, %c0_6] : memref<256x256xf32, #tpu.memory_space<vmem>>, vector<256x256xf32>
    %cst = arith.constant dense<0.000000e+00> : vector<2x256xf32>
    %7 = tpu.matmul %3, %6, %cst {dimension_numbers = #tpu.dot_dimension_numbers<[1], [0], [0], [1], [0, 0, 1, 1], [], []>} : vector<2x256xf32>, vector<256x256xf32>, vector<2x256xf32> -> vector<2x256xf32>
    %8 = vector.extract_strided_slice %5 {offsets = [0, 0], sizes = [2, 1], strides = [1, 1]} : vector<2x2xf32> to vector<2x1xf32>
    %c0_7 = arith.constant 0 : index
    %c0_8 = arith.constant 0 : index
    %9 = vector.load %arg4[%c0_7, %c0_8] : memref<2x256xf32, #tpu.memory_space<vmem>>, vector<1x256xf32>
    %10 = vector.broadcast %8 : vector<2x1xf32> to vector<2x256xf32>
    %11 = vector.broadcast %9 : vector<1x256xf32> to vector<2x256xf32>
    %12 = arith.mulf %10, %11 : vector<2x256xf32>
    %13 = arith.addf %7, %12 : vector<2x256xf32>
    %14 = vector.extract_strided_slice %5 {offsets = [0, 1], sizes = [2, 1], strides = [1, 1]} : vector<2x2xf32> to vector<2x1xf32>
    %c1 = arith.constant 1 : index
    %c0_9 = arith.constant 0 : index
    %15 = vector.load %arg4[%c1, %c0_9] : memref<2x256xf32, #tpu.memory_space<vmem>>, vector<1x256xf32>
    %16 = vector.broadcast %14 : vector<2x1xf32> to vector<2x256xf32>
    %17 = vector.broadcast %15 : vector<1x256xf32> to vector<2x256xf32>
    %18 = arith.mulf %16, %17 : vector<2x256xf32>
    %19 = arith.addf %13, %18 : vector<2x256xf32>
    %c0_10 = arith.constant 0 : index
    %c0_11 = arith.constant 0 : index
    %20 = vector.load %arg5[%c0_10, %c0_11] : memref<1x256xf32, #tpu.memory_space<vmem>>, vector<1x256xf32>
    %21 = vector.broadcast %20 : vector<1x256xf32> to vector<2x256xf32>
    %22 = arith.addf %19, %21 : vector<2x256xf32>
    %cst_12 = arith.constant 0.000000e+00 : f32
    %23 = vector.broadcast %cst_12 : f32 to vector<2x256xf32>
    %24 = arith.maximumf %22, %23 : vector<2x256xf32>
    %c0_13 = arith.constant 0 : index
    %c0_14 = arith.constant 0 : index
    %25 = vector.load %arg6[%c0_13, %c0_14] : memref<256x256xf32, #tpu.memory_space<vmem>>, vector<256x256xf32>
    %cst_15 = arith.constant dense<0.000000e+00> : vector<2x256xf32>
    %26 = tpu.matmul %24, %25, %cst_15 {dimension_numbers = #tpu.dot_dimension_numbers<[1], [0], [0], [1], [0, 0, 1, 1], [], []>} : vector<2x256xf32>, vector<256x256xf32>, vector<2x256xf32> -> vector<2x256xf32>
    %c0_16 = arith.constant 0 : index
    %c0_17 = arith.constant 0 : index
    %27 = vector.load %arg7[%c0_16, %c0_17] : memref<1x256xf32, #tpu.memory_space<vmem>>, vector<1x256xf32>
    %28 = vector.broadcast %27 : vector<1x256xf32> to vector<2x256xf32>
    %29 = arith.addf %26, %28 : vector<2x256xf32>
    %c0_18 = arith.constant 0 : index
    %c0_19 = arith.constant 0 : index
    %30 = vector.load %arg9[%c0_18, %c0_19] : memref<2x256xf32, #tpu.memory_space<vmem>>, vector<2x256xf32>
    tpu.vector_store %arg9[%c0_18, %c0_19], %29 {strides = array<i32>} : memref<2x256xf32, #tpu.memory_space<vmem>>, vector<2x256xf32>,
    %c0_20 = arith.constant 0 : index
    %c0_21 = arith.constant 0 : index
    %c0_22 = arith.constant 0 : index
    %31 = vector.load %arg8[%c0_20, %c0_21, %c0_22] : memref<1x2x256xf32, #tpu.memory_space<vmem>>, vector<1x2x256xf32>
    %32 = vector.shape_cast %31 : vector<1x2x256xf32> to vector<2x256xf32>
    %33 = vector.shape_cast %29 : vector<2x256xf32> to vector<1x2x256xf32>
    tpu.vector_store %arg8[%c0_20, %c0_21, %c0_22], %33 {strides = array<i32>} : memref<1x2x256xf32, #tpu.memory_space<vmem>>, vector<1x2x256xf32>,
    return
  }
  func.func @transform_0(%arg0: i32) -> (i32, i32) {
    %c0_i32 = arith.constant 0 : i32
    %c0_i32_0 = arith.constant 0 : i32
    %c0_i32_1 = arith.constant 0 : i32
    return %c0_i32, %c0_i32_0 : i32, i32
  }
  func.func @transform_1(%arg0: i32) -> (i32, i32, i32) {
    %c0_i32 = arith.constant 0 : i32
    %c0_i32_0 = arith.constant 0 : i32
    %c0_i32_1 = arith.constant 0 : i32
    return %arg0, %c0_i32, %c0_i32_0 : i32, i32, i32
  }
  func.func @transform_2(%arg0: i32) -> (i32, i32) {
    %c0_i32 = arith.constant 0 : i32
    %c0_i32_0 = arith.constant 0 : i32
    %c0_i32_1 = arith.constant 0 : i32
    return %c0_i32, %c0_i32_0 : i32, i32
  }
  func.func @transform_3(%arg0: i32) -> (i32, i32) {
    %c0_i32 = arith.constant 0 : i32
    %c0_i32_0 = arith.constant 0 : i32
    %c0_i32_1 = arith.constant 0 : i32
    return %c0_i32, %c0_i32_0 : i32, i32
  }
  func.func @transform_4(%arg0: i32) -> (i32, i32) {
    %c0_i32 = arith.constant 0 : i32
    %c0_i32_0 = arith.constant 0 : i32
    %c0_i32_1 = arith.constant 0 : i32
    return %c0_i32, %c0_i32_0 : i32, i32
  }
  func.func @transform_5(%arg0: i32) -> (i32, i32) {
    %c0_i32 = arith.constant 0 : i32
    %c0_i32_0 = arith.constant 0 : i32
    %c0_i32_1 = arith.constant 0 : i32
    return %c0_i32, %c0_i32_0 : i32, i32
  }
  func.func @transform_6(%arg0: i32) -> (i32, i32) {
    %c0_i32 = arith.constant 0 : i32
    %c0_i32_0 = arith.constant 0 : i32
    %c0_i32_1 = arith.constant 0 : i32
    return %c0_i32, %c0_i32_0 : i32, i32
  }
  func.func @transform_7(%arg0: i32) -> (i32, i32, i32) {
    %c0_i32 = arith.constant 0 : i32
    %c0_i32_0 = arith.constant 0 : i32
    %c0_i32_1 = arith.constant 0 : i32
    return %arg0, %c0_i32, %c0_i32_0 : i32, i32, i32
  }
}

</mosaic_0001>

<llo_original>
// kernel: jepa_forward.5
$region0: #{jepa_forward.5}
  #allocation0 [shape = 'u32[]', space=smem, size = 0x4, offset = 0x4, fixed_abs, tag = 'smem constant byte address 0x4 - core index']
  #allocation1 [shape = 'u32[144,128]{1,0:T(1,128)}', space=vmem, size = 0x12000, scoped, tag = 'internal scratch']
  %s0 = inlined_call_operand.vmem [shape: f32[512,18], index: 0, kind: input, shape index: {}]
  %s1 = inlined_call_operand.vmem [shape: f32[18,32], index: 1, kind: input, shape index: {}]
  %s2 = inlined_call_operand.vmem [shape: f32[1,32], index: 2, kind: input, shape index: {}]
  %s3 = inlined_call_operand.vmem [shape: f32[1,32], index: 3, kind: input, shape index: {}]
  %s4 = inlined_call_operand.vmem [shape: f32[512,32], index: 4, kind: output, shape index: {}]
  %s5 = sld [smem:[#allocation0]]
  $region26: #{jepa_forward.5} parent=0
    _
  %s7 = ssub.s32 1, %s5
  %s8 = scalar_select 0, %s7, %s5
  // Predicated region
  $region2: #{jepa_forward.5} parent=0 // pred_check
    _
  $region3: #{jepa_forward.5} parent=0 // pred_check_branch
    %10 = sbr.rel (0) target = $region5
  $region4: #{jepa_forward.5} parent=0 // pred_region
    _
  $region5: #{jepa_forward.5} parent=0 // pred_fallthru
    _
  // Predicated region
  $region6: #{jepa_forward.5} parent=0 // pred_check
    _
  $region7: #{jepa_forward.5} parent=0 // pred_check_branch
    %12 = sbr.rel (0) target = $region9
  $region8: #{jepa_forward.5} parent=0 // pred_region
    _
  $region9: #{jepa_forward.5} parent=0 // pred_fallthru
    _
  // Predicated region
  $region10: #{jepa_forward.5} parent=0 // pred_check
    _
  $region11: #{jepa_forward.5} parent=0 // pred_check_branch
    %14 = sbr.rel (0) target = $region13
  $region12: #{jepa_forward.5} parent=0 // pred_region
    _
  $region13: #{jepa_forward.5} parent=0 // pred_fallthru
    _
  // Predicated region
  $region14: #{jepa_forward.5} parent=0 // pred_check
    _
  $region15: #{jepa_forward.5} parent=0 // pred_check_branch
    %16 = sbr.rel (0) target = $region17
  $region16: #{jepa_forward.5} parent=0 // pred_region
    _
  $region17: #{jepa_forward.5} parent=0 // pred_fallthru
    _
  %v17 = vld [vmem:[%s0] sm:$0xff]
  %v18 = vld [vmem:[%s0 + $0x8] sm:$0xff]
  %v19 = vld [vmem:[%s0 + $0x10] sm:$0xff]
  %v20 = vld [vmem:[%s0 + $0x18] sm:$0xff]
  %v21 = vld [vmem:[%s0 + $0x20] sm:$0xff]
  %v22 = vld [vmem:[%s0 + $0x28] sm:$0xff]
  %v23 = vld [vmem:[%s0 + $0x30] sm:$0xff]
  %v24 = vld [vmem:[%s0 + $0x38] sm:$0xff]
  %v25 = vld [vmem:[%s0 + $0x40] sm:$0xff]
  %v26 = vld [vmem:[%s0 + $0x48] sm:$0xff]
  %v27 = vld [vmem:[%s0 + $0x50] sm:$0xff]
  %v28 = vld [vmem:[%s0 + $0x58] sm:$0xff]
  %v29 = vld [vmem:[%s0 + $0x60] sm:$0xff]
  %v30 = vld [vmem:[%s0 + $0x68] sm:$0xff]
  %v31 = vld [vmem:[%s0 + $0x70] sm:$0xff]
  %v32 = vld [vmem:[%s0 + $0x78] sm:$0xff]
  %v33 = vld [vmem:[%s0 + $0x80] sm:$0xff]
  %v34 = vld [vmem:[%s0 + $0x88] sm:$0xff]
  %v35 = vld [vmem:[%s0 + $0x90] sm:$0xff]
  %v36 = vld [vmem:[%s0 + $0x98] sm:$0xff]
  %v37 = vld [vmem:[%s0 + $0xa0] sm:$0xff]
  %v38 = vld [vmem:[%s0 + $0xa8] sm:$0xff]
  %v39 = vld [vmem:[%s0 + $0xb0] sm:$0xff]
  %v40 = vld [vmem:[%s0 + $0xb8] sm:$0xff]
  %v41 = vld [vmem:[%s0 + $0xc0] sm:$0xff]
  %v42 = vld [vmem:[%s0 + $0xc8] sm:$0xff]
  %v43 = vld [vmem:[%s0 + $0xd0] sm:$0xff]
  %v44 = vld [vmem:[%s0 + $0xd8] sm:$0xff]
  %v45 = vld [vmem:[%s0 + $0xe0] sm:$0xff]
  %v46 = vld [vmem:[%s0 + $0xe8] sm:$0xff]
  %v47 = vld [vmem:[%s0 + $0xf0] sm:$0xff]
  %v48 = vld [vmem:[%s0 + $0xf8] sm:$0xff]
  %v49 = vld [vmem:[%s0 + $0x100] sm:$0xff]
  %v50 = vld [vmem:[%s0 + $0x108] sm:$0xff]
  %v51 = vld [vmem:[%s0 + $0x110] sm:$0xff]
  %v52 = vld [vmem:[%s0 + $0x118] sm:$0xff]
  %v53 = vld [vmem:[%s0 + $0x120] sm:$0xff]
  %v54 = vld [vmem:[%s0 + $0x128] sm:$0xff]
  %v55 = vld [vmem:[%s0 + $0x130] sm:$0xff]
  %v56 = vld [vmem:[%s0 + $0x138] sm:$0xff]
  %v57 = vld [vmem:[%s0 + $0x140] sm:$0xff]
  %v58 = vld [vmem:[%s0 + $0x148] sm:$0xff]
  %v59 = vld [vmem:[%s0 + $0x150] sm:$0xff]
  %v60 = vld [vmem:[%s0 + $0x158] sm:$0xff]
  %v61 = vld [vmem:[%s0 + $0x160] sm:$0xff]
  %v62 = vld [vmem:[%s0 + $0x168] sm:$0xff]
  %v63 = vld [vmem:[%s0 + $0x170] sm:$0xff]
  %v64 = vld [vmem:[%s0 + $0x178] sm:$0xff]
  %v65 = vld [vmem:[%s0 + $0x180] sm:$0xff]
  %v66 = vld [vmem:[%s0 + $0x188] sm:$0xff]
  %v67 = vld [vmem:[%s0 + $0x190] sm:$0xff]
  %v68 = vld [vmem:[%s0 + $0x198] sm:$0xff]
  %v69 = vld [vmem:[%s0 + $0x1a0] sm:$0xff]
  %v70 = vld [vmem:[%s0 + $0x1a8] sm:$0xff]
  %v71 = vld [vmem:[%s0 + $0x1b0] sm:$0xff]
  %v72 = vld [vmem:[%s0 + $0x1b8] sm:$0xff]
  %v73 = vld [vmem:[%s0 + $0x1c0] sm:$0xff]
  %v74 = vld [vmem:[%s0 + $0x1c8] sm:$0xff]
  %v75 = vld [vmem:[%s0 + $0x1d0] sm:$0xff]
  %v76 = vld [vmem:[%s0 + $0x1d8] sm:$0xff]
  %v77 = vld [vmem:[%s0 + $0x1e0] sm:$0xff]
  %v78 = vld [vmem:[%s0 + $0x1e8] sm:$0xff]
  %v79 = vld [vmem:[%s0 + $0x1f0] sm:$0xff]
  %v80 = vld [vmem:[%s0 + $0x1f8] sm:$0xff]
  %v81 = vld [vmem:[%s1] sm:$0xff]
  %v82 = vld [vmem:[%s1 + $0x8] sm:$0xff]
  %v83 = vld [vmem:[%s1 + $0x10] sm:$0x3]
  %vm84 = vcmask 146432
  %v86 = vsel %vm84, %v17, 0
  %v89 = vsel %vm84, %v18, 0
  %v92 = vsel %vm84, %v19, 0
  %v95 = vsel %vm84, %v20, 0
  %v98 = vsel %vm84, %v21, 0
  %v101 = vsel %vm84, %v22, 0
  %v104 = vsel %vm84, %v23, 0
  %v107 = vsel %vm84, %v24, 0
  %v110 = vsel %vm84, %v25, 0
  %v113 = vsel %vm84, %v26, 0
  %v116 = vsel %vm84, %v27, 0
  %v119 = vsel %vm84, %v28, 0
  %v122 = vsel %vm84, %v29, 0
  %v125 = vsel %vm84, %v30, 0
  %v128 = vsel %vm84, %v31, 0
  %v131 = vsel %vm84, %v32, 0
  %v134 = vsel %vm84, %v33, 0
  %v137 = vsel %vm84, %v34, 0
  %v140 = vsel %vm84, %v35, 0
  %v143 = vsel %vm84, %v36, 0
  %v146 = vsel %vm84, %v37, 0
  %v149 = vsel %vm84, %v38, 0
  %v152 = vsel %vm84, %v39, 0
  %v155 = vsel %vm84, %v40, 0
  %v158 = vsel %vm84, %v41, 0
  %v161 = vsel %vm84, %v42, 0
  %v164 = vsel %vm84, %v43, 0
  %v167 = vsel %vm84, %v44, 0
  %v170 = vsel %vm84, %v45, 0
  %v173 = vsel %vm84, %v46, 0
  %v176 = vsel %vm84, %v47, 0
  %v179 = vsel %vm84, %v48, 0
  %v182 = vsel %vm84, %v49, 0
  %v185 = vsel %vm84, %v50, 0
  %v188 = vsel %vm84, %v51, 0
  %v191 = vsel %vm84, %v52, 0
  %v194 = vsel %vm84, %v53, 0
  %v197 = vsel %vm84, %v54, 0
  %v200 = vsel %vm84, %v55, 0
  %v203 = vsel %vm84, %v56, 0
  %v206 = vsel %vm84, %v57, 0
  %v209 = vsel %vm84, %v58, 0
  %v212 = vsel %vm84, %v59, 0
  %v215 = vsel %vm84, %v60, 0
  %v218 = vsel %vm84, %v61, 0
  %v221 = vsel %vm84, %v62, 0
  %v224 = vsel %vm84, %v63, 0
  %v227 = vsel %vm84, %v64, 0
  %v230 = vsel %vm84, %v65, 0
  %v233 = vsel %vm84, %v66, 0
  %v236 = vsel %vm84, %v67, 0
  %v239 = vsel %vm84, %v68, 0
  %v242 = vsel %vm84, %v69, 0
  %v245 = vsel %vm84, %v70, 0
  %v248 = vsel %vm84, %v71, 0
  %v251 = vsel %vm84, %v72, 0
  %v254 = vsel %vm84, %v73, 0
  %v257 = vsel %vm84, %v74, 0
  %v260 = vsel %vm84, %v75, 0
  %v263 = vsel %vm84, %v76, 0
  %v266 = vsel %vm84, %v77, 0
  %v269 = vsel %vm84, %v78, 0
  %v272 = vsel %vm84, %v79, 0
  %v275 = vsel %vm84, %v80, 0
  %vm277 = vcmask 1041408
  %v279 = vsel %vm277, %v83, 0
  %281 = vmatprep.subr.mxu0 0.0
  %282 = vmatpush1.msra.mxu0 %v81
  %283 = vmatprep.subr.mxu0 0.0
  %284 = vmatpush1.msra.mxu0 %v82
  %285 = vmatprep.subr.mxu0 0.0
  %286 = vmatpush1.msra.mxu0 %v279
  %287 = vmatprep.subr.mxu0 0.0
  %288 = vmatpush1.msra.mxu0 0.0
  %289 = vmatprep.subr.mxu0 0.0
  %290 = vmatpush1.msra.mxu0 0.0
  %291 = vmatprep.subr.mxu0 0.0
  %292 = vmatpush1.msra.mxu0 0.0
  %293 = vmatprep.subr.mxu0 0.0
  %294 = vmatpush1.msra.mxu0 0.0
  %295 = vmatprep.subr.mxu0 0.0
  %296 = vmatpush1.msra.mxu0 0.0
  %297 = vmatprep.subr.mxu0 0.0
  %298 = vmatpush1.msra.mxu0 0.0
  %299 = vmatprep.subr.mxu0 0.0
  %300 = vmatpush1.msra.mxu0 0.0
  %301 = vmatprep.subr.mxu0 0.0
  %302 = vmatpush1.msra.mxu0 0.0
  %303 = vmatprep.subr.mxu0 0.0
  %304 = vmatpush1.msra.mxu0 0.0
  %305 = vmatprep.subr.mxu0 0.0
  %306 = vmatpush1.msra.mxu0 0.0
  %307 = vmatprep.subr.mxu0 0.0
  %308 = vmatpush1.msra.mxu0 0.0
  %309 = vmatprep.subr.mxu0 0.0
  %310 = vmatpush1.msra.mxu0 0.0
  %311 = vmatprep.subr.mxu0 0.0
  %312 = vmatpush1.msra.mxu0 0.0
  %313 = vmatprep.subr.mxu0 0.0
  %314 = vmatpush1.msra.mxu0 0.0
  %315 = vmatprep.subr.mxu0 0.0
  %316 = vmatpush1.msra.mxu0 0.0
  %317 = vmatprep.subr.mxu0 0.0
  %318 = vmatpush1.msra.mxu0 0.0
  %319 = vmatprep.subr.mxu0 0.0
  %320 = vmatpush1.msra.mxu0 0.0
  %321 = vmatprep.subr.mxu0 0.0
  %322 = vmatpush1.msra.mxu0 0.0
  %323 = vmatprep.subr.mxu0 0.0
  %324 = vmatpush1.msra.mxu0 0.0
  %325 = vmatprep.subr.mxu0 0.0
  %326 = vmatpush1.msra.mxu0 0.0
  %327 = vmatprep.subr.mxu0 0.0
  %328 = vmatpush1.msra.mxu0 0.0
  %329 = vmatprep.subr.mxu0 0.0
  %330 = vmatpush1.msra.mxu0 0.0
  %331 = vmatprep.subr.mxu0 0.0
  %332 = vmatpush1.msra.mxu0 0.0
  %333 = vmatprep.subr.mxu0 0.0
  %334 = vmatpush1.msra.mxu0 0.0
  %335 = vmatprep.subr.mxu0 0.0
  %336 = vmatpush1.msra.mxu0 0.0
  %337 = vmatprep.subr.mxu0 0.0
  %338 = vmatpush1.msra.mxu0 0.0
  %339 = vmatprep.subr.mxu0 0.0
  %340 = vmatpush1.msra.mxu0 0.0
  %341 = vmatprep.subr.mxu0 0.0
  %342 = vmatpush1.msra.mxu0 0.0
  %343 = vmatprep.subr.mxu0 0.0
  %344 = vmatpush1.msra.mxu0 0.0
  %345 = vmatprep.mubr.f32.mxu0 0.0
  %346 = vmatmul.mubr.f32.gmra.mrb[0].mxu0 %v86
  %v347 = vpop.f32.mrb[0].mxu0
  %v348 = vadd.f32 0.0, %v347
  %v349 = vpop.f32.mrb[0].mxu0
  %350 = vmatprep.mubr.f32.mxu0 0.0
  %351 = vmatmul.mubr.f32.gmra.mrb[0].mxu0 %v89
  %v352 = vpop.f32.mrb[0].mxu0
  %v353 = vadd.f32 0.0, %v352
  %v354 = vpop.f32.mrb[0].mxu0
  %355 = vmatprep.mubr.f32.mxu0 0.0
  %356 = vmatmul.mubr.f32.gmra.mrb[0].mxu0 %v92
  %v357 = vpop.f32.mrb[0].mxu0
  %v358 = vadd.f32 0.0, %v357
  %v359 = vpop.f32.mrb[0].mxu0
  %360 = vmatprep.mubr.f32.mxu0 0.0
  %361 = vmatmul.mubr.f32.gmra.mrb[0].mxu0 %v95
  %v362 = vpop.f32.mrb[0].mxu0
  %v363 = vadd.f32 0.0, %v362
  %v364 = vpop.f32.mrb[0].mxu0
  %365 = vmatprep.mubr.f32.mxu0 0.0
  %366 = vmatmul.mubr.f32.gmra.mrb[0].mxu0 %v98
  %v367 = vpop.f32.mrb[0].mxu0
  %v368 = vadd.f32 0.0, %v367
  %v369 = vpop.f32.mrb[0].mxu0
  %370 = vmatprep.mubr.f32.mxu0 0.0
  %371 = vmatmul.mubr.f32.gmra.mrb[0].mxu0 %v101
  %v372 = vpop.f32.mrb[0].mxu0
  %v373 = vadd.f32 0.0, %v372
  %v374 = vpop.f32.mrb[0].mxu0
  %375 = vmatprep.mubr.f32.mxu0 0.0
  %376 = vmatmul.mubr.f32.gmra.mrb[0].mxu0 %v104
  %v377 = vpop.f32.mrb[0].mxu0
  %v378 = vadd.f32 0.0, %v377
  %v379 = vpop.f32.mrb[0].mxu0
  %380 = vmatprep.mubr.f32.mxu0 0.0
  %381 = vmatmul.mubr.f32.gmra.mrb[0].mxu0 %v107
  %v382 = vpop.f32.mrb[0].mxu0
  %v383 = vadd.f32 0.0, %v382
  %v384 = vpop.f32.mrb[0].mxu0
  %385 = vmatprep.mubr.f32.mxu0 0.0
  %386 = vmatmul.mubr.f32.gmra.mrb[0].mxu0 %v110
  %v387 = vpop.f32.mrb[0].mxu0
  %v388 = vadd.f32 0.0, %v387
  %v389 = vpop.f32.mrb[0].mxu0
  %390 = vmatprep.mubr.f32.mxu0 0.0
  %391 = vmatmul.mubr.f32.gmra.mrb[0].mxu0 %v113
  %v392 = vpop.f32.mrb[0].mxu0
  %v393 = vadd.f32 0.0, %v392
  %v394 = vpop.f32.mrb[0].mxu0
  %395 = vmatprep.mubr.f32.mxu0 0.0
  %396 = vmatmul.mubr.f32.gmra.mrb[0].mxu0 %v116
  %v397 = vpop.f32.mrb[0].mxu0
  %v398 = vadd.f32 0.0, %v397
  %v399 = vpop.f32.mrb[0].mxu0
  %400 = vmatprep.mubr.f32.mxu0 0.0
  %401 = vmatmul.mubr.f32.gmra.mrb[0].mxu0 %v119
  %v402 = vpop.f32.mrb[0].mxu0
  %v403 = vadd.f32 0.0, %v402
  %v404 = vpop.f32.mrb[0].mxu0
  %405 = vmatprep.mubr.f32.mxu0 0.0
  %406 = vmatmul.mubr.f32.gmra.mrb[0].mxu0 %v122
  %v407 = vpop.f32.mrb[0].mxu0
  %v408 = vadd.f32 0.0, %v407
  %v409 = vpop.f32.mrb[0].mxu0
  %410 = vmatprep.mubr.f32.mxu0 0.0
  %411 = vmatmul.mubr.f32.gmra.mrb[0].mxu0 %v125
  %v412 = vpop.f32.mrb[0].mxu0
  %v413 = vadd.f32 0.0, %v412
  %v414 = vpop.f32.mrb[0].mxu0
  %415 = vmatprep.mubr.f32.mxu0 0.0
  %416 = vmatmul.mubr.f32.gmra.mrb[0].mxu0 %v128
  %v417 = vpop.f32.mrb[0].mxu0
  %v418 = vadd.f32 0.0, %v417
  %v419 = vpop.f32.mrb[0].mxu0
  %420 = vmatprep.mubr.f32.mxu0 0.0
  %421 = vmatmul.mubr.f32.gmra.mrb[0].mxu0 %v131
  %v422 = vpop.f32.mrb[0].mxu0
  %v423 = vadd.f32 0.0, %v422
  %v424 = vpop.f32.mrb[0].mxu0
  %425 = vmatprep.mubr.f32.mxu0 0.0
  %426 = vmatmul.mubr.f32.gmra.mrb[0].mxu0 %v134
  %v427 = vpop.f32.mrb[0].mxu0
  %v428 = vadd.f32 0.0, %v427
  %v429 = vpop.f32.mrb[0].mxu0
  %430 = vmatprep.mubr.f32.mxu0 0.0
  %431 = vmatmul.mubr.f32.gmra.mrb[0].mxu0 %v137
  %v432 = vpop.f32.mrb[0].mxu0
  %v433 = vadd.f32 0.0, %v432
  %v434 = vpop.f32.mrb[0].mxu0
  %435 = vmatprep.mubr.f32.mxu0 0.0
  %436 = vmatmul.mubr.f32.gmra.mrb[0].mxu0 %v140
  %v437 = vpop.f32.mrb[0].mxu0
  %v438 = vadd.f32 0.0, %v437
  %v439 = vpop.f32.mrb[0].mxu0
  %440 = vmatprep.mubr.f32.mxu0 0.0
  %441 = vmatmul.mubr.f32.gmra.mrb[0].mxu0 %v143
  %v442 = vpop.f32.mrb[0].mxu0
  %v443 = vadd.f32 0.0, %v442
  %v444 = vpop.f32.mrb[0].mxu0
  %445 = vmatprep.mubr.f32.mxu0 0.0
  %446 = vmatmul.mubr.f32.gmra.mrb[0].mxu0 %v146
  %v447 = vpop.f32.mrb[0].mxu0
  %v448 = vadd.f32 0.0, %v447
  %v449 = vpop.f32.mrb[0].mxu0
  %450 = vmatprep.mubr.f32.mxu0 0.0
  %451 = vmatmul.mubr.f32.gmra.mrb[0].mxu0 %v149
  %v452 = vpop.f32.mrb[0].mxu0
  %v453 = vadd.f32 0.0, %v452
  %v454 = vpop.f32.mrb[0].mxu0
  %455 = vmatprep.mubr.f32.mxu0 0.0
  %456 = vmatmul.mubr.f32.gmra.mrb[0].mxu0 %v152
  %v457 = vpop.f32.mrb[0].mxu0
  %v458 = vadd.f32 0.0, %v457
  %v459 = vpop.f32.mrb[0].mxu0
  %460 = vmatprep.mubr.f32.mxu0 0.0
  %461 = vmatmul.mubr.f32.gmra.mrb[0].mxu0 %v155
  %v462 = vpop.f32.mrb[0].mxu0
  %v463 = vadd.f32 0.0, %v462
  %v464 = vpop.f32.mrb[0].mxu0
  %465 = vmatprep.mubr.f32.mxu0 0.0
  %466 = vmatmul.mubr.f32.gmra.mrb[0].mxu0 %v158
  %v467 = vpop.f32.mrb[0].mxu0
  %v468 = vadd.f32 0.0, %v467
  %v469 = vpop.f32.mrb[0].mxu0
  %470 = vmatprep.mubr.f32.mxu0 0.0
  %471 = vmatmul.mubr.f32.gmra.mrb[0].mxu0 %v161
  %v472 = vpop.f32.mrb[0].mxu0
  %v473 = vadd.f32 0.0, %v472
  %v474 = vpop.f32.mrb[0].mxu0
  %475 = vmatprep.mubr.f32.mxu0 0.0
  %476 = vmatmul.mubr.f32.gmra.mrb[0].mxu0 %v164
  %v477 = vpop.f32.mrb[0].mxu0
  %v478 = vadd.f32 0.0, %v477
  %v479 = vpop.f32.mrb[0].mxu0
  %480 = vmatprep.mubr.f32.mxu0 0.0
  %481 = vmatmul.mubr.f32.gmra.mrb[0].mxu0 %v167
  %v482 = vpop.f32.mrb[0].mxu0
  %v483 = vadd.f32 0.0, %v482
  %v484 = vpop.f32.mrb[0].mxu0
  %485 = vmatprep.mubr.f32.mxu0 0.0
  %486 = vmatmul.mubr.f32.gmra.mrb[0].mxu0 %v170
  %v487 = vpop.f32.mrb[0].mxu0
  %v488 = vadd.f32 0.0, %v487
  %v489 = vpop.f32.mrb[0].mxu0
  %490 = vmatprep.mubr.f32.mxu0 0.0
  %491 = vmatmul.mubr.f32.gmra.mrb[0].mxu0 %v173
  %v492 = vpop.f32.mrb[0].mxu0
  %v493 = vadd.f32 0.0, %v492
  %v494 = vpop.f32.mrb[0].mxu0
  %495 = vmatprep.mubr.f32.mxu0 0.0
  %496 = vmatmul.mubr.f32.gmra.mrb[0].mxu0 %v176
  %v497 = vpop.f32.mrb[0].mxu0
  %v498 = vadd.f32 0.0, %v497
  %v499 = vpop.f32.mrb[0].mxu0
  %500 = vmatprep.mubr.f32.mxu0 0.0
  %501 = vmatmul.mubr.f32.gmra.mrb[0].mxu0 %v179
  %v502 = vpop.f32.mrb[0].mxu0
  %v503 = vadd.f32 0.0, %v502
  %v504 = vpop.f32.mrb[0].mxu0
  %505 = vmatprep.mubr.f32.mxu0 0.0
  %506 = vmatmul.mubr.f32.gmra.mrb[0].mxu0 %v182
  %v507 = vpop.f32.mrb[0].mxu0
  %v508 = vadd.f32 0.0, %v507
  %v509 = vpop.f32.mrb[0].mxu0
  %510 = vmatprep.mubr.f32.mxu0 0.0
  %511 = vmatmul.mubr.f32.gmra.mrb[0].mxu0 %v185
  %v512 = vpop.f32.mrb[0].mxu0
  %v513 = vadd.f32 0.0, %v512
  %v514 = vpop.f32.mrb[0].mxu0
  %515 = vmatprep.mubr.f32.mxu0 0.0
  %516 = vmatmul.mubr.f32.gmra.mrb[0].mxu0 %v188
  %v517 = vpop.f32.mrb[0].mxu0
  %v518 = vadd.f32 0.0, %v517
  %v519 = vpop.f32.mrb[0].mxu0
  %520 = vmatprep.mubr.f32.mxu0 0.0
  %521 = vmatmul.mubr.f32.gmra.mrb[0].mxu0 %v191
  %v522 = vpop.f32.mrb[0].mxu0
  %v523 = vadd.f32 0.0, %v522
  %v524 = vpop.f32.mrb[0].mxu0
  %525 = vmatprep.mubr.f32.mxu0 0.0
  %526 = vmatmul.mubr.f32.gmra.mrb[0].mxu0 %v194
  %v527 = vpop.f32.mrb[0].mxu0
  %v528 = vadd.f32 0.0, %v527
  %v529 = vpop.f32.mrb[0].mxu0
  %530 = vmatprep.mubr.f32.mxu0 0.0
  %531 = vmatmul.mubr.f32.gmra.mrb[0].mxu0 %v197
  %v532 = vpop.f32.mrb[0].mxu0
  %v533 = vadd.f32 0.0, %v532
  %v534 = vpop.f32.mrb[0].mxu0
  %535 = vmatprep.mubr.f32.mxu0 0.0
  %536 = vmatmul.mubr.f32.gmra.mrb[0].mxu0 %v200
  %v537 = vpop.f32.mrb[0].mxu0
  %v538 = vadd.f32 0.0, %v537
  %v539 = vpop.f32.mrb[0].mxu0
  %540 = vmatprep.mubr.f32.mxu0 0.0
  %541 = vmatmul.mubr.f32.gmra.mrb[0].mxu0 %v203
  %v542 = vpop.f32.mrb[0].mxu0
  %v543 = vadd.f32 0.0, %v542
  %v544 = vpop.f32.mrb[0].mxu0
  %545 = vmatprep.mubr.f32.mxu0 0.0
  %546 = vmatmul.mubr.f32.gmra.mrb[0].mxu0 %v206
  %v547 = vpop.f32.mrb[0].mxu0
  %v548 = vadd.f32 0.0, %v547
  %v549 = vpop.f32.mrb[0].mxu0
  %550 = vmatprep.mubr.f32.mxu0 0.0
  %551 = vmatmul.mubr.f32.gmra.mrb[0].mxu0 %v209
  %v552 = vpop.f32.mrb[0].mxu0
  %v553 = vadd.f32 0.0, %v552
  %v554 = vpop.f32.mrb[0].mxu0
  %555 = vmatprep.mubr.f32.mxu0 0.0
  %556 = vmatmul.mubr.f32.gmra.mrb[0].mxu0 %v212
  %v557 = vpop.f32.mrb[0].mxu0
  %v558 = vadd.f32 0.0, %v557
  %v559 = vpop.f32.mrb[0].mxu0
  %560 = vmatprep.mubr.f32.mxu0 0.0
  %561 = vmatmul.mubr.f32.gmra.mrb[0].mxu0 %v215
  %v562 = vpop.f32.mrb[0].mxu0
  %v563 = vadd.f32 0.0, %v562
  %v564 = vpop.f32.mrb[0].mxu0
  %565 = vmatprep.mubr.f32.mxu0 0.0
  %566 = vmatmul.mubr.f32.gmra.mrb[0].mxu0 %v218
  %v567 = vpop.f32.mrb[0].mxu0
  %v568 = vadd.f32 0.0, %v567
  %v569 = vpop.f32.mrb[0].mxu0
  %570 = vmatprep.mubr.f32.mxu0 0.0
  %571 = vmatmul.mubr.f32.gmra.mrb[0].mxu0 %v221
  %v572 = vpop.f32.mrb[0].mxu0
  %v573 = vadd.f32 0.0, %v572
  %v574 = vpop.f32.mrb[0].mxu0
  %575 = vmatprep.mubr.f32.mxu0 0.0
  %576 = vmatmul.mubr.f32.gmra.mrb[0].mxu0 %v224
  %v577 = vpop.f32.mrb[0].mxu0
  %v578 = vadd.f32 0.0, %v577
  %v579 = vpop.f32.mrb[0].mxu0
  %580 = vmatprep.mubr.f32.mxu0 0.0
  %581 = vmatmul.mubr.f32.gmra.mrb[0].mxu0 %v227
  %v582 = vpop.f32.mrb[0].mxu0
  %v583 = vadd.f32 0.0, %v582
  %v584 = vpop.f32.mrb[0].mxu0
  %585 = vmatprep.mubr.f32.mxu0 0.0
  %586 = vmatmul.mubr.f32.gmra.mrb[0].mxu0 %v230
  %v587 = vpop.f32.mrb[0].mxu0
  %v588 = vadd.f32 0.0, %v587
  %v589 = vpop.f32.mrb[0].mxu0
  %590 = vmatprep.mubr.f32.mxu0 0.0
  %591 = vmatmul.mubr.f32.gmra.mrb[0].mxu0 %v233
  %v592 = vpop.f32.mrb[0].mxu0
  %v593 = vadd.f32 0.0, %v592
  %v594 = vpop.f32.mrb[0].mxu0
  %595 = vmatprep.mubr.f32.mxu0 0.0
  %596 = vmatmul.mubr.f32.gmra.mrb[0].mxu0 %v236
  %v597 = vpop.f32.mrb[0].mxu0
  %v598 = vadd.f32 0.0, %v597
  %v599 = vpop.f32.mrb[0].mxu0
  %600 = vmatprep.mubr.f32.mxu0 0.0
  %601 = vmatmul.mubr.f32.gmra.mrb[0].mxu0 %v239
  %v602 = vpop.f32.mrb[0].mxu0
  %v603 = vadd.f32 0.0, %v602
  %v604 = vpop.f32.mrb[0].mxu0
  %605 = vmatprep.mubr.f32.mxu0 0.0
  %606 = vmatmul.mubr.f32.gmra.mrb[0].mxu0 %v242
  %v607 = vpop.f32.mrb[0].mxu0
  %v608 = vadd.f32 0.0, %v607
  %v609 = vpop.f32.mrb[0].mxu0
  %610 = vmatprep.mubr.f32.mxu0 0.0
  %611 = vmatmul.mubr.f32.gmra.mrb[0].mxu0 %v245
  %v612 = vpop.f32.mrb[0].mxu0
  %v613 = vadd.f32 0.0, %v612
  %v614 = vpop.f32.mrb[0].mxu0
  %615 = vmatprep.mubr.f32.mxu0 0.0
  %616 = vmatmul.mubr.f32.gmra.mrb[0].mxu0 %v248
  %v617 = vpop.f32.mrb[0].mxu0
  %v618 = vadd.f32 0.0, %v617
  %v619 = vpop.f32.mrb[0].mxu0
  %620 = vmatprep.mubr.f32.mxu0 0.0
  %621 = vmatmul.mubr.f32.gmra.mrb[0].mxu0 %v251
  %v622 = vpop.f32.mrb[0].mxu0
  %v623 = vadd.f32 0.0, %v622
  %v624 = vpop.f32.mrb[0].mxu0
  %625 = vmatprep.mubr.f32.mxu0 0.0
  %626 = vmatmul.mubr.f32.gmra.mrb[0].mxu0 %v254
  %v627 = vpop.f32.mrb[0].mxu0
  %v628 = vadd.f32 0.0, %v627
  %v629 = vpop.f32.mrb[0].mxu0
  %630 = vmatprep.mubr.f32.mxu0 0.0
  %631 = vmatmul.mubr.f32.gmra.mrb[0].mxu0 %v257
  %v632 = vpop.f32.mrb[0].mxu0
  %v633 = vadd.f32 0.0, %v632
  %v634 = vpop.f32.mrb[0].mxu0
  %635 = vmatprep.mubr.f32.mxu0 0.0
  %636 = vmatmul.mubr.f32.gmra.mrb[0].mxu0 %v260
  %v637 = vpop.f32.mrb[0].mxu0
  %v638 = vadd.f32 0.0, %v637
  %v639 = vpop.f32.mrb[0].mxu0
  %640 = vmatprep.mubr.f32.mxu0 0.0
  %641 = vmatmul.mubr.f32.gmra.mrb[0].mxu0 %v263
  %v642 = vpop.f32.mrb[0].mxu0
  %v643 = vadd.f32 0.0, %v642
  %v644 = vpop.f32.mrb[0].mxu0
  %645 = vmatprep.mubr.f32.mxu0 0.0
  %646 = vmatmul.mubr.f32.gmra.mrb[0].mxu0 %v266
  %v647 = vpop.f32.mrb[0].mxu0
  %v648 = vadd.f32 0.0, %v647
  %v649 = vpop.f32.mrb[0].mxu0
  %650 = vmatprep.mubr.f32.mxu0 0.0
  %651 = vmatmul.mubr.f32.gmra.mrb[0].mxu0 %v269
  %v652 = vpop.f32.mrb[0].mxu0
  %v653 = vadd.f32 0.0, %v652
  %v654 = vpop.f32.mrb[0].mxu0
  %655 = vmatprep.mubr.f32.mxu0 0.0
  %656 = vmatmul.mubr.f32.gmra.mrb[0].mxu0 %v272
  %v657 = vpop.f32.mrb[0].mxu0
  %v658 = vadd.f32 0.0, %v657
  %v659 = vpop.f32.mrb[0].mxu0
  %660 = vmatprep.mubr.f32.mxu0 0.0
  %661 = vmatmul.mubr.f32.gmra.mrb[0].mxu0 %v275
  %v662 = vpop.f32.mrb[0].mxu0
  %v663 = vadd.f32 0.0, %v662
  %v664 = vpop.f32.mrb[0].mxu0
  %665 = vdwg.mxu0
  %v666 = vld [vmem:[%s2] sm:$0x1]
  %v668 = vlaneseq
  %v669 = vshrl.u32 %v668, 7
  %v670 = vsub.s32 0, %v669
  %v671 = vrot.slane %v666, %v670
  %v673 = vmul.f32 %v348, %v671
  %v674 = vmul.f32 %v353, %v671
  %v675 = vmul.f32 %v358, %v671
  %v676 = vmul.f32 %v363, %v671
  %v677 = vmul.f32 %v368, %v671
  %v678 = vmul.f32 %v373, %v671
  %v679 = vmul.f32 %v378, %v671
  %v680 = vmul.f32 %v383, %v671
  %v681 = vmul.f32 %v388, %v671
  %v682 = vmul.f32 %v393, %v671
  %v683 = vmul.f32 %v398, %v671
  %v684 = vmul.f32 %v403, %v671
  %v685 = vmul.f32 %v408, %v671
  %v686 = vmul.f32 %v413, %v671
  %v687 = vmul.f32 %v418, %v671
  %v688 = vmul.f32 %v423, %v671
  %v689 = vmul.f32 %v428, %v671
  %v690 = vmul.f32 %v433, %v671
  %v691 = vmul.f32 %v438, %v671
  %v692 = vmul.f32 %v443, %v671
  %v693 = vmul.f32 %v448, %v671
  %v694 = vmul.f32 %v453, %v671
  %v695 = vmul.f32 %v458, %v671
  %v696 = vmul.f32 %v463, %v671
  %v697 = vmul.f32 %v468, %v671
  %v698 = vmul.f32 %v473, %v671
  %v699 = vmul.f32 %v478, %v671
  %v700 = vmul.f32 %v483, %v671
  %v701 = vmul.f32 %v488, %v671
  %v702 = vmul.f32 %v493, %v671
  %v703 = vmul.f32 %v498, %v671
  %v704 = vmul.f32 %v503, %v671
  %v705 = vmul.f32 %v508, %v671
  %v706 = vmul.f32 %v513, %v671
  %v707 = vmul.f32 %v518, %v671
  %v708 = vmul.f32 %v523, %v671
  %v709 = vmul.f32 %v528, %v671
  %v710 = vmul.f32 %v533, %v671
  %v711 = vmul.f32 %v538, %v671
  %v712 = vmul.f32 %v543, %v671
  %v713 = vmul.f32 %v548, %v671
  %v714 = vmul.f32 %v553, %v671
  %v715 = vmul.f32 %v558, %v671
  %v716 = vmul.f32 %v563, %v671
  %v717 = vmul.f32 %v568, %v671
  %v718 = vmul.f32 %v573, %v671
  %v719 = vmul.f32 %v578, %v671
  %v720 = vmul.f32 %v583, %v671
  %v721 = vmul.f32 %v588, %v671
  %v722 = vmul.f32 %v593, %v671
  %v723 = vmul.f32 %v598, %v671
  %v724 = vmul.f32 %v603, %v671
  %v725 = vmul.f32 %v608, %v671
  %v726 = vmul.f32 %v613, %v671
  %v727 = vmul.f32 %v618, %v671
  %v728 = vmul.f32 %v623, %v671
  %v729 = vmul.f32 %v628, %v671
  %v730 = vmul.f32 %v633, %v671
  %v731 = vmul.f32 %v638, %v671
  %v732 = vmul.f32 %v643, %v671
  %v733 = vmul.f32 %v648, %v671
  %v734 = vmul.f32 %v653, %v671
  %v735 = vmul.f32 %v658, %v671
  %v736 = vmul.f32 %v663, %v671
  %v737 = vld [vmem:[%s3] sm:$0x1]
  %v739 = vlaneseq
  %v740 = vshrl.u32 %v739, 7
  %v741 = vsub.s32 0, %v740
  %v742 = vrot.slane %v737, %v741
  %v744 = vadd.f32 %v673, %v742
  %v745 = vadd.f32 %v674, %v742
  %v746 = vadd.f32 %v675, %v742
  %v747 = vadd.f32 %v676, %v742
  %v748 = vadd.f32 %v677, %v742
  %v749 = vadd.f32 %v678, %v742
  %v750 = vadd.f32 %v679, %v742
  %v751 = vadd.f32 %v680, %v742
  %v752 = vadd.f32 %v681, %v742
  %v753 = vadd.f32 %v682, %v742
  %v754 = vadd.f32 %v683, %v742
  %v755 = vadd.f32 %v684, %v742
  %v756 = vadd.f32 %v685, %v742
  %v757 = vadd.f32 %v686, %v742
  %v758 = vadd.f32 %v687, %v742
  %v759 = vadd.f32 %v688, %v742
  %v760 = vadd.f32 %v689, %v742
  %v761 = vadd.f32 %v690, %v742
  %v762 = vadd.f32 %v691, %v742
  %v763 = vadd.f32 %v692, %v742
  %v764 = vadd.f32 %v693, %v742
  %v765 = vadd.f32 %v694, %v742
  %v766 = vadd.f32 %v695, %v742
  %v767 = vadd.f32 %v696, %v742
  %v768 = vadd.f32 %v697, %v742
  %v769 = vadd.f32 %v698, %v742
  %v770 = vadd.f32 %v699, %v742
  %v771 = vadd.f32 %v700, %v742
  %v772 = vadd.f32 %v701, %v742
  %v773 = vadd.f32 %v702, %v742
  %v774 = vadd.f32 %v703, %v742
  %v775 = vadd.f32 %v704, %v742
  %v776 = vadd.f32 %v705, %v742
  %v777 = vadd.f32 %v706, %v742
  %v778 = vadd.f32 %v707, %v742
  %v779 = vadd.f32 %v708, %v742
  %v780 = vadd.f32 %v709, %v742
  %v781 = vadd.f32 %v710, %v742
  %v782 = vadd.f32 %v711, %v742
  %v783 = vadd.f32 %v712, %v742
  %v784 = vadd.f32 %v713, %v742
  %v785 = vadd.f32 %v714, %v742
  %v786 = vadd.f32 %v715, %v742
  %v787 = vadd.f32 %v716, %v742
  %v788 = vadd.f32 %v717, %v742
  %v789 = vadd.f32 %v718, %v742
  %v790 = vadd.f32 %v719, %v742
  %v791 = vadd.f32 %v720, %v742
  %v792 = vadd.f32 %v721, %v742
  %v793 = vadd.f32 %v722, %v742
  %v794 = vadd.f32 %v723, %v742
  %v795 = vadd.f32 %v724, %v742
  %v796 = vadd.f32 %v725, %v742
  %v797 = vadd.f32 %v726, %v742
  %v798 = vadd.f32 %v727, %v742
  %v799 = vadd.f32 %v728, %v742
  %v800 = vadd.f32 %v729, %v742
  %v801 = vadd.f32 %v730, %v742
  %v802 = vadd.f32 %v731, %v742
  %v803 = vadd.f32 %v732, %v742
  %v804 = vadd.f32 %v733, %v742
  %v805 = vadd.f32 %v734, %v742
  %v806 = vadd.f32 %v735, %v742
  %v807 = vadd.f32 %v736, %v742
  %v808 = vmax.f32 %v744, 0.0
  %v809 = vmax.f32 %v745, 0.0
  %v810 = vmax.f32 %v746, 0.0
  %v811 = vmax.f32 %v747, 0.0
  %v812 = vmax.f32 %v748, 0.0
  %v813 = vmax.f32 %v749, 0.0
  %v814 = vmax.f32 %v750, 0.0
  %v815 = vmax.f32 %v751, 0.0
  %v816 = vmax.f32 %v752, 0.0
  %v817 = vmax.f32 %v753, 0.0
  %v818 = vmax.f32 %v754, 0.0
  %v819 = vmax.f32 %v755, 0.0
  %v820 = vmax.f32 %v756, 0.0
  %v821 = vmax.f32 %v757, 0.0
  %v822 = vmax.f32 %v758, 0.0
  %v823 = vmax.f32 %v759, 0.0
  %v824 = vmax.f32 %v760, 0.0
  %v825 = vmax.f32 %v761, 0.0
  %v826 = vmax.f32 %v762, 0.0
  %v827 = vmax.f32 %v763, 0.0
  %v828 = vmax.f32 %v764, 0.0
  %v829 = vmax.f32 %v765, 0.0
  %v830 = vmax.f32 %v766, 0.0
  %v831 = vmax.f32 %v767, 0.0
  %v832 = vmax.f32 %v768, 0.0
  %v833 = vmax.f32 %v769, 0.0
  %v834 = vmax.f32 %v770, 0.0
  %v835 = vmax.f32 %v771, 0.0
  %v836 = vmax.f32 %v772, 0.0
  %v837 = vmax.f32 %v773, 0.0
  %v838 = vmax.f32 %v774, 0.0
  %v839 = vmax.f32 %v775, 0.0
  %v840 = vmax.f32 %v776, 0.0
  %v841 = vmax.f32 %v777, 0.0
  %v842 = vmax.f32 %v778, 0.0
  %v843 = vmax.f32 %v779, 0.0
  %v844 = vmax.f32 %v780, 0.0
  %v845 = vmax.f32 %v781, 0.0
  %v846 = vmax.f32 %v782, 0.0
  %v847 = vmax.f32 %v783, 0.0
  %v848 = vmax.f32 %v784, 0.0
  %v849 = vmax.f32 %v785, 0.0
  %v850 = vmax.f32 %v786, 0.0
  %v851 = vmax.f32 %v787, 0.0
  %v852 = vmax.f32 %v788, 0.0
  %v853 = vmax.f32 %v789, 0.0
  %v854 = vmax.f32 %v790, 0.0
  %v855 = vmax.f32 %v791, 0.0
  %v856 = vmax.f32 %v792, 0.0
  %v857 = vmax.f32 %v793, 0.0
  %v858 = vmax.f32 %v794, 0.0
  %v859 = vmax.f32 %v795, 0.0
  %v860 = vmax.f32 %v796, 0.0
  %v861 = vmax.f32 %v797, 0.0
  %v862 = vmax.f32 %v798, 0.0
  %v863 = vmax.f32 %v799, 0.0
  %v864 = vmax.f32 %v800, 0.0
  %v865 = vmax.f32 %v801, 0.0
  %v866 = vmax.f32 %v802, 0.0
  %v867 = vmax.f32 %v803, 0.0
  %v868 = vmax.f32 %v804, 0.0
  %v869 = vmax.f32 %v805, 0.0
  %v870 = vmax.f32 %v806, 0.0
  %v871 = vmax.f32 %v807, 0.0
  %vm872 = vcmask 261120
  %873 = vst.msk [vmem:[%s4] sm:$0xff] %vm872, %v808
  %874 = vst.msk [vmem:[%s4 + $0x8] sm:$0xff] %vm872, %v809
  %875 = vst.msk [vmem:[%s4 + $0x10] sm:$0xff] %vm872, %v810
  %876 = vst.msk [vmem:[%s4 + $0x18] sm:$0xff] %vm872, %v811
  %877 = vst.msk [vmem:[%s4 + $0x20] sm:$0xff] %vm872, %v812
  %878 = vst.msk [vmem:[%s4 + $0x28] sm:$0xff] %vm872, %v813
  %879 = vst.msk [vmem:[%s4 + $0x30] sm:$0xff] %vm872, %v814
  %880 = vst.msk [vmem:[%s4 + $0x38] sm:$0xff] %vm872, %v815
  %881 = vst.msk [vmem:[%s4 + $0x40] sm:$0xff] %vm872, %v816
  %882 = vst.msk [vmem:[%s4 + $0x48] sm:$0xff] %vm872, %v817
  %883 = vst.msk [vmem:[%s4 + $0x50] sm:$0xff] %vm872, %v818
  %884 = vst.msk [vmem:[%s4 + $0x58] sm:$0xff] %vm872, %v819
  %885 = vst.msk [vmem:[%s4 + $0x60] sm:$0xff] %vm872, %v820
  %886 = vst.msk [vmem:[%s4 + $0x68] sm:$0xff] %vm872, %v821
  %887 = vst.msk [vmem:[%s4 + $0x70] sm:$0xff] %vm872, %v822
  %888 = vst.msk [vmem:[%s4 + $0x78] sm:$0xff] %vm872, %v823
  %889 = vst.msk [vmem:[%s4 + $0x80] sm:$0xff] %vm872, %v824
  %890 = vst.msk [vmem:[%s4 + $0x88] sm:$0xff] %vm872, %v825
  %891 = vst.msk [vmem:[%s4 + $0x90] sm:$0xff] %vm872, %v826
  %892 = vst.msk [vmem:[%s4 + $0x98] sm:$0xff] %vm872, %v827
  %893 = vst.msk [vmem:[%s4 + $0xa0] sm:$0xff] %vm872, %v828
  %894 = vst.msk [vmem:[%s4 + $0xa8] sm:$0xff] %vm872, %v829
  %895 = vst.msk [vmem:[%s4 + $0xb0] sm:$0xff] %vm872, %v830
  %896 = vst.msk [vmem:[%s4 + $0xb8] sm:$0xff] %vm872, %v831
  %897 = vst.msk [vmem:[%s4 + $0xc0] sm:$0xff] %vm872, %v832
  %898 = vst.msk [vmem:[%s4 + $0xc8] sm:$0xff] %vm872, %v833
  %899 = vst.msk [vmem:[%s4 + $0xd0] sm:$0xff] %vm872, %v834
  %900 = vst.msk [vmem:[%s4 + $0xd8] sm:$0xff] %vm872, %v835
  %901 = vst.msk [vmem:[%s4 + $0xe0] sm:$0xff] %vm872, %v836
  %902 = vst.msk [vmem:[%s4 + $0xe8] sm:$0xff] %vm872, %v837
  %903 = vst.msk [vmem:[%s4 + $0xf0] sm:$0xff] %vm872, %v838
  %904 = vst.msk [vmem:[%s4 + $0xf8] sm:$0xff] %vm872, %v839
  %905 = vst.msk [vmem:[%s4 + $0x100] sm:$0xff] %vm872, %v840
  %906 = vst.msk [vmem:[%s4 + $0x108] sm:$0xff] %vm872, %v841
  %907 = vst.msk [vmem:[%s4 + $0x110] sm:$0xff] %vm872, %v842
  %908 = vst.msk [vmem:[%s4 + $0x118] sm:$0xff] %vm872, %v843
  %909 = vst.msk [vmem:[%s4 + $0x120] sm:$0xff] %vm872, %v844
  %910 = vst.msk [vmem:[%s4 + $0x128] sm:$0xff] %vm872, %v845
  %911 = vst.msk [vmem:[%s4 + $0x130] sm:$0xff] %vm872, %v846
  %912 = vst.msk [vmem:[%s4 + $0x138] sm:$0xff] %vm872, %v847
  %913 = vst.msk [vmem:[%s4 + $0x140] sm:$0xff] %vm872, %v848
  %914 = vst.msk [vmem:[%s4 + $0x148] sm:$0xff] %vm872, %v849
  %915 = vst.msk [vmem:[%s4 + $0x150] sm:$0xff] %vm872, %v850
  %916 = vst.msk [vmem:[%s4 + $0x158] sm:$0xff] %vm872, %v851
  %917 = vst.msk [vmem:[%s4 + $0x160] sm:$0xff] %vm872, %v852
  %918 = vst.msk [vmem:[%s4 + $0x168] sm:$0xff] %vm872, %v853
  %919 = vst.msk [vmem:[%s4 + $0x170] sm:$0xff] %vm872, %v854
  %920 = vst.msk [vmem:[%s4 + $0x178] sm:$0xff] %vm872, %v855
  %921 = vst.msk [vmem:[%s4 + $0x180] sm:$0xff] %vm872, %v856
  %922 = vst.msk [vmem:[%s4 + $0x188] sm:$0xff] %vm872, %v857
  %923 = vst.msk [vmem:[%s4 + $0x190] sm:$0xff] %vm872, %v858
  %924 = vst.msk [vmem:[%s4 + $0x198] sm:$0xff] %vm872, %v859
  %925 = vst.msk [vmem:[%s4 + $0x1a0] sm:$0xff] %vm872, %v860
  %926 = vst.msk [vmem:[%s4 + $0x1a8] sm:$0xff] %vm872, %v861
  %927 = vst.msk [vmem:[%s4 + $0x1b0] sm:$0xff] %vm872, %v862
  %928 = vst.msk [vmem:[%s4 + $0x1b8] sm:$0xff] %vm872, %v863
  %929 = vst.msk [vmem:[%s4 + $0x1c0] sm:$0xff] %vm872, %v864
  %930 = vst.msk [vmem:[%s4 + $0x1c8] sm:$0xff] %vm872, %v865
  %931 = vst.msk [vmem:[%s4 + $0x1d0] sm:$0xff] %vm872, %v866
  %932 = vst.msk [vmem:[%s4 + $0x1d8] sm:$0xff] %vm872, %v867
  %933 = vst.msk [vmem:[%s4 + $0x1e0] sm:$0xff] %vm872, %v868
  %934 = vst.msk [vmem:[%s4 + $0x1e8] sm:$0xff] %vm872, %v869
  %935 = vst.msk [vmem:[%s4 + $0x1f0] sm:$0xff] %vm872, %v870
  %936 = vst.msk [vmem:[%s4 + $0x1f8] sm:$0xff] %vm872, %v871
  // Predicated region
  $region18: #{jepa_forward.5} parent=0 // pred_check
    _
  $region19: #{jepa_forward.5} parent=0 // pred_check_branch
    %938 = sbr.rel (0) target = $region21
  $region20: #{jepa_forward.5} parent=0 // pred_region
    _
  $region21: #{jepa_forward.5} parent=0 // pred_fallthru
    _
  // Predicated region
  $region22: #{jepa_forward.5} parent=0 // pred_check
    _
  $region23: #{jepa_forward.5} parent=0 // pred_check_branch
    %940 = sbr.rel (0) target = $region25
  $region24: #{jepa_forward.5} parent=0 // pred_region
    _
  $region25: #{jepa_forward.5} parent=0 // pred_fallthru
    _

// kernel: jepa_forward.6
$region0: #{jepa_forward.6}
  #allocation0 [shape = 'u32[]', space=smem, size = 0x4, offset = 0x4, fixed_abs, tag = 'smem constant byte address 0x4 - core index']
  #allocation1 [shape = 'u32[144,128]{1,0:T(1,128)}', space=vmem, size = 0x12000, scoped, tag = 'internal scratch']
  %s0 = inlined_call_operand.vmem [shape: f32[128,288], index: 0, kind: input, shape index: {}]
  %s1 = inlined_call_operand.vmem [shape: f32[288,64], index: 1, kind: input, shape index: {}]
  %s2 = inlined_call_operand.vmem [shape: f32[1,64], index: 2, kind: input, shape index: {}]
  %s3 = inlined_call_operand.vmem [shape: f32[1,64], index: 3, kind: input, shape index: {}]
  %s4 = inlined_call_operand.vmem [shape: f32[128,64], index: 4, kind: output, shape index: {}]
  %s5 = sld [smem:[#allocation0]]
  $region26: #{jepa_forward.6} parent=0
    _
  %s7 = ssub.s32 1, %s5
  %s8 = scalar_select 0, %s7, %s5
  // Predicated region
  $region2: #{jepa_forward.6} parent=0 // pred_check
    _
  $region3: #{jepa_forward.6} parent=0 // pred_check_branch
    %10 = sbr.rel (0) target = $region5
  $region4: #{jepa_forward.6} parent=0 // pred_region
    _
  $region5: #{jepa_forward.6} parent=0 // pred_fallthru
    _
  // Predicated region
  $region6: #{jepa_forward.6} parent=0 // pred_check
    _
  $region7: #{jepa_forward.6} parent=0 // pred_check_branch
    %12 = sbr.rel (0) target = $region9
  $region8: #{jepa_forward.6} parent=0 // pred_region
    _
  $region9: #{jepa_forward.6} parent=0 // pred_fallthru
    _
  // Predicated region
  $region10: #{jepa_forward.6} parent=0 // pred_check
    _
  $region11: #{jepa_forward.6} parent=0 // pred_check_branch
    %14 = sbr.rel (0) target = $region13
  $region12: #{jepa_forward.6} parent=0 // pred_region
    _
  $region13: #{jepa_forward.6} parent=0 // pred_fallthru
    _
  // Predicated region
  $region14: #{jepa_forward.6} parent=0 // pred_check
    _
  $region15: #{jepa_forward.6} parent=0 // pred_check_branch
    %16 = sbr.rel (0) target = $region17
  $region16: #{jepa_forward.6} parent=0 // pred_region
    _
  $region17: #{jepa_forward.6} parent=0 // pred_fallthru
    _
  %v17 = vld [vmem:[%s0] sm:$0xff]
  %v18 = vld [vmem:[%s0 + $0x8] sm:$0xff]
  %v19 = vld [vmem:[%s0 + $0x10] sm:$0xff]
  %v20 = vld [vmem:[%s0 + $0x18] sm:$0xff]
  %v21 = vld [vmem:[%s0 + $0x20] sm:$0xff]
  %v22 = vld [vmem:[%s0 + $0x28] sm:$0xff]
  %v23 = vld [vmem:[%s0 + $0x30] sm:$0xff]
  %v24 = vld [vmem:[%s0 + $0x38] sm:$0xff]
  %v25 = vld [vmem:[%s0 + $0x40] sm:$0xff]
  %v26 = vld [vmem:[%s0 + $0x48] sm:$0xff]
  %v27 = vld [vmem:[%s0 + $0x50] sm:$0xff]
  %v28 = vld [vmem:[%s0 + $0x58] sm:$0xff]
  %v29 = vld [vmem:[%s0 + $0x60] sm:$0xff]
  %v30 = vld [vmem:[%s0 + $0x68] sm:$0xff]
  %v31 = vld [vmem:[%s0 + $0x70] sm:$0xff]
  %v32 = vld [vmem:[%s0 + $0x78] sm:$0xff]
  %v33 = vld [vmem:[%s0 + $0x80] sm:$0xff]
  %v34 = vld [vmem:[%s0 + $0x88] sm:$0xff]
  %v35 = vld [vmem:[%s0 + $0x90] sm:$0xff]
  %v36 = vld [vmem:[%s0 + $0x98] sm:$0xff]
  %v37 = vld [vmem:[%s0 + $0xa0] sm:$0xff]
  %v38 = vld [vmem:[%s0 + $0xa8] sm:$0xff]
  %v39 = vld [vmem:[%s0 + $0xb0] sm:$0xff]
  %v40 = vld [vmem:[%s0 + $0xb8] sm:$0xff]
  %v41 = vld [vmem:[%s0 + $0xc0] sm:$0xff]
  %v42 = vld [vmem:[%s0 + $0xc8] sm:$0xff]
  %v43 = vld [vmem:[%s0 + $0xd0] sm:$0xff]
  %v44 = vld [vmem:[%s0 + $0xd8] sm:$0xff]
  %v45 = vld [vmem:[%s0 + $0xe0] sm:$0xff]
  %v46 = vld [vmem:[%s0 + $0xe8] sm:$0xff]
  %v47 = vld [vmem:[%s0 + $0xf0] sm:$0xff]
  %v48 = vld [vmem:[%s0 + $0xf8] sm:$0xff]
  %v49 = vld [vmem:[%s0 + $0x100] sm:$0xff]
  %v50 = vld [vmem:[%s0 + $0x108] sm:$0xff]
  %v51 = vld [vmem:[%s0 + $0x110] sm:$0xff]
  %v52 = vld [vmem:[%s0 + $0x118] sm:$0xff]
  %v53 = vld [vmem:[%s0 + $0x120] sm:$0xff]
  %v54 = vld [vmem:[%s0 + $0x128] sm:$0xff]
  %v55 = vld [vmem:[%s0 + $0x130] sm:$0xff]
  %v56 = vld [vmem:[%s0 + $0x138] sm:$0xff]
  %v57 = vld [vmem:[%s0 + $0x140] sm:$0xff]
  %v58 = vld [vmem:[%s0 + $0x148] sm:$0xff]
  %v59 = vld [vmem:[%s0 + $0x150] sm:$0xff]
  %v60 = vld [vmem:[%s0 + $0x158] sm:$0xff]
  %v61 = vld [vmem:[%s0 + $0x160] sm:$0xff]
  %v62 = vld [vmem:[%s0 + $0x168] sm:$0xff]
  %v63 = vld [vmem:[%s0 + $0x170] sm:$0xff]
  %v64 = vld [vmem:[%s0 + $0x178] sm:$0xff]
  %v65 = vld [vmem:[%s1] sm:$0xff]
  %v66 = vld [vmem:[%s1 + $0x8] sm:$0xff]
  %v67 = vld [vmem:[%s1 + $0x10] sm:$0xff]
  %v68 = vld [vmem:[%s1 + $0x18] sm:$0xff]
  %v69 = vld [vmem:[%s1 + $0x20] sm:$0xff]
  %v70 = vld [vmem:[%s1 + $0x28] sm:$0xff]
  %v71 = vld [vmem:[%s1 + $0x30] sm:$0xff]
  %v72 = vld [vmem:[%s1 + $0x38] sm:$0xff]
  %v73 = vld [vmem:[%s1 + $0x40] sm:$0xff]
  %v74 = vld [vmem:[%s1 + $0x48] sm:$0xff]
  %v75 = vld [vmem:[%s1 + $0x50] sm:$0xff]
  %v76 = vld [vmem:[%s1 + $0x58] sm:$0xff]
  %v77 = vld [vmem:[%s1 + $0x60] sm:$0xff]
  %v78 = vld [vmem:[%s1 + $0x68] sm:$0xff]
  %v79 = vld [vmem:[%s1 + $0x70] sm:$0xff]
  %v80 = vld [vmem:[%s1 + $0x78] sm:$0xff]
  %v81 = vld [vmem:[%s1 + $0x80] sm:$0xff]
  %v82 = vld [vmem:[%s1 + $0x88] sm:$0xff]
  %v83 = vld [vmem:[%s1 + $0x90] sm:$0xff]
  %v84 = vld [vmem:[%s1 + $0x98] sm:$0xff]
  %v85 = vld [vmem:[%s1 + $0xa0] sm:$0xff]
  %v86 = vld [vmem:[%s1 + $0xa8] sm:$0xff]
  %v87 = vld [vmem:[%s1 + $0xb0] sm:$0xff]
  %v88 = vld [vmem:[%s1 + $0xb8] sm:$0xff]
  %v89 = vld [vmem:[%s1 + $0xc0] sm:$0xff]
  %v90 = vld [vmem:[%s1 + $0xc8] sm:$0xff]
  %v91 = vld [vmem:[%s1 + $0xd0] sm:$0xff]
  %v92 = vld [vmem:[%s1 + $0xd8] sm:$0xff]
  %v93 = vld [vmem:[%s1 + $0xe0] sm:$0xff]
  %v94 = vld [vmem:[%s1 + $0xe8] sm:$0xff]
  %v95 = vld [vmem:[%s1 + $0xf0] sm:$0xff]
  %v96 = vld [vmem:[%s1 + $0xf8] sm:$0xff]
  %v97 = vld [vmem:[%s1 + $0x100] sm:$0xff]
  %v98 = vld [vmem:[%s1 + $0x108] sm:$0xff]
  %v99 = vld [vmem:[%s1 + $0x110] sm:$0xff]
  %v100 = vld [vmem:[%s1 + $0x118] sm:$0xff]
  %vm101 = vcmask 261120
  %v103 = vsel %vm101, %v19, 0
  %v106 = vsel %vm101, %v22, 0
  %v109 = vsel %vm101, %v25, 0
  %v112 = vsel %vm101, %v28, 0
  %v115 = vsel %vm101, %v31, 0
  %v118 = vsel %vm101, %v34, 0
  %v121 = vsel %vm101, %v37, 0
  %v124 = vsel %vm101, %v40, 0
  %v127 = vsel %vm101, %v43, 0
  %v130 = vsel %vm101, %v46, 0
  %v133 = vsel %vm101, %v49, 0
  %v136 = vsel %vm101, %v52, 0
  %v139 = vsel %vm101, %v55, 0
  %v142 = vsel %vm101, %v58, 0
  %v145 = vsel %vm101, %v61, 0
  %v148 = vsel %vm101, %v64, 0
  %150 = vmatprep.subr.mxu0 0.0
  %151 = vmatpush1.msra.mxu0 %v65
  %152 = vmatprep.subr.mxu0 0.0
  %153 = vmatpush1.msra.mxu0 %v66
  %154 = vmatprep.subr.mxu0 0.0
  %155 = vmatpush1.msra.mxu0 %v67
  %156 = vmatprep.subr.mxu0 0.0
  %157 = vmatpush1.msra.mxu0 %v68
  %158 = vmatprep.subr.mxu0 0.0
  %159 = vmatpush1.msra.mxu0 %v69
  %160 = vmatprep.subr.mxu0 0.0
  %161 = vmatpush1.msra.mxu0 %v70
  %162 = vmatprep.subr.mxu0 0.0
  %163 = vmatpush1.msra.mxu0 %v71
  %164 = vmatprep.subr.mxu0 0.0
  %165 = vmatpush1.msra.mxu0 %v72
  %166 = vmatprep.subr.mxu0 0.0
  %167 = vmatpush1.msra.mxu0 %v73
  %168 = vmatprep.subr.mxu0 0.0
  %169 = vmatpush1.msra.mxu0 %v74
  %170 = vmatprep.subr.mxu0 0.0
  %171 = vmatpush1.msra.mxu0 %v75
  %172 = vmatprep.subr.mxu0 0.0
  %173 = vmatpush1.msra.mxu0 %v76
  %174 = vmatprep.subr.mxu0 0.0
  %175 = vmatpush1.msra.mxu0 %v77
  %176 = vmatprep.subr.mxu0 0.0
  %177 = vmatpush1.msra.mxu0 %v78
  %178 = vmatprep.subr.mxu0 0.0
  %179 = vmatpush1.msra.mxu0 %v79
  %180 = vmatprep.subr.mxu0 0.0
  %181 = vmatpush1.msra.mxu0 %v80
  %182 = vmatprep.subr.mxu0 0.0
  %183 = vmatpush1.msra.mxu0 %v81
  %184 = vmatprep.subr.mxu0 0.0
  %185 = vmatpush1.msra.mxu0 %v82
  %186 = vmatprep.subr.mxu0 0.0
  %187 = vmatpush1.msra.mxu0 %v83
  %188 = vmatprep.subr.mxu0 0.0
  %189 = vmatpush1.msra.mxu0 %v84
  %190 = vmatprep.subr.mxu0 0.0
  %191 = vmatpush1.msra.mxu0 %v85
  %192 = vmatprep.subr.mxu0 0.0
  %193 = vmatpush1.msra.mxu0 %v86
  %194 = vmatprep.subr.mxu0 0.0
  %195 = vmatpush1.msra.mxu0 %v87
  %196 = vmatprep.subr.mxu0 0.0
  %197 = vmatpush1.msra.mxu0 %v88
  %198 = vmatprep.subr.mxu0 0.0
  %199 = vmatpush1.msra.mxu0 %v89
  %200 = vmatprep.subr.mxu0 0.0
  %201 = vmatpush1.msra.mxu0 %v90
  %202 = vmatprep.subr.mxu0 0.0
  %203 = vmatpush1.msra.mxu0 %v91
  %204 = vmatprep.subr.mxu0 0.0
  %205 = vmatpush1.msra.mxu0 %v92
  %206 = vmatprep.subr.mxu0 0.0
  %207 = vmatpush1.msra.mxu0 %v93
  %208 = vmatprep.subr.mxu0 0.0
  %209 = vmatpush1.msra.mxu0 %v94
  %210 = vmatprep.subr.mxu0 0.0
  %211 = vmatpush1.msra.mxu0 %v95
  %212 = vmatprep.subr.mxu0 0.0
  %213 = vmatpush1.msra.mxu0 %v96
  %214 = vmatprep.mubr.f32.mxu0 %v18
  %215 = vmatmul.mubr.f32.gmra.mrb[0].mxu0 %v17
  %v216 = vpop.f32.mrb[0].mxu0
  %v217 = vadd.f32 0.0, %v216
  %v218 = vpop.f32.mrb[0].mxu0
  %219 = vmatprep.mubr.f32.mxu0 %v21
  %220 = vmatmul.mubr.f32.gmra.mrb[0].mxu0 %v20
  %v221 = vpop.f32.mrb[0].mxu0
  %v222 = vadd.f32 0.0, %v221
  %v223 = vpop.f32.mrb[0].mxu0
  %224 = vmatprep.mubr.f32.mxu0 %v24
  %225 = vmatmul.mubr.f32.gmra.mrb[0].mxu0 %v23
  %v226 = vpop.f32.mrb[0].mxu0
  %v227 = vadd.f32 0.0, %v226
  %v228 = vpop.f32.mrb[0].mxu0
  %229 = vmatprep.mubr.f32.mxu0 %v27
  %230 = vmatmul.mubr.f32.gmra.mrb[0].mxu0 %v26
  %v231 = vpop.f32.mrb[0].mxu0
  %v232 = vadd.f32 0.0, %v231
  %v233 = vpop.f32.mrb[0].mxu0
  %234 = vmatprep.mubr.f32.mxu0 %v30
  %235 = vmatmul.mubr.f32.gmra.mrb[0].mxu0 %v29
  %v236 = vpop.f32.mrb[0].mxu0
  %v237 = vadd.f32 0.0, %v236
  %v238 = vpop.f32.mrb[0].mxu0
  %239 = vmatprep.mubr.f32.mxu0 %v33
  %240 = vmatmul.mubr.f32.gmra.mrb[0].mxu0 %v32
  %v241 = vpop.f32.mrb[0].mxu0
  %v242 = vadd.f32 0.0, %v241
  %v243 = vpop.f32.mrb[0].mxu0
  %244 = vmatprep.mubr.f32.mxu0 %v36
  %245 = vmatmul.mubr.f32.gmra.mrb[0].mxu0 %v35
  %v246 = vpop.f32.mrb[0].mxu0
  %v247 = vadd.f32 0.0, %v246
  %v248 = vpop.f32.mrb[0].mxu0
  %249 = vmatprep.mubr.f32.mxu0 %v39
  %250 = vmatmul.mubr.f32.gmra.mrb[0].mxu0 %v38
  %v251 = vpop.f32.mrb[0].mxu0
  %v252 = vadd.f32 0.0, %v251
  %v253 = vpop.f32.mrb[0].mxu0
  %254 = vmatprep.mubr.f32.mxu0 %v42
  %255 = vmatmul.mubr.f32.gmra.mrb[0].mxu0 %v41
  %v256 = vpop.f32.mrb[0].mxu0
  %v257 = vadd.f32 0.0, %v256
  %v258 = vpop.f32.mrb[0].mxu0
  %259 = vmatprep.mubr.f32.mxu0 %v45
  %260 = vmatmul.mubr.f32.gmra.mrb[0].mxu0 %v44
  %v261 = vpop.f32.mrb[0].mxu0
  %v262 = vadd.f32 0.0, %v261
  %v263 = vpop.f32.mrb[0].mxu0
  %264 = vmatprep.mubr.f32.mxu0 %v48
  %265 = vmatmul.mubr.f32.gmra.mrb[0].mxu0 %v47
  %v266 = vpop.f32.mrb[0].mxu0
  %v267 = vadd.f32 0.0, %v266
  %v268 = vpop.f32.mrb[0].mxu0
  %269 = vmatprep.mubr.f32.mxu0 %v51
  %270 = vmatmul.mubr.f32.gmra.mrb[0].mxu0 %v50
  %v271 = vpop.f32.mrb[0].mxu0
  %v272 = vadd.f32 0.0, %v271
  %v273 = vpop.f32.mrb[0].mxu0
  %274 = vmatprep.mubr.f32.mxu0 %v54
  %275 = vmatmul.mubr.f32.gmra.mrb[0].mxu0 %v53
  %v276 = vpop.f32.mrb[0].mxu0
  %v277 = vadd.f32 0.0, %v276
  %v278 = vpop.f32.mrb[0].mxu0
  %279 = vmatprep.mubr.f32.mxu0 %v57
  %280 = vmatmul.mubr.f32.gmra.mrb[0].mxu0 %v56
  %v281 = vpop.f32.mrb[0].mxu0
  %v282 = vadd.f32 0.0, %v281
  %v283 = vpop.f32.mrb[0].mxu0
  %284 = vmatprep.mubr.f32.mxu0 %v60
  %285 = vmatmul.mubr.f32.gmra.mrb[0].mxu0 %v59
  %v286 = vpop.f32.mrb[0].mxu0
  %v287 = vadd.f32 0.0, %v286
  %v288 = vpop.f32.mrb[0].mxu0
  %289 = vmatprep.mubr.f32.mxu0 %v63
  %290 = vmatmul.mubr.f32.gmra.mrb[0].mxu0 %v62
  %v291 = vpop.f32.mrb[0].mxu0
  %v292 = vadd.f32 0.0, %v291
  %v293 = vpop.f32.mrb[0].mxu0
  %294 = vdwg.mxu0
  %295 = vmatprep.subr.mxu0 0.0
  %296 = vmatpush1.msra.mxu0 %v97
  %297 = vmatprep.subr.mxu0 0.0
  %298 = vmatpush1.msra.mxu0 %v98
  %299 = vmatprep.subr.mxu0 0.0
  %300 = vmatpush1.msra.mxu0 %v99
  %301 = vmatprep.subr.mxu0 0.0
  %302 = vmatpush1.msra.mxu0 %v100
  %303 = vmatprep.subr.mxu0 0.0
  %304 = vmatpush1.msra.mxu0 0.0
  %305 = vmatprep.subr.mxu0 0.0
  %306 = vmatpush1.msra.mxu0 0.0
  %307 = vmatprep.subr.mxu0 0.0
  %308 = vmatpush1.msra.mxu0 0.0
  %309 = vmatprep.subr.mxu0 0.0
  %310 = vmatpush1.msra.mxu0 0.0
  %311 = vmatprep.subr.mxu0 0.0
  %312 = vmatpush1.msra.mxu0 0.0
  %313 = vmatprep.subr.mxu0 0.0
  %314 = vmatpush1.msra.mxu0 0.0
  %315 = vmatprep.subr.mxu0 0.0
  %316 = vmatpush1.msra.mxu0 0.0
  %317 = vmatprep.subr.mxu0 0.0
  %318 = vmatpush1.msra.mxu0 0.0
  %319 = vmatprep.subr.mxu0 0.0
  %320 = vmatpush1.msra.mxu0 0.0
  %321 = vmatprep.subr.mxu0 0.0
  %322 = vmatpush1.msra.mxu0 0.0
  %323 = vmatprep.subr.mxu0 0.0
  %324 = vmatpush1.msra.mxu0 0.0
  %325 = vmatprep.subr.mxu0 0.0
  %326 = vmatpush1.msra.mxu0 0.0
  %327 = vmatprep.subr.mxu0 0.0
  %328 = vmatpush1.msra.mxu0 0.0
  %329 = vmatprep.subr.mxu0 0.0
  %330 = vmatpush1.msra.mxu0 0.0
  %331 = vmatprep.subr.mxu0 0.0
  %332 = vmatpush1.msra.mxu0 0.0
  %333 = vmatprep.subr.mxu0 0.0
  %334 = vmatpush1.msra.mxu0 0.0
  %335 = vmatprep.subr.mxu0 0.0
  %336 = vmatpush1.msra.mxu0 0.0
  %337 = vmatprep.subr.mxu0 0.0
  %338 = vmatpush1.msra.mxu0 0.0
  %339 = vmatprep.subr.mxu0 0.0
  %340 = vmatpush1.msra.mxu0 0.0
  %341 = vmatprep.subr.mxu0 0.0
  %342 = vmatpush1.msra.mxu0 0.0
  %343 = vmatprep.subr.mxu0 0.0
  %344 = vmatpush1.msra.mxu0 0.0
  %345 = vmatprep.subr.mxu0 0.0
  %346 = vmatpush1.msra.mxu0 0.0
  %347 = vmatprep.subr.mxu0 0.0
  %348 = vmatpush1.msra.mxu0 0.0
  %349 = vmatprep.subr.mxu0 0.0
  %350 = vmatpush1.msra.mxu0 0.0
  %351 = vmatprep.subr.mxu0 0.0
  %352 = vmatpush1.msra.mxu0 0.0
  %353 = vmatprep.subr.mxu0 0.0
  %354 = vmatpush1.msra.mxu0 0.0
  %355 = vmatprep.subr.mxu0 0.0
  %356 = vmatpush1.msra.mxu0 0.0
  %357 = vmatprep.subr.mxu0 0.0
  %358 = vmatpush1.msra.mxu0 0.0
  %359 = vmatprep.mubr.f32.mxu0 0.0
  %360 = vmatmul.mubr.f32.gmra.mrb[0].mxu0 %v103
  %v361 = vpop.f32.mrb[0].mxu0
  %v362 = vadd.f32 %v217, %v361
  %v363 = vpop.f32.mrb[0].mxu0
  %364 = vmatprep.mubr.f32.mxu0 0.0
  %365 = vmatmul.mubr.f32.gmra.mrb[0].mxu0 %v106
  %v366 = vpop.f32.mrb[0].mxu0
  %v367 = vadd.f32 %v222, %v366
  %v368 = vpop.f32.mrb[0].mxu0
  %369 = vmatprep.mubr.f32.mxu0 0.0
  %370 = vmatmul.mubr.f32.gmra.mrb[0].mxu0 %v109
  %v371 = vpop.f32.mrb[0].mxu0
  %v372 = vadd.f32 %v227, %v371
  %v373 = vpop.f32.mrb[0].mxu0
  %374 = vmatprep.mubr.f32.mxu0 0.0
  %375 = vmatmul.mubr.f32.gmra.mrb[0].mxu0 %v112
  %v376 = vpop.f32.mrb[0].mxu0
  %v377 = vadd.f32 %v232, %v376
  %v378 = vpop.f32.mrb[0].mxu0
  %379 = vmatprep.mubr.f32.mxu0 0.0
  %380 = vmatmul.mubr.f32.gmra.mrb[0].mxu0 %v115
  %v381 = vpop.f32.mrb[0].mxu0
  %v382 = vadd.f32 %v237, %v381
  %v383 = vpop.f32.mrb[0].mxu0
  %384 = vmatprep.mubr.f32.mxu0 0.0
  %385 = vmatmul.mubr.f32.gmra.mrb[0].mxu0 %v118
  %v386 = vpop.f32.mrb[0].mxu0
  %v387 = vadd.f32 %v242, %v386
  %v388 = vpop.f32.mrb[0].mxu0
  %389 = vmatprep.mubr.f32.mxu0 0.0
  %390 = vmatmul.mubr.f32.gmra.mrb[0].mxu0 %v121
  %v391 = vpop.f32.mrb[0].mxu0
  %v392 = vadd.f32 %v247, %v391
  %v393 = vpop.f32.mrb[0].mxu0
  %394 = vmatprep.mubr.f32.mxu0 0.0
  %395 = vmatmul.mubr.f32.gmra.mrb[0].mxu0 %v124
  %v396 = vpop.f32.mrb[0].mxu0
  %v397 = vadd.f32 %v252, %v396
  %v398 = vpop.f32.mrb[0].mxu0
  %399 = vmatprep.mubr.f32.mxu0 0.0
  %400 = vmatmul.mubr.f32.gmra.mrb[0].mxu0 %v127
  %v401 = vpop.f32.mrb[0].mxu0
  %v402 = vadd.f32 %v257, %v401
  %v403 = vpop.f32.mrb[0].mxu0
  %404 = vmatprep.mubr.f32.mxu0 0.0
  %405 = vmatmul.mubr.f32.gmra.mrb[0].mxu0 %v130
  %v406 = vpop.f32.mrb[0].mxu0
  %v407 = vadd.f32 %v262, %v406
  %v408 = vpop.f32.mrb[0].mxu0
  %409 = vmatprep.mubr.f32.mxu0 0.0
  %410 = vmatmul.mubr.f32.gmra.mrb[0].mxu0 %v133
  %v411 = vpop.f32.mrb[0].mxu0
  %v412 = vadd.f32 %v267, %v411
  %v413 = vpop.f32.mrb[0].mxu0
  %414 = vmatprep.mubr.f32.mxu0 0.0
  %415 = vmatmul.mubr.f32.gmra.mrb[0].mxu0 %v136
  %v416 = vpop.f32.mrb[0].mxu0
  %v417 = vadd.f32 %v272, %v416
  %v418 = vpop.f32.mrb[0].mxu0
  %419 = vmatprep.mubr.f32.mxu0 0.0
  %420 = vmatmul.mubr.f32.gmra.mrb[0].mxu0 %v139
  %v421 = vpop.f32.mrb[0].mxu0
  %v422 = vadd.f32 %v277, %v421
  %v423 = vpop.f32.mrb[0].mxu0
  %424 = vmatprep.mubr.f32.mxu0 0.0
  %425 = vmatmul.mubr.f32.gmra.mrb[0].mxu0 %v142
  %v426 = vpop.f32.mrb[0].mxu0
  %v427 = vadd.f32 %v282, %v426
  %v428 = vpop.f32.mrb[0].mxu0
  %429 = vmatprep.mubr.f32.mxu0 0.0
  %430 = vmatmul.mubr.f32.gmra.mrb[0].mxu0 %v145
  %v431 = vpop.f32.mrb[0].mxu0
  %v432 = vadd.f32 %v287, %v431
  %v433 = vpop.f32.mrb[0].mxu0
  %434 = vmatprep.mubr.f32.mxu0 0.0
  %435 = vmatmul.mubr.f32.gmra.mrb[0].mxu0 %v148
  %v436 = vpop.f32.mrb[0].mxu0
  %v437 = vadd.f32 %v292, %v436
  %v438 = vpop.f32.mrb[0].mxu0
  %439 = vdwg.mxu0
  %v440 = vld [vmem:[%s2] sm:$0x1]
  %v442 = vlaneseq
  %v443 = vshrl.u32 %v442, 7
  %v444 = vsub.s32 0, %v443
  %v445 = vrot.slane %v440, %v444
  %v447 = vmul.f32 %v362, %v445
  %v448 = vmul.f32 %v367, %v445
  %v449 = vmul.f32 %v372, %v445
  %v450 = vmul.f32 %v377, %v445
  %v451 = vmul.f32 %v382, %v445
  %v452 = vmul.f32 %v387, %v445
  %v453 = vmul.f32 %v392, %v445
  %v454 = vmul.f32 %v397, %v445
  %v455 = vmul.f32 %v402, %v445
  %v456 = vmul.f32 %v407, %v445
  %v457 = vmul.f32 %v412, %v445
  %v458 = vmul.f32 %v417, %v445
  %v459 = vmul.f32 %v422, %v445
  %v460 = vmul.f32 %v427, %v445
  %v461 = vmul.f32 %v432, %v445
  %v462 = vmul.f32 %v437, %v445
  %v463 = vld [vmem:[%s3] sm:$0x1]
  %v465 = vlaneseq
  %v466 = vshrl.u32 %v465, 7
  %v467 = vsub.s32 0, %v466
  %v468 = vrot.slane %v463, %v467
  %v470 = vadd.f32 %v447, %v468
  %v471 = vadd.f32 %v448, %v468
  %v472 = vadd.f32 %v449, %v468
  %v473 = vadd.f32 %v450, %v468
  %v474 = vadd.f32 %v451, %v468
  %v475 = vadd.f32 %v452, %v468
  %v476 = vadd.f32 %v453, %v468
  %v477 = vadd.f32 %v454, %v468
  %v478 = vadd.f32 %v455, %v468
  %v479 = vadd.f32 %v456, %v468
  %v480 = vadd.f32 %v457, %v468
  %v481 = vadd.f32 %v458, %v468
  %v482 = vadd.f32 %v459, %v468
  %v483 = vadd.f32 %v460, %v468
  %v484 = vadd.f32 %v461, %v468
  %v485 = vadd.f32 %v462, %v468
  %v486 = vmax.f32 %v470, 0.0
  %v487 = vmax.f32 %v471, 0.0
  %v488 = vmax.f32 %v472, 0.0
  %v489 = vmax.f32 %v473, 0.0
  %v490 = vmax.f32 %v474, 0.0
  %v491 = vmax.f32 %v475, 0.0
  %v492 = vmax.f32 %v476, 0.0
  %v493 = vmax.f32 %v477, 0.0
  %v494 = vmax.f32 %v478, 0.0
  %v495 = vmax.f32 %v479, 0.0
  %v496 = vmax.f32 %v480, 0.0
  %v497 = vmax.f32 %v481, 0.0
  %v498 = vmax.f32 %v482, 0.0
  %v499 = vmax.f32 %v483, 0.0
  %v500 = vmax.f32 %v484, 0.0
  %v501 = vmax.f32 %v485, 0.0
  %vm502 = vcmask 523264
  %503 = vst.msk [vmem:[%s4] sm:$0xff] %vm502, %v486
  %504 = vst.msk [vmem:[%s4 + $0x8] sm:$0xff] %vm502, %v487
  %505 = vst.msk [vmem:[%s4 + $0x10] sm:$0xff] %vm502, %v488
  %506 = vst.msk [vmem:[%s4 + $0x18] sm:$0xff] %vm502, %v489
  %507 = vst.msk [vmem:[%s4 + $0x20] sm:$0xff] %vm502, %v490
  %508 = vst.msk [vmem:[%s4 + $0x28] sm:$0xff] %vm502, %v491
  %509 = vst.msk [vmem:[%s4 + $0x30] sm:$0xff] %vm502, %v492
  %510 = vst.msk [vmem:[%s4 + $0x38] sm:$0xff] %vm502, %v493
  %511 = vst.msk [vmem:[%s4 + $0x40] sm:$0xff] %vm502, %v494
  %512 = vst.msk [vmem:[%s4 + $0x48] sm:$0xff] %vm502, %v495
  %513 = vst.msk [vmem:[%s4 + $0x50] sm:$0xff] %vm502, %v496
  %514 = vst.msk [vmem:[%s4 + $0x58] sm:$0xff] %vm502, %v497
  %515 = vst.msk [vmem:[%s4 + $0x60] sm:$0xff] %vm502, %v498
  %516 = vst.msk [vmem:[%s4 + $0x68] sm:$0xff] %vm502, %v499
  %517 = vst.msk [vmem:[%s4 + $0x70] sm:$0xff] %vm502, %v500
  %518 = vst.msk [vmem:[%s4 + $0x78] sm:$0xff] %vm502, %v501
  // Predicated region
  $region18: #{jepa_forward.6} parent=0 // pred_check
    _
  $region19: #{jepa_forward.6} parent=0 // pred_check_branch
    %520 = sbr.rel (0) target = $region21
  $region20: #{jepa_forward.6} parent=0 // pred_region
    _
  $region21: #{jepa_forward.6} parent=0 // pred_fallthru
    _
  // Predicated region
  $region22: #{jepa_forward.6} parent=0 // pred_check
    _
  $region23: #{jepa_forward.6} parent=0 // pred_check_branch
    %522 = sbr.rel (0) target = $region25
  $region24: #{jepa_forward.6} parent=0 // pred_region
    _
  $region25: #{jepa_forward.6} parent=0 // pred_fallthru
    _

// kernel: jepa_forward.7
$region0: #{jepa_forward.7}
  #allocation0 [shape = 'u32[]', space=smem, size = 0x4, offset = 0x4, fixed_abs, tag = 'smem constant byte address 0x4 - core index']
  #allocation1 [shape = 'u32[144,128]{1,0:T(1,128)}', space=vmem, size = 0x12000, scoped, tag = 'internal scratch']
  %s0 = inlined_call_operand.vmem [shape: f32[32,576], index: 0, kind: input, shape index: {}]
  %s1 = inlined_call_operand.vmem [shape: f32[576,128], index: 1, kind: input, shape index: {}]
  %s2 = inlined_call_operand.vmem [shape: f32[1,128], index: 2, kind: input, shape index: {}]
  %s3 = inlined_call_operand.vmem [shape: f32[1,128], index: 3, kind: input, shape index: {}]
  %s4 = inlined_call_operand.vmem [shape: f32[32,128], index: 4, kind: output, shape index: {}]
  %s5 = sld [smem:[#allocation0]]
  $region26: #{jepa_forward.7} parent=0
    _
  %s7 = ssub.s32 1, %s5
  %s8 = scalar_select 0, %s7, %s5
  // Predicated region
  $region2: #{jepa_forward.7} parent=0 // pred_check
    _
  $region3: #{jepa_forward.7} parent=0 // pred_check_branch
    %10 = sbr.rel (0) target = $region5
  $region4: #{jepa_forward.7} parent=0 // pred_region
    _
  $region5: #{jepa_forward.7} parent=0 // pred_fallthru
    _
  // Predicated region
  $region6: #{jepa_forward.7} parent=0 // pred_check
    _
  $region7: #{jepa_forward.7} parent=0 // pred_check_branch
    %12 = sbr.rel (0) target = $region9
  $region8: #{jepa_forward.7} parent=0 // pred_region
    _
  $region9: #{jepa_forward.7} parent=0 // pred_fallthru
    _
  // Predicated region
  $region10: #{jepa_forward.7} parent=0 // pred_check
    _
  $region11: #{jepa_forward.7} parent=0 // pred_check_branch
    %14 = sbr.rel (0) target = $region13
  $region12: #{jepa_forward.7} parent=0 // pred_region
    _
  $region13: #{jepa_forward.7} parent=0 // pred_fallthru
    _
  // Predicated region
  $region14: #{jepa_forward.7} parent=0 // pred_check
    _
  $region15: #{jepa_forward.7} parent=0 // pred_check_branch
    %16 = sbr.rel (0) target = $region17
  $region16: #{jepa_forward.7} parent=0 // pred_region
    _
  $region17: #{jepa_forward.7} parent=0 // pred_fallthru
    _
  %v17 = vld [vmem:[%s0] sm:$0xff]
  %v18 = vld [vmem:[%s0 + $0x8] sm:$0xff]
  %v19 = vld [vmem:[%s0 + $0x10] sm:$0xff]
  %v20 = vld [vmem:[%s0 + $0x18] sm:$0xff]
  %v21 = vld [vmem:[%s0 + $0x20] sm:$0xff]
  %v22 = vld [vmem:[%s0 + $0x28] sm:$0xff]
  %v23 = vld [vmem:[%s0 + $0x30] sm:$0xff]
  %v24 = vld [vmem:[%s0 + $0x38] sm:$0xff]
  %v25 = vld [vmem:[%s0 + $0x40] sm:$0xff]
  %v26 = vld [vmem:[%s0 + $0x48] sm:$0xff]
  %v27 = vld [vmem:[%s0 + $0x50] sm:$0xff]
  %v28 = vld [vmem:[%s0 + $0x58] sm:$0xff]
  %v29 = vld [vmem:[%s0 + $0x60] sm:$0xff]
  %v30 = vld [vmem:[%s0 + $0x68] sm:$0xff]
  %v31 = vld [vmem:[%s0 + $0x70] sm:$0xff]
  %v32 = vld [vmem:[%s0 + $0x78] sm:$0xff]
  %v33 = vld [vmem:[%s0 + $0x80] sm:$0xff]
  %v34 = vld [vmem:[%s0 + $0x88] sm:$0xff]
  %v35 = vld [vmem:[%s0 + $0x90] sm:$0xff]
  %v36 = vld [vmem:[%s0 + $0x98] sm:$0xff]
  %v37 = vld [vmem:[%s1] sm:$0xff]
  %v38 = vld [vmem:[%s1 + $0x8] sm:$0xff]
  %v39 = vld [vmem:[%s1 + $0x10] sm:$0xff]
  %v40 = vld [vmem:[%s1 + $0x18] sm:$0xff]
  %v41 = vld [vmem:[%s1 + $0x20] sm:$0xff]
  %v42 = vld [vmem:[%s1 + $0x28] sm:$0xff]
  %v43 = vld [vmem:[%s1 + $0x30] sm:$0xff]
  %v44 = vld [vmem:[%s1 + $0x38] sm:$0xff]
  %v45 = vld [vmem:[%s1 + $0x40] sm:$0xff]
  %v46 = vld [vmem:[%s1 + $0x48] sm:$0xff]
  %v47 = vld [vmem:[%s1 + $0x50] sm:$0xff]
  %v48 = vld [vmem:[%s1 + $0x58] sm:$0xff]
  %v49 = vld [vmem:[%s1 + $0x60] sm:$0xff]
  %v50 = vld [vmem:[%s1 + $0x68] sm:$0xff]
  %v51 = vld [vmem:[%s1 + $0x70] sm:$0xff]
  %v52 = vld [vmem:[%s1 + $0x78] sm:$0xff]
  %v53 = vld [vmem:[%s1 + $0x80] sm:$0xff]
  %v54 = vld [vmem:[%s1 + $0x88] sm:$0xff]
  %v55 = vld [vmem:[%s1 + $0x90] sm:$0xff]
  %v56 = vld [vmem:[%s1 + $0x98] sm:$0xff]
  %v57 = vld [vmem:[%s1 + $0xa0] sm:$0xff]
  %v58 = vld [vmem:[%s1 + $0xa8] sm:$0xff]
  %v59 = vld [vmem:[%s1 + $0xb0] sm:$0xff]
  %v60 = vld [vmem:[%s1 + $0xb8] sm:$0xff]
  %v61 = vld [vmem:[%s1 + $0xc0] sm:$0xff]
  %v62 = vld [vmem:[%s1 + $0xc8] sm:$0xff]
  %v63 = vld [vmem:[%s1 + $0xd0] sm:$0xff]
  %v64 = vld [vmem:[%s1 + $0xd8] sm:$0xff]
  %v65 = vld [vmem:[%s1 + $0xe0] sm:$0xff]
  %v66 = vld [vmem:[%s1 + $0xe8] sm:$0xff]
  %v67 = vld [vmem:[%s1 + $0xf0] sm:$0xff]
  %v68 = vld [vmem:[%s1 + $0xf8] sm:$0xff]
  %v69 = vld [vmem:[%s1 + $0x100] sm:$0xff]
  %v70 = vld [vmem:[%s1 + $0x108] sm:$0xff]
  %v71 = vld [vmem:[%s1 + $0x110] sm:$0xff]
  %v72 = vld [vmem:[%s1 + $0x118] sm:$0xff]
  %v73 = vld [vmem:[%s1 + $0x120] sm:$0xff]
  %v74 = vld [vmem:[%s1 + $0x128] sm:$0xff]
  %v75 = vld [vmem:[%s1 + $0x130] sm:$0xff]
  %v76 = vld [vmem:[%s1 + $0x138] sm:$0xff]
  %v77 = vld [vmem:[%s1 + $0x140] sm:$0xff]
  %v78 = vld [vmem:[%s1 + $0x148] sm:$0xff]
  %v79 = vld [vmem:[%s1 + $0x150] sm:$0xff]
  %v80 = vld [vmem:[%s1 + $0x158] sm:$0xff]
  %v81 = vld [vmem:[%s1 + $0x160] sm:$0xff]
  %v82 = vld [vmem:[%s1 + $0x168] sm:$0xff]
  %v83 = vld [vmem:[%s1 + $0x170] sm:$0xff]
  %v84 = vld [vmem:[%s1 + $0x178] sm:$0xff]
  %v85 = vld [vmem:[%s1 + $0x180] sm:$0xff]
  %v86 = vld [vmem:[%s1 + $0x188] sm:$0xff]
  %v87 = vld [vmem:[%s1 + $0x190] sm:$0xff]
  %v88 = vld [vmem:[%s1 + $0x198] sm:$0xff]
  %v89 = vld [vmem:[%s1 + $0x1a0] sm:$0xff]
  %v90 = vld [vmem:[%s1 + $0x1a8] sm:$0xff]
  %v91 = vld [vmem:[%s1 + $0x1b0] sm:$0xff]
  %v92 = vld [vmem:[%s1 + $0x1b8] sm:$0xff]
  %v93 = vld [vmem:[%s1 + $0x1c0] sm:$0xff]
  %v94 = vld [vmem:[%s1 + $0x1c8] sm:$0xff]
  %v95 = vld [vmem:[%s1 + $0x1d0] sm:$0xff]
  %v96 = vld [vmem:[%s1 + $0x1d8] sm:$0xff]
  %v97 = vld [vmem:[%s1 + $0x1e0] sm:$0xff]
  %v98 = vld [vmem:[%s1 + $0x1e8] sm:$0xff]
  %v99 = vld [vmem:[%s1 + $0x1f0] sm:$0xff]
  %v100 = vld [vmem:[%s1 + $0x1f8] sm:$0xff]
  %v101 = vld [vmem:[%s1 + $0x200] sm:$0xff]
  %v102 = vld [vmem:[%s1 + $0x208] sm:$0xff]
  %v103 = vld [vmem:[%s1 + $0x210] sm:$0xff]
  %v104 = vld [vmem:[%s1 + $0x218] sm:$0xff]
  %v105 = vld [vmem:[%s1 + $0x220] sm:$0xff]
  %v106 = vld [vmem:[%s1 + $0x228] sm:$0xff]
  %v107 = vld [vmem:[%s1 + $0x230] sm:$0xff]
  %v108 = vld [vmem:[%s1 + $0x238] sm:$0xff]
  %vm109 = vcmask 523264
  %v111 = vsel %vm109, %v21, 0
  %v114 = vsel %vm109, %v26, 0
  %v117 = vsel %vm109, %v31, 0
  %v120 = vsel %vm109, %v36, 0
  %122 = vmatprep.subr.mxu0 0.0
  %123 = vmatpush1.msra.mxu0 %v37
  %124 = vmatprep.subr.mxu0 0.0
  %125 = vmatpush1.msra.mxu0 %v38
  %126 = vmatprep.subr.mxu0 0.0
  %127 = vmatpush1.msra.mxu0 %v39
  %128 = vmatprep.subr.mxu0 0.0
  %129 = vmatpush1.msra.mxu0 %v40
  %130 = vmatprep.subr.mxu0 0.0
  %131 = vmatpush1.msra.mxu0 %v41
  %132 = vmatprep.subr.mxu0 0.0
  %133 = vmatpush1.msra.mxu0 %v42
  %134 = vmatprep.subr.mxu0 0.0
  %135 = vmatpush1.msra.mxu0 %v43
  %136 = vmatprep.subr.mxu0 0.0
  %137 = vmatpush1.msra.mxu0 %v44
  %138 = vmatprep.subr.mxu0 0.0
  %139 = vmatpush1.msra.mxu0 %v45
  %140 = vmatprep.subr.mxu0 0.0
  %141 = vmatpush1.msra.mxu0 %v46
  %142 = vmatprep.subr.mxu0 0.0
  %143 = vmatpush1.msra.mxu0 %v47
  %144 = vmatprep.subr.mxu0 0.0
  %145 = vmatpush1.msra.mxu0 %v48
  %146 = vmatprep.subr.mxu0 0.0
  %147 = vmatpush1.msra.mxu0 %v49
  %148 = vmatprep.subr.mxu0 0.0
  %149 = vmatpush1.msra.mxu0 %v50
  %150 = vmatprep.subr.mxu0 0.0
  %151 = vmatpush1.msra.mxu0 %v51
  %152 = vmatprep.subr.mxu0 0.0
  %153 = vmatpush1.msra.mxu0 %v52
  %154 = vmatprep.subr.mxu0 0.0
  %155 = vmatpush1.msra.mxu0 %v53
  %156 = vmatprep.subr.mxu0 0.0
  %157 = vmatpush1.msra.mxu0 %v54
  %158 = vmatprep.subr.mxu0 0.0
  %159 = vmatpush1.msra.mxu0 %v55
  %160 = vmatprep.subr.mxu0 0.0
  %161 = vmatpush1.msra.mxu0 %v56
  %162 = vmatprep.subr.mxu0 0.0
  %163 = vmatpush1.msra.mxu0 %v57
  %164 = vmatprep.subr.mxu0 0.0
  %165 = vmatpush1.msra.mxu0 %v58
  %166 = vmatprep.subr.mxu0 0.0
  %167 = vmatpush1.msra.mxu0 %v59
  %168 = vmatprep.subr.mxu0 0.0
  %169 = vmatpush1.msra.mxu0 %v60
  %170 = vmatprep.subr.mxu0 0.0
  %171 = vmatpush1.msra.mxu0 %v61
  %172 = vmatprep.subr.mxu0 0.0
  %173 = vmatpush1.msra.mxu0 %v62
  %174 = vmatprep.subr.mxu0 0.0
  %175 = vmatpush1.msra.mxu0 %v63
  %176 = vmatprep.subr.mxu0 0.0
  %177 = vmatpush1.msra.mxu0 %v64
  %178 = vmatprep.subr.mxu0 0.0
  %179 = vmatpush1.msra.mxu0 %v65
  %180 = vmatprep.subr.mxu0 0.0
  %181 = vmatpush1.msra.mxu0 %v66
  %182 = vmatprep.subr.mxu0 0.0
  %183 = vmatpush1.msra.mxu0 %v67
  %184 = vmatprep.subr.mxu0 0.0
  %185 = vmatpush1.msra.mxu0 %v68
  %186 = vmatprep.mubr.f32.mxu0 %v18
  %187 = vmatmul.mubr.f32.gmra.mrb[0].mxu0 %v17
  %v188 = vpop.f32.mrb[0].mxu0
  %v189 = vadd.f32 0.0, %v188
  %v190 = vpop.f32.mrb[0].mxu0
  %191 = vmatprep.mubr.f32.mxu0 %v23
  %192 = vmatmul.mubr.f32.gmra.mrb[0].mxu0 %v22
  %v193 = vpop.f32.mrb[0].mxu0
  %v194 = vadd.f32 0.0, %v193
  %v195 = vpop.f32.mrb[0].mxu0
  %196 = vmatprep.mubr.f32.mxu0 %v28
  %197 = vmatmul.mubr.f32.gmra.mrb[0].mxu0 %v27
  %v198 = vpop.f32.mrb[0].mxu0
  %v199 = vadd.f32 0.0, %v198
  %v200 = vpop.f32.mrb[0].mxu0
  %201 = vmatprep.mubr.f32.mxu0 %v33
  %202 = vmatmul.mubr.f32.gmra.mrb[0].mxu0 %v32
  %v203 = vpop.f32.mrb[0].mxu0
  %v204 = vadd.f32 0.0, %v203
  %v205 = vpop.f32.mrb[0].mxu0
  %206 = vdwg.mxu0
  %207 = vmatprep.subr.mxu0 0.0
  %208 = vmatpush1.msra.mxu0 %v69
  %209 = vmatprep.subr.mxu0 0.0
  %210 = vmatpush1.msra.mxu0 %v70
  %211 = vmatprep.subr.mxu0 0.0
  %212 = vmatpush1.msra.mxu0 %v71
  %213 = vmatprep.subr.mxu0 0.0
  %214 = vmatpush1.msra.mxu0 %v72
  %215 = vmatprep.subr.mxu0 0.0
  %216 = vmatpush1.msra.mxu0 %v73
  %217 = vmatprep.subr.mxu0 0.0
  %218 = vmatpush1.msra.mxu0 %v74
  %219 = vmatprep.subr.mxu0 0.0
  %220 = vmatpush1.msra.mxu0 %v75
  %221 = vmatprep.subr.mxu0 0.0
  %222 = vmatpush1.msra.mxu0 %v76
  %223 = vmatprep.subr.mxu0 0.0
  %224 = vmatpush1.msra.mxu0 %v77
  %225 = vmatprep.subr.mxu0 0.0
  %226 = vmatpush1.msra.mxu0 %v78
  %227 = vmatprep.subr.mxu0 0.0
  %228 = vmatpush1.msra.mxu0 %v79
  %229 = vmatprep.subr.mxu0 0.0
  %230 = vmatpush1.msra.mxu0 %v80
  %231 = vmatprep.subr.mxu0 0.0
  %232 = vmatpush1.msra.mxu0 %v81
  %233 = vmatprep.subr.mxu0 0.0
  %234 = vmatpush1.msra.mxu0 %v82
  %235 = vmatprep.subr.mxu0 0.0
  %236 = vmatpush1.msra.mxu0 %v83
  %237 = vmatprep.subr.mxu0 0.0
  %238 = vmatpush1.msra.mxu0 %v84
  %239 = vmatprep.subr.mxu0 0.0
  %240 = vmatpush1.msra.mxu0 %v85
  %241 = vmatprep.subr.mxu0 0.0
  %242 = vmatpush1.msra.mxu0 %v86
  %243 = vmatprep.subr.mxu0 0.0
  %244 = vmatpush1.msra.mxu0 %v87
  %245 = vmatprep.subr.mxu0 0.0
  %246 = vmatpush1.msra.mxu0 %v88
  %247 = vmatprep.subr.mxu0 0.0
  %248 = vmatpush1.msra.mxu0 %v89
  %249 = vmatprep.subr.mxu0 0.0
  %250 = vmatpush1.msra.mxu0 %v90
  %251 = vmatprep.subr.mxu0 0.0
  %252 = vmatpush1.msra.mxu0 %v91
  %253 = vmatprep.subr.mxu0 0.0
  %254 = vmatpush1.msra.mxu0 %v92
  %255 = vmatprep.subr.mxu0 0.0
  %256 = vmatpush1.msra.mxu0 %v93
  %257 = vmatprep.subr.mxu0 0.0
  %258 = vmatpush1.msra.mxu0 %v94
  %259 = vmatprep.subr.mxu0 0.0
  %260 = vmatpush1.msra.mxu0 %v95
  %261 = vmatprep.subr.mxu0 0.0
  %262 = vmatpush1.msra.mxu0 %v96
  %263 = vmatprep.subr.mxu0 0.0
  %264 = vmatpush1.msra.mxu0 %v97
  %265 = vmatprep.subr.mxu0 0.0
  %266 = vmatpush1.msra.mxu0 %v98
  %267 = vmatprep.subr.mxu0 0.0
  %268 = vmatpush1.msra.mxu0 %v99
  %269 = vmatprep.subr.mxu0 0.0
  %270 = vmatpush1.msra.mxu0 %v100
  %271 = vmatprep.mubr.f32.mxu0 %v20
  %272 = vmatmul.mubr.f32.gmra.mrb[0].mxu0 %v19
  %v273 = vpop.f32.mrb[0].mxu0
  %v274 = vadd.f32 %v189, %v273
  %v275 = vpop.f32.mrb[0].mxu0
  %276 = vmatprep.mubr.f32.mxu0 %v25
  %277 = vmatmul.mubr.f32.gmra.mrb[0].mxu0 %v24
  %v278 = vpop.f32.mrb[0].mxu0
  %v279 = vadd.f32 %v194, %v278
  %v280 = vpop.f32.mrb[0].mxu0
  %281 = vmatprep.mubr.f32.mxu0 %v30
  %282 = vmatmul.mubr.f32.gmra.mrb[0].mxu0 %v29
  %v283 = vpop.f32.mrb[0].mxu0
  %v284 = vadd.f32 %v199, %v283
  %v285 = vpop.f32.mrb[0].mxu0
  %286 = vmatprep.mubr.f32.mxu0 %v35
  %287 = vmatmul.mubr.f32.gmra.mrb[0].mxu0 %v34
  %v288 = vpop.f32.mrb[0].mxu0
  %v289 = vadd.f32 %v204, %v288
  %v290 = vpop.f32.mrb[0].mxu0
  %291 = vdwg.mxu0
  %292 = vmatprep.subr.mxu0 0.0
  %293 = vmatpush1.msra.mxu0 %v101
  %294 = vmatprep.subr.mxu0 0.0
  %295 = vmatpush1.msra.mxu0 %v102
  %296 = vmatprep.subr.mxu0 0.0
  %297 = vmatpush1.msra.mxu0 %v103
  %298 = vmatprep.subr.mxu0 0.0
  %299 = vmatpush1.msra.mxu0 %v104
  %300 = vmatprep.subr.mxu0 0.0
  %301 = vmatpush1.msra.mxu0 %v105
  %302 = vmatprep.subr.mxu0 0.0
  %303 = vmatpush1.msra.mxu0 %v106
  %304 = vmatprep.subr.mxu0 0.0
  %305 = vmatpush1.msra.mxu0 %v107
  %306 = vmatprep.subr.mxu0 0.0
  %307 = vmatpush1.msra.mxu0 %v108
  %308 = vmatprep.subr.mxu0 0.0
  %309 = vmatpush1.msra.mxu0 0.0
  %310 = vmatprep.subr.mxu0 0.0
  %311 = vmatpush1.msra.mxu0 0.0
  %312 = vmatprep.subr.mxu0 0.0
  %313 = vmatpush1.msra.mxu0 0.0
  %314 = vmatprep.subr.mxu0 0.0
  %315 = vmatpush1.msra.mxu0 0.0
  %316 = vmatprep.subr.mxu0 0.0
  %317 = vmatpush1.msra.mxu0 0.0
  %318 = vmatprep.subr.mxu0 0.0
  %319 = vmatpush1.msra.mxu0 0.0
  %320 = vmatprep.subr.mxu0 0.0
  %321 = vmatpush1.msra.mxu0 0.0
  %322 = vmatprep.subr.mxu0 0.0
  %323 = vmatpush1.msra.mxu0 0.0
  %324 = vmatprep.subr.mxu0 0.0
  %325 = vmatpush1.msra.mxu0 0.0
  %326 = vmatprep.subr.mxu0 0.0
  %327 = vmatpush1.msra.mxu0 0.0
  %328 = vmatprep.subr.mxu0 0.0
  %329 = vmatpush1.msra.mxu0 0.0
  %330 = vmatprep.subr.mxu0 0.0
  %331 = vmatpush1.msra.mxu0 0.0
  %332 = vmatprep.subr.mxu0 0.0
  %333 = vmatpush1.msra.mxu0 0.0
  %334 = vmatprep.subr.mxu0 0.0
  %335 = vmatpush1.msra.mxu0 0.0
  %336 = vmatprep.subr.mxu0 0.0
  %337 = vmatpush1.msra.mxu0 0.0
  %338 = vmatprep.subr.mxu0 0.0
  %339 = vmatpush1.msra.mxu0 0.0
  %340 = vmatprep.subr.mxu0 0.0
  %341 = vmatpush1.msra.mxu0 0.0
  %342 = vmatprep.subr.mxu0 0.0
  %343 = vmatpush1.msra.mxu0 0.0
  %344 = vmatprep.subr.mxu0 0.0
  %345 = vmatpush1.msra.mxu0 0.0
  %346 = vmatprep.subr.mxu0 0.0
  %347 = vmatpush1.msra.mxu0 0.0
  %348 = vmatprep.subr.mxu0 0.0
  %349 = vmatpush1.msra.mxu0 0.0
  %350 = vmatprep.subr.mxu0 0.0
  %351 = vmatpush1.msra.mxu0 0.0
  %352 = vmatprep.subr.mxu0 0.0
  %353 = vmatpush1.msra.mxu0 0.0
  %354 = vmatprep.subr.mxu0 0.0
  %355 = vmatpush1.msra.mxu0 0.0
  %356 = vmatprep.mubr.f32.mxu0 0.0
  %357 = vmatmul.mubr.f32.gmra.mrb[0].mxu0 %v111
  %v358 = vpop.f32.mrb[0].mxu0
  %v359 = vadd.f32 %v274, %v358
  %v360 = vpop.f32.mrb[0].mxu0
  %361 = vmatprep.mubr.f32.mxu0 0.0
  %362 = vmatmul.mubr.f32.gmra.mrb[0].mxu0 %v114
  %v363 = vpop.f32.mrb[0].mxu0
  %v364 = vadd.f32 %v279, %v363
  %v365 = vpop.f32.mrb[0].mxu0
  %366 = vmatprep.mubr.f32.mxu0 0.0
  %367 = vmatmul.mubr.f32.gmra.mrb[0].mxu0 %v117
  %v368 = vpop.f32.mrb[0].mxu0
  %v369 = vadd.f32 %v284, %v368
  %v370 = vpop.f32.mrb[0].mxu0
  %371 = vmatprep.mubr.f32.mxu0 0.0
  %372 = vmatmul.mubr.f32.gmra.mrb[0].mxu0 %v120
  %v373 = vpop.f32.mrb[0].mxu0
  %v374 = vadd.f32 %v289, %v373
  %v375 = vpop.f32.mrb[0].mxu0
  %376 = vdwg.mxu0
  %v377 = vld [vmem:[%s2] sm:$0x1]
  %v379 = vlaneseq
  %v380 = vshrl.u32 %v379, 7
  %v381 = vsub.s32 0, %v380
  %v382 = vrot.slane %v377, %v381
  %v384 = vmul.f32 %v359, %v382
  %v385 = vmul.f32 %v364, %v382
  %v386 = vmul.f32 %v369, %v382
  %v387 = vmul.f32 %v374, %v382
  %v388 = vld [vmem:[%s3] sm:$0x1]
  %v390 = vlaneseq
  %v391 = vshrl.u32 %v390, 7
  %v392 = vsub.s32 0, %v391
  %v393 = vrot.slane %v388, %v392
  %v395 = vadd.f32 %v384, %v393
  %v396 = vadd.f32 %v385, %v393
  %v397 = vadd.f32 %v386, %v393
  %v398 = vadd.f32 %v387, %v393
  %v399 = vmax.f32 %v395, 0.0
  %v400 = vmax.f32 %v396, 0.0
  %v401 = vmax.f32 %v397, 0.0
  %v402 = vmax.f32 %v398, 0.0
  %403 = vst [vmem:[%s4] sm:$0xff] %v399
  %404 = vst [vmem:[%s4 + $0x8] sm:$0xff] %v400
  %405 = vst [vmem:[%s4 + $0x10] sm:$0xff] %v401
  %406 = vst [vmem:[%s4 + $0x18] sm:$0xff] %v402
  // Predicated region
  $region18: #{jepa_forward.7} parent=0 // pred_check
    _
  $region19: #{jepa_forward.7} parent=0 // pred_check_branch
    %408 = sbr.rel (0) target = $region21
  $region20: #{jepa_forward.7} parent=0 // pred_region
    _
  $region21: #{jepa_forward.7} parent=0 // pred_fallthru
    _
  // Predicated region
  $region22: #{jepa_forward.7} parent=0 // pred_check
    _
  $region23: #{jepa_forward.7} parent=0 // pred_check_branch
    %410 = sbr.rel (0) target = $region25
  $region24: #{jepa_forward.7} parent=0 // pred_region
    _
  $region25: #{jepa_forward.7} parent=0 // pred_fallthru
    _

// kernel: jepa_forward.9
$region0: #{jepa_forward.9}
  #allocation0 [shape = 'u32[]', space=smem, size = 0x4, offset = 0x4, fixed_abs, tag = 'smem constant byte address 0x4 - core index']
  #allocation1 [shape = 'u32[144,128]{1,0:T(1,128)}', space=vmem, size = 0x12000, scoped, tag = 'internal scratch']
  #allocation2 [shape = 'f32[2,256]{1,0:T(2,128)}', space=vmem, size = 0x800, scoped, tag = 'scratch operand']
  %s0 = inlined_call_operand.vmem [shape: f32[2,256], index: 0, kind: input, shape index: {}]
  %s1 = inlined_call_operand.vmem [shape: f32[3,2,2], index: 1, kind: input, shape index: {}]
  %s2 = inlined_call_operand.vmem [shape: f32[256,256], index: 2, kind: input, shape index: {}]
  %s3 = inlined_call_operand.vmem [shape: f32[2,256], index: 3, kind: input, shape index: {}]
  %s4 = inlined_call_operand.vmem [shape: f32[1,256], index: 4, kind: input, shape index: {}]
  %s5 = inlined_call_operand.vmem [shape: f32[256,256], index: 5, kind: input, shape index: {}]
  %s6 = inlined_call_operand.vmem [shape: f32[1,256], index: 6, kind: input, shape index: {}]
  %s7 = inlined_call_operand.vmem [shape: f32[3,2,256], index: 7, kind: output, shape index: {}]
  %s8 = sld [smem:[#allocation0]]
  $region65: #{jepa_forward.9} parent=0
    _
  %s10 = ssub.s32 1, %s8
  %s11 = scalar_select 0, %s10, %s8
  loop: start=0, step=1, limit=5
  $region2: #{jepa_forward.9} parent=0 // loop_pre_header
    _
  $region3: #{jepa_forward.9} parent=0 // loop_header
    %s13 = sphi 0, %s17
    %p14 = scmp.ge.s32.totalorder %s13, 5
    %s21 = sphi 0, %s21
    %s23 = sphi 0, %s21
    %s24 = sphi 0, %s23
    %s38 = sphi 0, %s24
    %s44 = sphi 0, %s46
    %s47 = sphi 0, %s44
    %s48 = sphi 0, %s47
    %s64 = sphi 0, %s48
    %s68 = sphi 0, %s68
    %s70 = sphi 0, %s68
    %s71 = sphi 0, %s70
    %s85 = sphi 0, %s71
    %s89 = sphi 0, %s89
    %s91 = sphi 0, %s89
    %s92 = sphi 0, %s91
    %s106 = sphi 0, %s92
    %s110 = sphi 0, %s110
    %s112 = sphi 0, %s110
    %s113 = sphi 0, %s112
    %s127 = sphi 0, %s113
    %s131 = sphi 0, %s131
    %s133 = sphi 0, %s131
    %s134 = sphi 0, %s133
    %s148 = sphi 0, %s134
    %s152 = sphi 0, %s152
    %s154 = sphi 0, %s152
    %s155 = sphi 0, %s154
    %s169 = sphi 0, %s155
    %s175 = sphi 0, %s177
    %s178 = sphi 0, %s175
    %s179 = sphi 0, %s178
    %s195 = sphi 0, %s179
  $region4: #{jepa_forward.9} parent=0 // loop_header_branch
    %16 = sbr.rel (%p14) target = $region8
  $region5: #{jepa_forward.9} parent=0 // loop_body
    %s18 = ssub.s32 %s13, 1
    %s19 = ssub.s32 %s13, 2
    %s20 = sadd.s32 %s13, 1
    %s22 = sadd.s32 %s21, 1
    %p25 = scmp.eq.s32.totalorder %s13, 2
    %p26 = scmp.ne.s32.totalorder %s21, %s23
    %p27 = scmp.eq.s32.totalorder %s13, 0
    %p28 = por %p26, %p27
    %p29 = scmp.ne.s32.totalorder %s21, %s23
    %p30 = scmp.eq.s32.totalorder %s18, 2
    %p31 = por %p29, %p30
    %p32 = scmp.ne.s32.totalorder %s23, %s24
    %p33 = scmp.eq.s32.totalorder %s18, 0
    %p34 = por %p32, %p33
    %p35 = scmp.ne.s32.totalorder %s23, %s24
    %p36 = scmp.eq.s32.totalorder %s19, 2
    %p37 = por %p35, %p36
    %p39 = scmp.ne.s32.totalorder %s24, %s38
    %p40 = scmp.eq.s32.totalorder %s19, 0
    %p41 = por %p39, %p40
    %s42 = ssub.s32 %s13, %s20
    %p43 = scmp.eq.s32.totalorder %s42, 0
    %s45 = sadd.s32 %s44, 1
    %s46 = scalar_select %p43, %s44, %s45
    %p49 = pneg %p43
    %p50 = scmp.eq.s32.totalorder %s13, 2
    %p51 = por %p49, %p50
    %p52 = scmp.ne.s32.totalorder %s44, %s47
    %p53 = scmp.eq.s32.totalorder %s13, 0
    %p54 = por %p52, %p53
    %p55 = scmp.ne.s32.totalorder %s44, %s47
    %p56 = scmp.eq.s32.totalorder %s18, 2
    %p57 = por %p55, %p56
    %p58 = scmp.ne.s32.totalorder %s47, %s48
    %p59 = scmp.eq.s32.totalorder %s18, 0
    %p60 = por %p58, %p59
    %p61 = scmp.ne.s32.totalorder %s47, %s48
    %p62 = scmp.eq.s32.totalorder %s19, 2
    %p63 = por %p61, %p62
    %p65 = scmp.ne.s32.totalorder %s48, %s64
    %p66 = scmp.eq.s32.totalorder %s19, 0
    %p67 = por %p65, %p66
    %s69 = sadd.s32 %s68, 1
    %p72 = scmp.eq.s32.totalorder %s13, 2
    %p73 = scmp.ne.s32.totalorder %s68, %s70
    %p74 = scmp.eq.s32.totalorder %s13, 0
    %p75 = por %p73, %p74
    %p76 = scmp.ne.s32.totalorder %s68, %s70
    %p77 = scmp.eq.s32.totalorder %s18, 2
    %p78 = por %p76, %p77
    %p79 = scmp.ne.s32.totalorder %s70, %s71
    %p80 = scmp.eq.s32.totalorder %s18, 0
    %p81 = por %p79, %p80
    %p82 = scmp.ne.s32.totalorder %s70, %s71
    %p83 = scmp.eq.s32.totalorder %s19, 2
    %p84 = por %p82, %p83
    %p86 = scmp.ne.s32.totalorder %s71, %s85
    %p87 = scmp.eq.s32.totalorder %s19, 0
    %p88 = por %p86, %p87
    %s90 = sadd.s32 %s89, 1
    %p93 = scmp.eq.s32.totalorder %s13, 2
    %p94 = scmp.ne.s32.totalorder %s89, %s91
    %p95 = scmp.eq.s32.totalorder %s13, 0
    %p96 = por %p94, %p95
    %p97 = scmp.ne.s32.totalorder %s89, %s91
    %p98 = scmp.eq.s32.totalorder %s18, 2
    %p99 = por %p97, %p98
    %p100 = scmp.ne.s32.totalorder %s91, %s92
    %p101 = scmp.eq.s32.totalorder %s18, 0
    %p102 = por %p100, %p101
    %p103 = scmp.ne.s32.totalorder %s91, %s92
    %p104 = scmp.eq.s32.totalorder %s19, 2
    %p105 = por %p103, %p104
    %p107 = scmp.ne.s32.totalorder %s92, %s106
    %p108 = scmp.eq.s32.totalorder %s19, 0
    %p109 = por %p107, %p108
    %s111 = sadd.s32 %s110, 1
    %p114 = scmp.eq.s32.totalorder %s13, 2
    %p115 = scmp.ne.s32.totalorder %s110, %s112
    %p116 = scmp.eq.s32.totalorder %s13, 0
    %p117 = por %p115, %p116
    %p118 = scmp.ne.s32.totalorder %s110, %s112
    %p119 = scmp.eq.s32.totalorder %s18, 2
    %p120 = por %p118, %p119
    %p121 = scmp.ne.s32.totalorder %s112, %s113
    %p122 = scmp.eq.s32.totalorder %s18, 0
    %p123 = por %p121, %p122
    %p124 = scmp.ne.s32.totalorder %s112, %s113
    %p125 = scmp.eq.s32.totalorder %s19, 2
    %p126 = por %p124, %p125
    %p128 = scmp.ne.s32.totalorder %s113, %s127
    %p129 = scmp.eq.s32.totalorder %s19, 0
    %p130 = por %p128, %p129
    %s132 = sadd.s32 %s131, 1
    %p135 = scmp.eq.s32.totalorder %s13, 2
    %p136 = scmp.ne.s32.totalorder %s131, %s133
    %p137 = scmp.eq.s32.totalorder %s13, 0
    %p138 = por %p136, %p137
    %p139 = scmp.ne.s32.totalorder %s131, %s133
    %p140 = scmp.eq.s32.totalorder %s18, 2
    %p141 = por %p139, %p140
    %p142 = scmp.ne.s32.totalorder %s133, %s134
    %p143 = scmp.eq.s32.totalorder %s18, 0
    %p144 = por %p142, %p143
    %p145 = scmp.ne.s32.totalorder %s133, %s134
    %p146 = scmp.eq.s32.totalorder %s19, 2
    %p147 = por %p145, %p146
    %p149 = scmp.ne.s32.totalorder %s134, %s148
    %p150 = scmp.eq.s32.totalorder %s19, 0
    %p151 = por %p149, %p150
    %s153 = sadd.s32 %s152, 1
    %p156 = scmp.eq.s32.totalorder %s13, 2
    %p157 = scmp.ne.s32.totalorder %s152, %s154
    %p158 = scmp.eq.s32.totalorder %s13, 0
    %p159 = por %p157, %p158
    %p160 = scmp.ne.s32.totalorder %s152, %s154
    %p161 = scmp.eq.s32.totalorder %s18, 2
    %p162 = por %p160, %p161
    %p163 = scmp.ne.s32.totalorder %s154, %s155
    %p164 = scmp.eq.s32.totalorder %s18, 0
    %p165 = por %p163, %p164
    %p166 = scmp.ne.s32.totalorder %s154, %s155
    %p167 = scmp.eq.s32.totalorder %s19, 2
    %p168 = por %p166, %p167
    %p170 = scmp.ne.s32.totalorder %s155, %s169
    %p171 = scmp.eq.s32.totalorder %s19, 0
    %p172 = por %p170, %p171
    %s173 = ssub.s32 %s13, %s20
    %p174 = scmp.eq.s32.totalorder %s173, 0
    %s176 = sadd.s32 %s175, 1
    %s177 = scalar_select %p174, %s175, %s176
    %p180 = pneg %p174
    %p181 = scmp.eq.s32.totalorder %s13, 2
    %p182 = por %p180, %p181
    %p183 = scmp.ne.s32.totalorder %s175, %s178
    %p184 = scmp.eq.s32.totalorder %s13, 0
    %p185 = por %p183, %p184
    %p186 = scmp.ne.s32.totalorder %s175, %s178
    %p187 = scmp.eq.s32.totalorder %s18, 2
    %p188 = por %p186, %p187
    %p189 = scmp.ne.s32.totalorder %s178, %s179
    %p190 = scmp.eq.s32.totalorder %s18, 0
    %p191 = por %p189, %p190
    %p192 = scmp.ne.s32.totalorder %s178, %s179
    %p193 = scmp.eq.s32.totalorder %s19, 2
    %p194 = por %p192, %p193
    %p196 = scmp.ne.s32.totalorder %s179, %s195
    %p197 = scmp.eq.s32.totalorder %s19, 0
    %p198 = por %p196, %p197
    %p199 = scmp.le.s32.totalorder 1, %s13
    %p200 = scmp.lt.s32.totalorder %s13, 4
    %p201 = pnand %p199, %p200
    %p202 = pneg %p201
    // Predicated region
    $region9: #{jepa_forward.9} parent=5 // pred_check
      _
    $region10: #{jepa_forward.9} parent=5 // pred_check_branch
      %204 = sbr.rel (%p201) target = $region12
    $region11: #{jepa_forward.9} parent=5 // pred_region
      %s205 = ssub.s32 %s13, 1
      // Predicated region
      $region13: #{jepa_forward.9} parent=11 // pred_check
        %p206 = pneg %p34
      $region14: #{jepa_forward.9} parent=11 // pred_check_branch
        %208 = sbr.rel (%p206) target = $region16
      $region15: #{jepa_forward.9} parent=11 // pred_region
        _
      $region16: #{jepa_forward.9} parent=11 // pred_fallthru
        _
      // Predicated region
      $region17: #{jepa_forward.9} parent=11 // pred_check
        %p209 = pneg %p81
      $region18: #{jepa_forward.9} parent=11 // pred_check_branch
        %211 = sbr.rel (%p209) target = $region20
      $region19: #{jepa_forward.9} parent=11 // pred_region
        _
      $region20: #{jepa_forward.9} parent=11 // pred_fallthru
        _
      // Predicated region
      $region21: #{jepa_forward.9} parent=11 // pred_check
        %p212 = pneg %p102
      $region22: #{jepa_forward.9} parent=11 // pred_check_branch
        %214 = sbr.rel (%p212) target = $region24
      $region23: #{jepa_forward.9} parent=11 // pred_region
        _
      $region24: #{jepa_forward.9} parent=11 // pred_fallthru
        _
      // Predicated region
      $region25: #{jepa_forward.9} parent=11 // pred_check
        %p215 = pneg %p123
      $region26: #{jepa_forward.9} parent=11 // pred_check_branch
        %217 = sbr.rel (%p215) target = $region28
      $region27: #{jepa_forward.9} parent=11 // pred_region
        _
      $region28: #{jepa_forward.9} parent=11 // pred_fallthru
        _
      // Predicated region
      $region29: #{jepa_forward.9} parent=11 // pred_check
        %p218 = pneg %p144
      $region30: #{jepa_forward.9} parent=11 // pred_check_branch
        %220 = sbr.rel (%p218) target = $region32
      $region31: #{jepa_forward.9} parent=11 // pred_region
        _
      $region32: #{jepa_forward.9} parent=11 // pred_fallthru
        _
      // Predicated region
      $region33: #{jepa_forward.9} parent=11 // pred_check
        %p221 = pneg %p165
      $region34: #{jepa_forward.9} parent=11 // pred_check_branch
        %223 = sbr.rel (%p221) target = $region36
      $region35: #{jepa_forward.9} parent=11 // pred_region
        _
      $region36: #{jepa_forward.9} parent=11 // pred_fallthru
        _
    $region12: #{jepa_forward.9} parent=5 // pred_fallthru
      _
    %p224 = scmp.lt.s32.totalorder %s13, 3
    // Predicated region
    $region37: #{jepa_forward.9} parent=5 // pred_check
      %p225 = pneg %p224
    $region38: #{jepa_forward.9} parent=5 // pred_check_branch
      %227 = sbr.rel (%p225) target = $region40
    $region39: #{jepa_forward.9} parent=5 // pred_region
      // Predicated region
      $region41: #{jepa_forward.9} parent=39 // pred_check
        %p228 = pneg %p54
      $region42: #{jepa_forward.9} parent=39 // pred_check_branch
        %230 = sbr.rel (%p228) target = $region44
      $region43: #{jepa_forward.9} parent=39 // pred_region
        %p231 = scmp.lt.s32.totalorder %s13, 2
        %s232 = scalar_select %p231, %s13, 2
        %s233 = smul.addr %s232, 2
        %s234 = scalar_lea.vmem %s1, %s233
      $region44: #{jepa_forward.9} parent=39 // pred_fallthru
        _
    $region40: #{jepa_forward.9} parent=5 // pred_fallthru
      _
    %p235 = scmp.le.s32.totalorder 1, %s13
    %p236 = scmp.lt.s32.totalorder %s13, 4
    %p237 = pnand %p235, %p236
    %p238 = pneg %p237
    // Predicated region
    $region45: #{jepa_forward.9} parent=5 // pred_check
      _
    $region46: #{jepa_forward.9} parent=5 // pred_check_branch
      %240 = sbr.rel (%p237) target = $region48
    $region47: #{jepa_forward.9} parent=5 // pred_region
      %s241 = ssub.s32 %s13, 1
      %p242 = pneg %p34
      %p243 = pneg %p31
      %p244 = scmp.lt.s32.totalorder %s18, 2
      %s245 = scalar_select %p244, %s18, 2
      %s246 = smul.addr %s245, 2
      %s247 = scalar_lea.vmem %s1, %s246
      %p248 = pneg %p60
      %p249 = pneg %p57
      %p250 = pneg %p81
      %p251 = pneg %p78
      %p252 = pneg %p102
      %p253 = pneg %p99
      %p254 = pneg %p123
      %p255 = pneg %p120
      %p256 = pneg %p144
      %p257 = pneg %p141
      %p258 = pneg %p165
      %p259 = pneg %p162
      %p260 = pneg %p191
      %p261 = pneg %p188
      %p262 = scmp.lt.s32.totalorder %s18, 2
      %s263 = scalar_select %p262, %s18, 2
      %s264 = smul.addr %s263, 2
      %s265 = smul.addr %s264, 2
      %s266 = scalar_lea.vmem %s7, %s265
      %p267 = scmp.lt.s32.totalorder %s18, 2
      %s268 = scalar_select %p267, %s18, 2
      %s269 = smul.addr %s268, 2
      %s270 = scalar_lea.vmem %s1, %s269
      %p271 = scmp.lt.s32.totalorder %s18, 2
      %s272 = scalar_select %p271, %s18, 2
      %s273 = smul.addr %s272, 2
      %s274 = smul.addr %s273, 2
      %s275 = scalar_lea.vmem %s7, %s274
      %p276 = scmp.eq.s32.totalorder %s18, 0
      // Predicated region
      $region49: #{jepa_forward.9} parent=47 // pred_check
        %p277 = pneg %p276
      $region50: #{jepa_forward.9} parent=47 // pred_check_branch
        %279 = sbr.rel (%p277) target = $region52
      $region51: #{jepa_forward.9} parent=47 // pred_region
        %v280 = vld [vmem:[%s0] sm:$0xf]
        %281 = vst [vmem:[#allocation2] sm:$0xf] %v280
      $region52: #{jepa_forward.9} parent=47 // pred_fallthru
        _
      %v282 = vld [vmem:[#allocation2] sm:$0xf]
      %v283 = vld [vmem:[%s270] sm:$0x3]
      %v284 = vld [vmem:[%s2] sm:$0xff]
      %v285 = vld [vmem:[%s2 + $0x8] sm:$0xff]
      %v286 = vld [vmem:[%s2 + $0x10] sm:$0xff]
      %v287 = vld [vmem:[%s2 + $0x18] sm:$0xff]
      %v288 = vld [vmem:[%s2 + $0x20] sm:$0xff]
      %v289 = vld [vmem:[%s2 + $0x28] sm:$0xff]
      %v290 = vld [vmem:[%s2 + $0x30] sm:$0xff]
      %v291 = vld [vmem:[%s2 + $0x38] sm:$0xff]
      %v292 = vld [vmem:[%s2 + $0x40] sm:$0xff]
      %v293 = vld [vmem:[%s2 + $0x48] sm:$0xff]
      %v294 = vld [vmem:[%s2 + $0x50] sm:$0xff]
      %v295 = vld [vmem:[%s2 + $0x58] sm:$0xff]
      %v296 = vld [vmem:[%s2 + $0x60] sm:$0xff]
      %v297 = vld [vmem:[%s2 + $0x68] sm:$0xff]
      %v298 = vld [vmem:[%s2 + $0x70] sm:$0xff]
      %v299 = vld [vmem:[%s2 + $0x78] sm:$0xff]
      %v300 = vld [vmem:[%s2 + $0x80] sm:$0xff]
      %v301 = vld [vmem:[%s2 + $0x88] sm:$0xff]
      %v302 = vld [vmem:[%s2 + $0x90] sm:$0xff]
      %v303 = vld [vmem:[%s2 + $0x98] sm:$0xff]
      %v304 = vld [vmem:[%s2 + $0xa0] sm:$0xff]
      %v305 = vld [vmem:[%s2 + $0xa8] sm:$0xff]
      %v306 = vld [vmem:[%s2 + $0xb0] sm:$0xff]
      %v307 = vld [vmem:[%s2 + $0xb8] sm:$0xff]
      %v308 = vld [vmem:[%s2 + $0xc0] sm:$0xff]
      %v309 = vld [vmem:[%s2 + $0xc8] sm:$0xff]
      %v310 = vld [vmem:[%s2 + $0xd0] sm:$0xff]
      %v311 = vld [vmem:[%s2 + $0xd8] sm:$0xff]
      %v312 = vld [vmem:[%s2 + $0xe0] sm:$0xff]
      %v313 = vld [vmem:[%s2 + $0xe8] sm:$0xff]
      %v314 = vld [vmem:[%s2 + $0xf0] sm:$0xff]
      %v315 = vld [vmem:[%s2 + $0xf8] sm:$0xff]
      %v316 = vld [vmem:[%s2 + $0x100] sm:$0xff]
      %v317 = vld [vmem:[%s2 + $0x108] sm:$0xff]
      %v318 = vld [vmem:[%s2 + $0x110] sm:$0xff]
      %v319 = vld [vmem:[%s2 + $0x118] sm:$0xff]
      %v320 = vld [vmem:[%s2 + $0x120] sm:$0xff]
      %v321 = vld [vmem:[%s2 + $0x128] sm:$0xff]
      %v322 = vld [vmem:[%s2 + $0x130] sm:$0xff]
      %v323 = vld [vmem:[%s2 + $0x138] sm:$0xff]
      %v324 = vld [vmem:[%s2 + $0x140] sm:$0xff]
      %v325 = vld [vmem:[%s2 + $0x148] sm:$0xff]
      %v326 = vld [vmem:[%s2 + $0x150] sm:$0xff]
      %v327 = vld [vmem:[%s2 + $0x158] sm:$0xff]
      %v328 = vld [vmem:[%s2 + $0x160] sm:$0xff]
      %v329 = vld [vmem:[%s2 + $0x168] sm:$0xff]
      %v330 = vld [vmem:[%s2 + $0x170] sm:$0xff]
      %v331 = vld [vmem:[%s2 + $0x178] sm:$0xff]
      %v332 = vld [vmem:[%s2 + $0x180] sm:$0xff]
      %v333 = vld [vmem:[%s2 + $0x188] sm:$0xff]
      %v334 = vld [vmem:[%s2 + $0x190] sm:$0xff]
      %v335 = vld [vmem:[%s2 + $0x198] sm:$0xff]
      %v336 = vld [vmem:[%s2 + $0x1a0] sm:$0xff]
      %v337 = vld [vmem:[%s2 + $0x1a8] sm:$0xff]
      %v338 = vld [vmem:[%s2 + $0x1b0] sm:$0xff]
      %v339 = vld [vmem:[%s2 + $0x1b8] sm:$0xff]
      %v340 = vld [vmem:[%s2 + $0x1c0] sm:$0xff]
      %v341 = vld [vmem:[%s2 + $0x1c8] sm:$0xff]
      %v342 = vld [vmem:[%s2 + $0x1d0] sm:$0xff]
      %v343 = vld [vmem:[%s2 + $0x1d8] sm:$0xff]
      %v344 = vld [vmem:[%s2 + $0x1e0] sm:$0xff]
      %v345 = vld [vmem:[%s2 + $0x1e8] sm:$0xff]
      %v346 = vld [vmem:[%s2 + $0x1f0] sm:$0xff]
      %v347 = vld [vmem:[%s2 + $0x1f8] sm:$0xff]
      %v348 = vld [vmem:[%s3] ss:$2 sm:$0x3]
      %350 = vset.pattern.permute.xlu0 0
      %351 = vperm.xlu0 %350, %v283
      %v352 = vpop.permute.xlu0 %351
      %v355 = vlaneseq
      %v356 = vshrl.u32 %v355, 7
      %v357 = vsub.s32 0, %v356
      %v358 = vrot.slane %v348, %v357
      %v359 = vlaneseq
      %v360 = vshrl.u32 %v359, 7
      %v361 = vsub.s32 1, %v360
      %v362 = vrot.slane %v348, %v361
      %v365 = vmul.f32 %v352, %v358
      %v366 = vmul.f32 %v352, %v362
      %v369 = vunpack.c.l.s4 1983009808
      %v370 = vunpack.c.0.s8 %v369
      %v371 = vlaneseq
      %v372 = vshrl.u32 %v371, 7
      %v373 = vsub.s32 %v370, %v372
      %v374 = vrot.slane %v282, %v373
      %v375 = vcombine.high %v374, %v374
      %378 = vmatprep.subr.mxu0 %v285
      %379 = vmatpush1.msra.mxu0 %v284
      %380 = vmatprep.subr.mxu0 %v287
      %381 = vmatpush1.msra.mxu0 %v286
      %382 = vmatprep.subr.mxu0 %v289
      %383 = vmatpush1.msra.mxu0 %v288
      %384 = vmatprep.subr.mxu0 %v291
      %385 = vmatpush1.msra.mxu0 %v290
      %386 = vmatprep.subr.mxu0 %v293
      %387 = vmatpush1.msra.mxu0 %v292
      %388 = vmatprep.subr.mxu0 %v295
      %389 = vmatpush1.msra.mxu0 %v294
      %390 = vmatprep.subr.mxu0 %v297
      %391 = vmatpush1.msra.mxu0 %v296
      %392 = vmatprep.subr.mxu0 %v299
      %393 = vmatpush1.msra.mxu0 %v298
      %394 = vmatprep.subr.mxu0 %v301
      %395 = vmatpush1.msra.mxu0 %v300
      %396 = vmatprep.subr.mxu0 %v303
      %397 = vmatpush1.msra.mxu0 %v302
      %398 = vmatprep.subr.mxu0 %v305
      %399 = vmatpush1.msra.mxu0 %v304
      %400 = vmatprep.subr.mxu0 %v307
      %401 = vmatpush1.msra.mxu0 %v306
      %402 = vmatprep.subr.mxu0 %v309
      %403 = vmatpush1.msra.mxu0 %v308
      %404 = vmatprep.subr.mxu0 %v311
      %405 = vmatpush1.msra.mxu0 %v310
      %406 = vmatprep.subr.mxu0 %v313
      %407 = vmatpush1.msra.mxu0 %v312
      %408 = vmatprep.subr.mxu0 %v315
      %409 = vmatpush1.msra.mxu0 %v314
      %410 = vmatprep.subr.mxu0 %v317
      %411 = vmatpush1.msra.mxu0 %v316
      %412 = vmatprep.subr.mxu0 %v319
      %413 = vmatpush1.msra.mxu0 %v318
      %414 = vmatprep.subr.mxu0 %v321
      %415 = vmatpush1.msra.mxu0 %v320
      %416 = vmatprep.subr.mxu0 %v323
      %417 = vmatpush1.msra.mxu0 %v322
      %418 = vmatprep.subr.mxu0 %v325
      %419 = vmatpush1.msra.mxu0 %v324
      %420 = vmatprep.subr.mxu0 %v327
      %421 = vmatpush1.msra.mxu0 %v326
      %422 = vmatprep.subr.mxu0 %v329
      %423 = vmatpush1.msra.mxu0 %v328
      %424 = vmatprep.subr.mxu0 %v331
      %425 = vmatpush1.msra.mxu0 %v330
      %426 = vmatprep.subr.mxu0 %v333
      %427 = vmatpush1.msra.mxu0 %v332
      %428 = vmatprep.subr.mxu0 %v335
      %429 = vmatpush1.msra.mxu0 %v334
      %430 = vmatprep.subr.mxu0 %v337
      %431 = vmatpush1.msra.mxu0 %v336
      %432 = vmatprep.subr.mxu0 %v339
      %433 = vmatpush1.msra.mxu0 %v338
      %434 = vmatprep.subr.mxu0 %v341
      %435 = vmatpush1.msra.mxu0 %v340
      %436 = vmatprep.subr.mxu0 %v343
      %437 = vmatpush1.msra.mxu0 %v342
      %438 = vmatprep.subr.mxu0 %v345
      %439 = vmatpush1.msra.mxu0 %v344
      %440 = vmatprep.subr.mxu0 %v347
      %441 = vmatpush1.msra.mxu0 %v346
      %442 = vmatprep.mubr.f32.mxu0 %v375
      %443 = vmatmul.mubr.f32.gmra.mrb[0].mxu0 %v374
      %v444 = vpop.f32.mrb[0].mxu0
      %v445 = vadd.f32 %v365, %v444
      %v446 = vpop.f32.mrb[0].mxu0
      %v447 = vadd.f32 %v366, %v446
      %448 = vdwg.mxu0
      %s449 = scalar_lea.vmem %s3, 1
      %v450 = vld [vmem:[%s449] ss:$2 sm:$0x3]
      %451 = vset.pattern.permute.xlu0 1
      %452 = vperm.xlu0 %451, %v283
      %v453 = vpop.permute.xlu0 %452
      %v456 = vlaneseq
      %v457 = vshrl.u32 %v456, 7
      %v458 = vsub.s32 0, %v457
      %v459 = vrot.slane %v450, %v458
      %v460 = vlaneseq
      %v461 = vshrl.u32 %v460, 7
      %v462 = vsub.s32 1, %v461
      %v463 = vrot.slane %v450, %v462
      %v466 = vmul.f32 %v453, %v459
      %v467 = vmul.f32 %v453, %v463
      %v468 = vadd.f32 %v445, %v466
      %v469 = vadd.f32 %v447, %v467
      %v470 = vld [vmem:[%s4] sm:$0x3]
      %v472 = vlaneseq
      %v473 = vshrl.u32 %v472, 7
      %v474 = vsub.s32 0, %v473
      %v475 = vrot.slane %v470, %v474
      %v476 = vlaneseq
      %v477 = vshrl.u32 %v476, 7
      %v478 = vsub.s32 1, %v477
      %v479 = vrot.slane %v470, %v478
      %v482 = vadd.f32 %v468, %v475
      %v483 = vadd.f32 %v469, %v479
      %v484 = vmax.f32 %v482, 0.0
      %v485 = vmax.f32 %v483, 0.0
      %v486 = vld [vmem:[%s5] sm:$0xff]
      %v487 = vld [vmem:[%s5 + $0x8] sm:$0xff]
      %v488 = vld [vmem:[%s5 + $0x10] sm:$0xff]
      %v489 = vld [vmem:[%s5 + $0x18] sm:$0xff]
      %v490 = vld [vmem:[%s5 + $0x20] sm:$0xff]
      %v491 = vld [vmem:[%s5 + $0x28] sm:$0xff]
      %v492 = vld [vmem:[%s5 + $0x30] sm:$0xff]
      %v493 = vld [vmem:[%s5 + $0x38] sm:$0xff]
      %v494 = vld [vmem:[%s5 + $0x40] sm:$0xff]
      %v495 = vld [vmem:[%s5 + $0x48] sm:$0xff]
      %v496 = vld [vmem:[%s5 + $0x50] sm:$0xff]
      %v497 = vld [vmem:[%s5 + $0x58] sm:$0xff]
      %v498 = vld [vmem:[%s5 + $0x60] sm:$0xff]
      %v499 = vld [vmem:[%s5 + $0x68] sm:$0xff]
      %v500 = vld [vmem:[%s5 + $0x70] sm:$0xff]
      %v501 = vld [vmem:[%s5 + $0x78] sm:$0xff]
      %v502 = vld [vmem:[%s5 + $0x80] sm:$0xff]
      %v503 = vld [vmem:[%s5 + $0x88] sm:$0xff]
      %v504 = vld [vmem:[%s5 + $0x90] sm:$0xff]
      %v505 = vld [vmem:[%s5 + $0x98] sm:$0xff]
      %v506 = vld [vmem:[%s5 + $0xa0] sm:$0xff]
      %v507 = vld [vmem:[%s5 + $0xa8] sm:$0xff]
      %v508 = vld [vmem:[%s5 + $0xb0] sm:$0xff]
      %v509 = vld [vmem:[%s5 + $0xb8] sm:$0xff]
      %v510 = vld [vmem:[%s5 + $0xc0] sm:$0xff]
      %v511 = vld [vmem:[%s5 + $0xc8] sm:$0xff]
      %v512 = vld [vmem:[%s5 + $0xd0] sm:$0xff]
      %v513 = vld [vmem:[%s5 + $0xd8] sm:$0xff]
      %v514 = vld [vmem:[%s5 + $0xe0] sm:$0xff]
      %v515 = vld [vmem:[%s5 + $0xe8] sm:$0xff]
      %v516 = vld [vmem:[%s5 + $0xf0] sm:$0xff]
      %v517 = vld [vmem:[%s5 + $0xf8] sm:$0xff]
      %v518 = vld [vmem:[%s5 + $0x100] sm:$0xff]
      %v519 = vld [vmem:[%s5 + $0x108] sm:$0xff]
      %v520 = vld [vmem:[%s5 + $0x110] sm:$0xff]
      %v521 = vld [vmem:[%s5 + $0x118] sm:$0xff]
      %v522 = vld [vmem:[%s5 + $0x120] sm:$0xff]
      %v523 = vld [vmem:[%s5 + $0x128] sm:$0xff]
      %v524 = vld [vmem:[%s5 + $0x130] sm:$0xff]
      %v525 = vld [vmem:[%s5 + $0x138] sm:$0xff]
      %v526 = vld [vmem:[%s5 + $0x140] sm:$0xff]
      %v527 = vld [vmem:[%s5 + $0x148] sm:$0xff]
      %v528 = vld [vmem:[%s5 + $0x150] sm:$0xff]
      %v529 = vld [vmem:[%s5 + $0x158] sm:$0xff]
      %v530 = vld [vmem:[%s5 + $0x160] sm:$0xff]
      %v531 = vld [vmem:[%s5 + $0x168] sm:$0xff]
      %v532 = vld [vmem:[%s5 + $0x170] sm:$0xff]
      %v533 = vld [vmem:[%s5 + $0x178] sm:$0xff]
      %v534 = vld [vmem:[%s5 + $0x180] sm:$0xff]
      %v535 = vld [vmem:[%s5 + $0x188] sm:$0xff]
      %v536 = vld [vmem:[%s5 + $0x190] sm:$0xff]
      %v537 = vld [vmem:[%s5 + $0x198] sm:$0xff]
      %v538 = vld [vmem:[%s5 + $0x1a0] sm:$0xff]
      %v539 = vld [vmem:[%s5 + $0x1a8] sm:$0xff]
      %v540 = vld [vmem:[%s5 + $0x1b0] sm:$0xff]
      %v541 = vld [vmem:[%s5 + $0x1b8] sm:$0xff]
      %v542 = vld [vmem:[%s5 + $0x1c0] sm:$0xff]
      %v543 = vld [vmem:[%s5 + $0x1c8] sm:$0xff]
      %v544 = vld [vmem:[%s5 + $0x1d0] sm:$0xff]
      %v545 = vld [vmem:[%s5 + $0x1d8] sm:$0xff]
      %v546 = vld [vmem:[%s5 + $0x1e0] sm:$0xff]
      %v547 = vld [vmem:[%s5 + $0x1e8] sm:$0xff]
      %v548 = vld [vmem:[%s5 + $0x1f0] sm:$0xff]
      %v549 = vld [vmem:[%s5 + $0x1f8] sm:$0xff]
      %v550 = vld [vmem:[%s6] sm:$0x3]
      %v552 = vlaneseq
      %v553 = vshrl.u32 %v552, 7
      %v554 = vsub.s32 0, %v553
      %v555 = vrot.slane %v550, %v554
      %v556 = vlaneseq
      %v557 = vshrl.u32 %v556, 7
      %v558 = vsub.s32 1, %v557
      %v559 = vrot.slane %v550, %v558
      %562 = vmatprep.subr.mxu0 %v487
      %563 = vmatpush1.msra.mxu0 %v486
      %564 = vmatprep.subr.mxu0 %v489
      %565 = vmatpush1.msra.mxu0 %v488
      %566 = vmatprep.subr.mxu0 %v491
      %567 = vmatpush1.msra.mxu0 %v490
      %568 = vmatprep.subr.mxu0 %v493
      %569 = vmatpush1.msra.mxu0 %v492
      %570 = vmatprep.subr.mxu0 %v495
      %571 = vmatpush1.msra.mxu0 %v494
      %572 = vmatprep.subr.mxu0 %v497
      %573 = vmatpush1.msra.mxu0 %v496
      %574 = vmatprep.subr.mxu0 %v499
      %575 = vmatpush1.msra.mxu0 %v498
      %576 = vmatprep.subr.mxu0 %v501
      %577 = vmatpush1.msra.mxu0 %v500
      %578 = vmatprep.subr.mxu0 %v503
      %579 = vmatpush1.msra.mxu0 %v502
      %580 = vmatprep.subr.mxu0 %v505
      %581 = vmatpush1.msra.mxu0 %v504
      %582 = vmatprep.subr.mxu0 %v507
      %583 = vmatpush1.msra.mxu0 %v506
      %584 = vmatprep.subr.mxu0 %v509
      %585 = vmatpush1.msra.mxu0 %v508
      %586 = vmatprep.subr.mxu0 %v511
      %587 = vmatpush1.msra.mxu0 %v510
      %588 = vmatprep.subr.mxu0 %v513
      %589 = vmatpush1.msra.mxu0 %v512
      %590 = vmatprep.subr.mxu0 %v515
      %591 = vmatpush1.msra.mxu0 %v514
      %592 = vmatprep.subr.mxu0 %v517
      %593 = vmatpush1.msra.mxu0 %v516
      %594 = vmatprep.subr.mxu0 %v519
      %595 = vmatpush1.msra.mxu0 %v518
      %596 = vmatprep.subr.mxu0 %v521
      %597 = vmatpush1.msra.mxu0 %v520
      %598 = vmatprep.subr.mxu0 %v523
      %599 = vmatpush1.msra.mxu0 %v522
      %600 = vmatprep.subr.mxu0 %v525
      %601 = vmatpush1.msra.mxu0 %v524
      %602 = vmatprep.subr.mxu0 %v527
      %603 = vmatpush1.msra.mxu0 %v526
      %604 = vmatprep.subr.mxu0 %v529
      %605 = vmatpush1.msra.mxu0 %v528
      %606 = vmatprep.subr.mxu0 %v531
      %607 = vmatpush1.msra.mxu0 %v530
      %608 = vmatprep.subr.mxu0 %v533
      %609 = vmatpush1.msra.mxu0 %v532
      %610 = vmatprep.subr.mxu0 %v535
      %611 = vmatpush1.msra.mxu0 %v534
      %612 = vmatprep.subr.mxu0 %v537
      %613 = vmatpush1.msra.mxu0 %v536
      %614 = vmatprep.subr.mxu0 %v539
      %615 = vmatpush1.msra.mxu0 %v538
      %616 = vmatprep.subr.mxu0 %v541
      %617 = vmatpush1.msra.mxu0 %v540
      %618 = vmatprep.subr.mxu0 %v543
      %619 = vmatpush1.msra.mxu0 %v542
      %620 = vmatprep.subr.mxu0 %v545
      %621 = vmatpush1.msra.mxu0 %v544
      %622 = vmatprep.subr.mxu0 %v547
      %623 = vmatpush1.msra.mxu0 %v546
      %624 = vmatprep.subr.mxu0 %v549
      %625 = vmatpush1.msra.mxu0 %v548
      %626 = vmatprep.mubr.f32.mxu0 %v485
      %627 = vmatmul.mubr.f32.gmra.mrb[0].mxu0 %v484
      %v628 = vpop.f32.mrb[0].mxu0
      %v629 = vadd.f32 %v555, %v628
      %v630 = vpop.f32.mrb[0].mxu0
      %v631 = vadd.f32 %v559, %v630
      %632 = vdwg.mxu0
      %v635 = vcombine.low %v629, %v631
      %v637 = vunpack.c.l.s4 1983009808
      %v638 = vunpack.c.0.s8 %v637
      %v639 = vlaneseq
      %v640 = vshrl.u32 %v639, 7
      %v641 = vsub.s32 %v638, %v640
      %v642 = vrot.slane %v635, %v641
      %644 = vst [vmem:[#allocation2] sm:$0xf] %v642
      %645 = vst [vmem:[%s275] sm:$0xf] %v642
      %p646 = scmp.lt.s32.totalorder %s18, 2
      %s647 = scalar_select %p646, %s18, 2
      %s648 = smul.addr %s647, 2
      %s649 = smul.addr %s648, 2
      %s650 = scalar_lea.vmem %s7, %s649
      // Predicated region
      $region53: #{jepa_forward.9} parent=47 // pred_check
        %p651 = pneg %p188
      $region54: #{jepa_forward.9} parent=47 // pred_check_branch
        %653 = sbr.rel (%p651) target = $region56
      $region55: #{jepa_forward.9} parent=47 // pred_region
        _
      $region56: #{jepa_forward.9} parent=47 // pred_fallthru
        _
    $region48: #{jepa_forward.9} parent=5 // pred_fallthru
      _
    %p654 = scmp.le.s32.totalorder 2, %s13
    // Predicated region
    $region57: #{jepa_forward.9} parent=5 // pred_check
      %p655 = pneg %p654
    $region58: #{jepa_forward.9} parent=5 // pred_check_branch
      %657 = sbr.rel (%p655) target = $region60
    $region59: #{jepa_forward.9} parent=5 // pred_region
      %s658 = ssub.s32 %s13, 2
      // Predicated region
      $region61: #{jepa_forward.9} parent=59 // pred_check
        %p659 = pneg %p194
      $region62: #{jepa_forward.9} parent=59 // pred_check_branch
        %661 = sbr.rel (%p659) target = $region64
      $region63: #{jepa_forward.9} parent=59 // pred_region
        %p662 = scmp.lt.s32.totalorder %s19, 2
        %s663 = scalar_select %p662, %s19, 2
        %s664 = smul.addr %s663, 2
        %s665 = smul.addr %s664, 2
        %s666 = scalar_lea.vmem %s7, %s665
      $region64: #{jepa_forward.9} parent=59 // pred_fallthru
        _
    $region60: #{jepa_forward.9} parent=5 // pred_fallthru
      _
  $region6: #{jepa_forward.9} parent=0 // loop_footer
    %s17 = sadd.s32 1, %s13
  $region7: #{jepa_forward.9} parent=0 // loop_footer_branch
    %12 = sbr.rel target = $region3
  $region8: #{jepa_forward.9} parent=0 // loop_exit
    _

// kernel: jepa_forward.8
$region0: #{jepa_forward.8}
  #allocation0 [shape = 'u32[]', space=smem, size = 0x4, offset = 0x4, fixed_abs, tag = 'smem constant byte address 0x4 - core index']
  #allocation1 [shape = 'u32[144,128]{1,0:T(1,128)}', space=vmem, size = 0x12000, scoped, tag = 'internal scratch']
  %s0 = inlined_call_operand.vmem [shape: f32[8,1152], index: 0, kind: input, shape index: {}]
  %s1 = inlined_call_operand.vmem [shape: f32[1152,256], index: 1, kind: input, shape index: {}]
  %s2 = inlined_call_operand.vmem [shape: f32[1,256], index: 2, kind: input, shape index: {}]
  %s3 = inlined_call_operand.vmem [shape: f32[1,256], index: 3, kind: input, shape index: {}]
  %s4 = inlined_call_operand.vmem [shape: f32[2,8], index: 4, kind: input, shape index: {}]
  %s5 = inlined_call_operand.vmem [shape: f32[256,256], index: 5, kind: input, shape index: {}]
  %s6 = inlined_call_operand.vmem [shape: f32[1,256], index: 6, kind: input, shape index: {}]
  %s7 = inlined_call_operand.vmem [shape: f32[1,256], index: 7, kind: input, shape index: {}]
  %s8 = inlined_call_operand.vmem [shape: f32[256,256], index: 8, kind: input, shape index: {}]
  %s9 = inlined_call_operand.vmem [shape: f32[1,256], index: 9, kind: input, shape index: {}]
  %s10 = inlined_call_operand.vmem [shape: f32[2,256], index: 10, kind: output, shape index: {}]
  %s11 = sld [smem:[#allocation0]]
  $region50: #{jepa_forward.8} parent=0
    _
  %s13 = ssub.s32 1, %s11
  %s14 = scalar_select 0, %s13, %s11
  // Predicated region
  $region2: #{jepa_forward.8} parent=0 // pred_check
    _
  $region3: #{jepa_forward.8} parent=0 // pred_check_branch
    %16 = sbr.rel (0) target = $region5
  $region4: #{jepa_forward.8} parent=0 // pred_region
    _
  $region5: #{jepa_forward.8} parent=0 // pred_fallthru
    _
  // Predicated region
  $region6: #{jepa_forward.8} parent=0 // pred_check
    _
  $region7: #{jepa_forward.8} parent=0 // pred_check_branch
    %18 = sbr.rel (0) target = $region9
  $region8: #{jepa_forward.8} parent=0 // pred_region
    _
  $region9: #{jepa_forward.8} parent=0 // pred_fallthru
    _
  // Predicated region
  $region10: #{jepa_forward.8} parent=0 // pred_check
    _
  $region11: #{jepa_forward.8} parent=0 // pred_check_branch
    %20 = sbr.rel (0) target = $region13
  $region12: #{jepa_forward.8} parent=0 // pred_region
    _
  $region13: #{jepa_forward.8} parent=0 // pred_fallthru
    _
  // Predicated region
  $region14: #{jepa_forward.8} parent=0 // pred_check
    _
  $region15: #{jepa_forward.8} parent=0 // pred_check_branch
    %22 = sbr.rel (0) target = $region17
  $region16: #{jepa_forward.8} parent=0 // pred_region
    _
  $region17: #{jepa_forward.8} parent=0 // pred_fallthru
    _
  // Predicated region
  $region18: #{jepa_forward.8} parent=0 // pred_check
    _
  $region19: #{jepa_forward.8} parent=0 // pred_check_branch
    %24 = sbr.rel (0) target = $region21
  $region20: #{jepa_forward.8} parent=0 // pred_region
    _
  $region21: #{jepa_forward.8} parent=0 // pred_fallthru
    _
  // Predicated region
  $region22: #{jepa_forward.8} parent=0 // pred_check
    _
  $region23: #{jepa_forward.8} parent=0 // pred_check_branch
    %26 = sbr.rel (0) target = $region25
  $region24: #{jepa_forward.8} parent=0 // pred_region
    _
  $region25: #{jepa_forward.8} parent=0 // pred_fallthru
    _
  // Predicated region
  $region26: #{jepa_forward.8} parent=0 // pred_check
    _
  $region27: #{jepa_forward.8} parent=0 // pred_check_branch
    %28 = sbr.rel (0) target = $region29
  $region28: #{jepa_forward.8} parent=0 // pred_region
    _
  $region29: #{jepa_forward.8} parent=0 // pred_fallthru
    _
  // Predicated region
  $region30: #{jepa_forward.8} parent=0 // pred_check
    _
  $region31: #{jepa_forward.8} parent=0 // pred_check_branch
    %30 = sbr.rel (0) target = $region33
  $region32: #{jepa_forward.8} parent=0 // pred_region
    _
  $region33: #{jepa_forward.8} parent=0 // pred_fallthru
    _
  // Predicated region
  $region34: #{jepa_forward.8} parent=0 // pred_check
    _
  $region35: #{jepa_forward.8} parent=0 // pred_check_branch
    %32 = sbr.rel (0) target = $region37
  $region36: #{jepa_forward.8} parent=0 // pred_region
    _
  $region37: #{jepa_forward.8} parent=0 // pred_fallthru
    _
  // Predicated region
  $region38: #{jepa_forward.8} parent=0 // pred_check
    _
  $region39: #{jepa_forward.8} parent=0 // pred_check_branch
    %34 = sbr.rel (0) target = $region41
  $region40: #{jepa_forward.8} parent=0 // pred_region
    _
  $region41: #{jepa_forward.8} parent=0 // pred_fallthru
    _
  %v35 = vld [vmem:[%s0] sm:$0xff]
  %v36 = vld [vmem:[%s0 + $0x8] sm:$0xff]
  %v37 = vld [vmem:[%s0 + $0x10] sm:$0xff]
  %v38 = vld [vmem:[%s0 + $0x18] sm:$0xff]
  %v39 = vld [vmem:[%s0 + $0x20] sm:$0xff]
  %v40 = vld [vmem:[%s0 + $0x28] sm:$0xff]
  %v41 = vld [vmem:[%s0 + $0x30] sm:$0xff]
  %v42 = vld [vmem:[%s0 + $0x38] sm:$0xff]
  %v43 = vld [vmem:[%s0 + $0x40] sm:$0xff]
  %v44 = vld [vmem:[%s1] sm:$0xff]
  %v45 = vld [vmem:[%s1 + $0x8] sm:$0xff]
  %v46 = vld [vmem:[%s1 + $0x10] sm:$0xff]
  %v47 = vld [vmem:[%s1 + $0x18] sm:$0xff]
  %v48 = vld [vmem:[%s1 + $0x20] sm:$0xff]
  %v49 = vld [vmem:[%s1 + $0x28] sm:$0xff]
  %v50 = vld [vmem:[%s1 + $0x30] sm:$0xff]
  %v51 = vld [vmem:[%s1 + $0x38] sm:$0xff]
  %v52 = vld [vmem:[%s1 + $0x40] sm:$0xff]
  %v53 = vld [vmem:[%s1 + $0x48] sm:$0xff]
  %v54 = vld [vmem:[%s1 + $0x50] sm:$0xff]
  %v55 = vld [vmem:[%s1 + $0x58] sm:$0xff]
  %v56 = vld [vmem:[%s1 + $0x60] sm:$0xff]
  %v57 = vld [vmem:[%s1 + $0x68] sm:$0xff]
  %v58 = vld [vmem:[%s1 + $0x70] sm:$0xff]
  %v59 = vld [vmem:[%s1 + $0x78] sm:$0xff]
  %v60 = vld [vmem:[%s1 + $0x80] sm:$0xff]
  %v61 = vld [vmem:[%s1 + $0x88] sm:$0xff]
  %v62 = vld [vmem:[%s1 + $0x90] sm:$0xff]
  %v63 = vld [vmem:[%s1 + $0x98] sm:$0xff]
  %v64 = vld [vmem:[%s1 + $0xa0] sm:$0xff]
  %v65 = vld [vmem:[%s1 + $0xa8] sm:$0xff]
  %v66 = vld [vmem:[%s1 + $0xb0] sm:$0xff]
  %v67 = vld [vmem:[%s1 + $0xb8] sm:$0xff]
  %v68 = vld [vmem:[%s1 + $0xc0] sm:$0xff]
  %v69 = vld [vmem:[%s1 + $0xc8] sm:$0xff]
  %v70 = vld [vmem:[%s1 + $0xd0] sm:$0xff]
  %v71 = vld [vmem:[%s1 + $0xd8] sm:$0xff]
  %v72 = vld [vmem:[%s1 + $0xe0] sm:$0xff]
  %v73 = vld [vmem:[%s1 + $0xe8] sm:$0xff]
  %v74 = vld [vmem:[%s1 + $0xf0] sm:$0xff]
  %v75 = vld [vmem:[%s1 + $0xf8] sm:$0xff]
  %v76 = vld [vmem:[%s1 + $0x100] sm:$0xff]
  %v77 = vld [vmem:[%s1 + $0x108] sm:$0xff]
  %v78 = vld [vmem:[%s1 + $0x110] sm:$0xff]
  %v79 = vld [vmem:[%s1 + $0x118] sm:$0xff]
  %v80 = vld [vmem:[%s1 + $0x120] sm:$0xff]
  %v81 = vld [vmem:[%s1 + $0x128] sm:$0xff]
  %v82 = vld [vmem:[%s1 + $0x130] sm:$0xff]
  %v83 = vld [vmem:[%s1 + $0x138] sm:$0xff]
  %v84 = vld [vmem:[%s1 + $0x140] sm:$0xff]
  %v85 = vld [vmem:[%s1 + $0x148] sm:$0xff]
  %v86 = vld [vmem:[%s1 + $0x150] sm:$0xff]
  %v87 = vld [vmem:[%s1 + $0x158] sm:$0xff]
  %v88 = vld [vmem:[%s1 + $0x160] sm:$0xff]
  %v89 = vld [vmem:[%s1 + $0x168] sm:$0xff]
  %v90 = vld [vmem:[%s1 + $0x170] sm:$0xff]
  %v91 = vld [vmem:[%s1 + $0x178] sm:$0xff]
  %v92 = vld [vmem:[%s1 + $0x180] sm:$0xff]
  %v93 = vld [vmem:[%s1 + $0x188] sm:$0xff]
  %v94 = vld [vmem:[%s1 + $0x190] sm:$0xff]
  %v95 = vld [vmem:[%s1 + $0x198] sm:$0xff]
  %v96 = vld [vmem:[%s1 + $0x1a0] sm:$0xff]
  %v97 = vld [vmem:[%s1 + $0x1a8] sm:$0xff]
  %v98 = vld [vmem:[%s1 + $0x1b0] sm:$0xff]
  %v99 = vld [vmem:[%s1 + $0x1b8] sm:$0xff]
  %v100 = vld [vmem:[%s1 + $0x1c0] sm:$0xff]
  %v101 = vld [vmem:[%s1 + $0x1c8] sm:$0xff]
  %v102 = vld [vmem:[%s1 + $0x1d0] sm:$0xff]
  %v103 = vld [vmem:[%s1 + $0x1d8] sm:$0xff]
  %v104 = vld [vmem:[%s1 + $0x1e0] sm:$0xff]
  %v105 = vld [vmem:[%s1 + $0x1e8] sm:$0xff]
  %v106 = vld [vmem:[%s1 + $0x1f0] sm:$0xff]
  %v107 = vld [vmem:[%s1 + $0x1f8] sm:$0xff]
  %v108 = vld [vmem:[%s1 + $0x200] sm:$0xff]
  %v109 = vld [vmem:[%s1 + $0x208] sm:$0xff]
  %v110 = vld [vmem:[%s1 + $0x210] sm:$0xff]
  %v111 = vld [vmem:[%s1 + $0x218] sm:$0xff]
  %v112 = vld [vmem:[%s1 + $0x220] sm:$0xff]
  %v113 = vld [vmem:[%s1 + $0x228] sm:$0xff]
  %v114 = vld [vmem:[%s1 + $0x230] sm:$0xff]
  %v115 = vld [vmem:[%s1 + $0x238] sm:$0xff]
  %v116 = vld [vmem:[%s1 + $0x240] sm:$0xff]
  %v117 = vld [vmem:[%s1 + $0x248] sm:$0xff]
  %v118 = vld [vmem:[%s1 + $0x250] sm:$0xff]
  %v119 = vld [vmem:[%s1 + $0x258] sm:$0xff]
  %v120 = vld [vmem:[%s1 + $0x260] sm:$0xff]
  %v121 = vld [vmem:[%s1 + $0x268] sm:$0xff]
  %v122 = vld [vmem:[%s1 + $0x270] sm:$0xff]
  %v123 = vld [vmem:[%s1 + $0x278] sm:$0xff]
  %v124 = vld [vmem:[%s1 + $0x280] sm:$0xff]
  %v125 = vld [vmem:[%s1 + $0x288] sm:$0xff]
  %v126 = vld [vmem:[%s1 + $0x290] sm:$0xff]
  %v127 = vld [vmem:[%s1 + $0x298] sm:$0xff]
  %v128 = vld [vmem:[%s1 + $0x2a0] sm:$0xff]
  %v129 = vld [vmem:[%s1 + $0x2a8] sm:$0xff]
  %v130 = vld [vmem:[%s1 + $0x2b0] sm:$0xff]
  %v131 = vld [vmem:[%s1 + $0x2b8] sm:$0xff]
  %v132 = vld [vmem:[%s1 + $0x2c0] sm:$0xff]
  %v133 = vld [vmem:[%s1 + $0x2c8] sm:$0xff]
  %v134 = vld [vmem:[%s1 + $0x2d0] sm:$0xff]
  %v135 = vld [vmem:[%s1 + $0x2d8] sm:$0xff]
  %v136 = vld [vmem:[%s1 + $0x2e0] sm:$0xff]
  %v137 = vld [vmem:[%s1 + $0x2e8] sm:$0xff]
  %v138 = vld [vmem:[%s1 + $0x2f0] sm:$0xff]
  %v139 = vld [vmem:[%s1 + $0x2f8] sm:$0xff]
  %v140 = vld [vmem:[%s1 + $0x300] sm:$0xff]
  %v141 = vld [vmem:[%s1 + $0x308] sm:$0xff]
  %v142 = vld [vmem:[%s1 + $0x310] sm:$0xff]
  %v143 = vld [vmem:[%s1 + $0x318] sm:$0xff]
  %v144 = vld [vmem:[%s1 + $0x320] sm:$0xff]
  %v145 = vld [vmem:[%s1 + $0x328] sm:$0xff]
  %v146 = vld [vmem:[%s1 + $0x330] sm:$0xff]
  %v147 = vld [vmem:[%s1 + $0x338] sm:$0xff]
  %v148 = vld [vmem:[%s1 + $0x340] sm:$0xff]
  %v149 = vld [vmem:[%s1 + $0x348] sm:$0xff]
  %v150 = vld [vmem:[%s1 + $0x350] sm:$0xff]
  %v151 = vld [vmem:[%s1 + $0x358] sm:$0xff]
  %v152 = vld [vmem:[%s1 + $0x360] sm:$0xff]
  %v153 = vld [vmem:[%s1 + $0x368] sm:$0xff]
  %v154 = vld [vmem:[%s1 + $0x370] sm:$0xff]
  %v155 = vld [vmem:[%s1 + $0x378] sm:$0xff]
  %v156 = vld [vmem:[%s1 + $0x380] sm:$0xff]
  %v157 = vld [vmem:[%s1 + $0x388] sm:$0xff]
  %v158 = vld [vmem:[%s1 + $0x390] sm:$0xff]
  %v159 = vld [vmem:[%s1 + $0x398] sm:$0xff]
  %v160 = vld [vmem:[%s1 + $0x3a0] sm:$0xff]
  %v161 = vld [vmem:[%s1 + $0x3a8] sm:$0xff]
  %v162 = vld [vmem:[%s1 + $0x3b0] sm:$0xff]
  %v163 = vld [vmem:[%s1 + $0x3b8] sm:$0xff]
  %v164 = vld [vmem:[%s1 + $0x3c0] sm:$0xff]
  %v165 = vld [vmem:[%s1 + $0x3c8] sm:$0xff]
  %v166 = vld [vmem:[%s1 + $0x3d0] sm:$0xff]
  %v167 = vld [vmem:[%s1 + $0x3d8] sm:$0xff]
  %v168 = vld [vmem:[%s1 + $0x3e0] sm:$0xff]
  %v169 = vld [vmem:[%s1 + $0x3e8] sm:$0xff]
  %v170 = vld [vmem:[%s1 + $0x3f0] sm:$0xff]
  %v171 = vld [vmem:[%s1 + $0x3f8] sm:$0xff]
  %v172 = vld [vmem:[%s1 + $0x400] sm:$0xff]
  %v173 = vld [vmem:[%s1 + $0x408] sm:$0xff]
  %v174 = vld [vmem:[%s1 + $0x410] sm:$0xff]
  %v175 = vld [vmem:[%s1 + $0x418] sm:$0xff]
  %v176 = vld [vmem:[%s1 + $0x420] sm:$0xff]
  %v177 = vld [vmem:[%s1 + $0x428] sm:$0xff]
  %v178 = vld [vmem:[%s1 + $0x430] sm:$0xff]
  %v179 = vld [vmem:[%s1 + $0x438] sm:$0xff]
  %v180 = vld [vmem:[%s1 + $0x440] sm:$0xff]
  %v181 = vld [vmem:[%s1 + $0x448] sm:$0xff]
  %v182 = vld [vmem:[%s1 + $0x450] sm:$0xff]
  %v183 = vld [vmem:[%s1 + $0x458] sm:$0xff]
  %v184 = vld [vmem:[%s1 + $0x460] sm:$0xff]
  %v185 = vld [vmem:[%s1 + $0x468] sm:$0xff]
  %v186 = vld [vmem:[%s1 + $0x470] sm:$0xff]
  %v187 = vld [vmem:[%s1 + $0x478] sm:$0xff]
  %v188 = vld [vmem:[%s1 + $0x480] sm:$0xff]
  %v189 = vld [vmem:[%s1 + $0x488] sm:$0xff]
  %v190 = vld [vmem:[%s1 + $0x490] sm:$0xff]
  %v191 = vld [vmem:[%s1 + $0x498] sm:$0xff]
  %v192 = vld [vmem:[%s1 + $0x4a0] sm:$0xff]
  %v193 = vld [vmem:[%s1 + $0x4a8] sm:$0xff]
  %v194 = vld [vmem:[%s1 + $0x4b0] sm:$0xff]
  %v195 = vld [vmem:[%s1 + $0x4b8] sm:$0xff]
  %v196 = vld [vmem:[%s1 + $0x4c0] sm:$0xff]
  %v197 = vld [vmem:[%s1 + $0x4c8] sm:$0xff]
  %v198 = vld [vmem:[%s1 + $0x4d0] sm:$0xff]
  %v199 = vld [vmem:[%s1 + $0x4d8] sm:$0xff]
  %v200 = vld [vmem:[%s1 + $0x4e0] sm:$0xff]
  %v201 = vld [vmem:[%s1 + $0x4e8] sm:$0xff]
  %v202 = vld [vmem:[%s1 + $0x4f0] sm:$0xff]
  %v203 = vld [vmem:[%s1 + $0x4f8] sm:$0xff]
  %v204 = vld [vmem:[%s1 + $0x500] sm:$0xff]
  %v205 = vld [vmem:[%s1 + $0x508] sm:$0xff]
  %v206 = vld [vmem:[%s1 + $0x510] sm:$0xff]
  %v207 = vld [vmem:[%s1 + $0x518] sm:$0xff]
  %v208 = vld [vmem:[%s1 + $0x520] sm:$0xff]
  %v209 = vld [vmem:[%s1 + $0x528] sm:$0xff]
  %v210 = vld [vmem:[%s1 + $0x530] sm:$0xff]
  %v211 = vld [vmem:[%s1 + $0x538] sm:$0xff]
  %v212 = vld [vmem:[%s1 + $0x540] sm:$0xff]
  %v213 = vld [vmem:[%s1 + $0x548] sm:$0xff]
  %v214 = vld [vmem:[%s1 + $0x550] sm:$0xff]
  %v215 = vld [vmem:[%s1 + $0x558] sm:$0xff]
  %v216 = vld [vmem:[%s1 + $0x560] sm:$0xff]
  %v217 = vld [vmem:[%s1 + $0x568] sm:$0xff]
  %v218 = vld [vmem:[%s1 + $0x570] sm:$0xff]
  %v219 = vld [vmem:[%s1 + $0x578] sm:$0xff]
  %v220 = vld [vmem:[%s1 + $0x580] sm:$0xff]
  %v221 = vld [vmem:[%s1 + $0x588] sm:$0xff]
  %v222 = vld [vmem:[%s1 + $0x590] sm:$0xff]
  %v223 = vld [vmem:[%s1 + $0x598] sm:$0xff]
  %v224 = vld [vmem:[%s1 + $0x5a0] sm:$0xff]
  %v225 = vld [vmem:[%s1 + $0x5a8] sm:$0xff]
  %v226 = vld [vmem:[%s1 + $0x5b0] sm:$0xff]
  %v227 = vld [vmem:[%s1 + $0x5b8] sm:$0xff]
  %v228 = vld [vmem:[%s1 + $0x5c0] sm:$0xff]
  %v229 = vld [vmem:[%s1 + $0x5c8] sm:$0xff]
  %v230 = vld [vmem:[%s1 + $0x5d0] sm:$0xff]
  %v231 = vld [vmem:[%s1 + $0x5d8] sm:$0xff]
  %v232 = vld [vmem:[%s1 + $0x5e0] sm:$0xff]
  %v233 = vld [vmem:[%s1 + $0x5e8] sm:$0xff]
  %v234 = vld [vmem:[%s1 + $0x5f0] sm:$0xff]
  %v235 = vld [vmem:[%s1 + $0x5f8] sm:$0xff]
  %v236 = vld [vmem:[%s1 + $0x600] sm:$0xff]
  %v237 = vld [vmem:[%s1 + $0x608] sm:$0xff]
  %v238 = vld [vmem:[%s1 + $0x610] sm:$0xff]
  %v239 = vld [vmem:[%s1 + $0x618] sm:$0xff]
  %v240 = vld [vmem:[%s1 + $0x620] sm:$0xff]
  %v241 = vld [vmem:[%s1 + $0x628] sm:$0xff]
  %v242 = vld [vmem:[%s1 + $0x630] sm:$0xff]
  %v243 = vld [vmem:[%s1 + $0x638] sm:$0xff]
  %v244 = vld [vmem:[%s1 + $0x640] sm:$0xff]
  %v245 = vld [vmem:[%s1 + $0x648] sm:$0xff]
  %v246 = vld [vmem:[%s1 + $0x650] sm:$0xff]
  %v247 = vld [vmem:[%s1 + $0x658] sm:$0xff]
  %v248 = vld [vmem:[%s1 + $0x660] sm:$0xff]
  %v249 = vld [vmem:[%s1 + $0x668] sm:$0xff]
  %v250 = vld [vmem:[%s1 + $0x670] sm:$0xff]
  %v251 = vld [vmem:[%s1 + $0x678] sm:$0xff]
  %v252 = vld [vmem:[%s1 + $0x680] sm:$0xff]
  %v253 = vld [vmem:[%s1 + $0x688] sm:$0xff]
  %v254 = vld [vmem:[%s1 + $0x690] sm:$0xff]
  %v255 = vld [vmem:[%s1 + $0x698] sm:$0xff]
  %v256 = vld [vmem:[%s1 + $0x6a0] sm:$0xff]
  %v257 = vld [vmem:[%s1 + $0x6a8] sm:$0xff]
  %v258 = vld [vmem:[%s1 + $0x6b0] sm:$0xff]
  %v259 = vld [vmem:[%s1 + $0x6b8] sm:$0xff]
  %v260 = vld [vmem:[%s1 + $0x6c0] sm:$0xff]
  %v261 = vld [vmem:[%s1 + $0x6c8] sm:$0xff]
  %v262 = vld [vmem:[%s1 + $0x6d0] sm:$0xff]
  %v263 = vld [vmem:[%s1 + $0x6d8] sm:$0xff]
  %v264 = vld [vmem:[%s1 + $0x6e0] sm:$0xff]
  %v265 = vld [vmem:[%s1 + $0x6e8] sm:$0xff]
  %v266 = vld [vmem:[%s1 + $0x6f0] sm:$0xff]
  %v267 = vld [vmem:[%s1 + $0x6f8] sm:$0xff]
  %v268 = vld [vmem:[%s1 + $0x700] sm:$0xff]
  %v269 = vld [vmem:[%s1 + $0x708] sm:$0xff]
  %v270 = vld [vmem:[%s1 + $0x710] sm:$0xff]
  %v271 = vld [vmem:[%s1 + $0x718] sm:$0xff]
  %v272 = vld [vmem:[%s1 + $0x720] sm:$0xff]
  %v273 = vld [vmem:[%s1 + $0x728] sm:$0xff]
  %v274 = vld [vmem:[%s1 + $0x730] sm:$0xff]
  %v275 = vld [vmem:[%s1 + $0x738] sm:$0xff]
  %v276 = vld [vmem:[%s1 + $0x740] sm:$0xff]
  %v277 = vld [vmem:[%s1 + $0x748] sm:$0xff]
  %v278 = vld [vmem:[%s1 + $0x750] sm:$0xff]
  %v279 = vld [vmem:[%s1 + $0x758] sm:$0xff]
  %v280 = vld [vmem:[%s1 + $0x760] sm:$0xff]
  %v281 = vld [vmem:[%s1 + $0x768] sm:$0xff]
  %v282 = vld [vmem:[%s1 + $0x770] sm:$0xff]
  %v283 = vld [vmem:[%s1 + $0x778] sm:$0xff]
  %v284 = vld [vmem:[%s1 + $0x780] sm:$0xff]
  %v285 = vld [vmem:[%s1 + $0x788] sm:$0xff]
  %v286 = vld [vmem:[%s1 + $0x790] sm:$0xff]
  %v287 = vld [vmem:[%s1 + $0x798] sm:$0xff]
  %v288 = vld [vmem:[%s1 + $0x7a0] sm:$0xff]
  %v289 = vld [vmem:[%s1 + $0x7a8] sm:$0xff]
  %v290 = vld [vmem:[%s1 + $0x7b0] sm:$0xff]
  %v291 = vld [vmem:[%s1 + $0x7b8] sm:$0xff]
  %v292 = vld [vmem:[%s1 + $0x7c0] sm:$0xff]
  %v293 = vld [vmem:[%s1 + $0x7c8] sm:$0xff]
  %v294 = vld [vmem:[%s1 + $0x7d0] sm:$0xff]
  %v295 = vld [vmem:[%s1 + $0x7d8] sm:$0xff]
  %v296 = vld [vmem:[%s1 + $0x7e0] sm:$0xff]
  %v297 = vld [vmem:[%s1 + $0x7e8] sm:$0xff]
  %v298 = vld [vmem:[%s1 + $0x7f0] sm:$0xff]
  %v299 = vld [vmem:[%s1 + $0x7f8] sm:$0xff]
  %v300 = vld [vmem:[%s1 + $0x800] sm:$0xff]
  %v301 = vld [vmem:[%s1 + $0x808] sm:$0xff]
  %v302 = vld [vmem:[%s1 + $0x810] sm:$0xff]
  %v303 = vld [vmem:[%s1 + $0x818] sm:$0xff]
  %v304 = vld [vmem:[%s1 + $0x820] sm:$0xff]
  %v305 = vld [vmem:[%s1 + $0x828] sm:$0xff]
  %v306 = vld [vmem:[%s1 + $0x830] sm:$0xff]
  %v307 = vld [vmem:[%s1 + $0x838] sm:$0xff]
  %v308 = vld [vmem:[%s1 + $0x840] sm:$0xff]
  %v309 = vld [vmem:[%s1 + $0x848] sm:$0xff]
  %v310 = vld [vmem:[%s1 + $0x850] sm:$0xff]
  %v311 = vld [vmem:[%s1 + $0x858] sm:$0xff]
  %v312 = vld [vmem:[%s1 + $0x860] sm:$0xff]
  %v313 = vld [vmem:[%s1 + $0x868] sm:$0xff]
  %v314 = vld [vmem:[%s1 + $0x870] sm:$0xff]
  %v315 = vld [vmem:[%s1 + $0x878] sm:$0xff]
  %v316 = vld [vmem:[%s1 + $0x880] sm:$0xff]
  %v317 = vld [vmem:[%s1 + $0x888] sm:$0xff]
  %v318 = vld [vmem:[%s1 + $0x890] sm:$0xff]
  %v319 = vld [vmem:[%s1 + $0x898] sm:$0xff]
  %v320 = vld [vmem:[%s1 + $0x8a0] sm:$0xff]
  %v321 = vld [vmem:[%s1 + $0x8a8] sm:$0xff]
  %v322 = vld [vmem:[%s1 + $0x8b0] sm:$0xff]
  %v323 = vld [vmem:[%s1 + $0x8b8] sm:$0xff]
  %v324 = vld [vmem:[%s1 + $0x8c0] sm:$0xff]
  %v325 = vld [vmem:[%s1 + $0x8c8] sm:$0xff]
  %v326 = vld [vmem:[%s1 + $0x8d0] sm:$0xff]
  %v327 = vld [vmem:[%s1 + $0x8d8] sm:$0xff]
  %v328 = vld [vmem:[%s1 + $0x8e0] sm:$0xff]
  %v329 = vld [vmem:[%s1 + $0x8e8] sm:$0xff]
  %v330 = vld [vmem:[%s1 + $0x8f0] sm:$0xff]
  %v331 = vld [vmem:[%s1 + $0x8f8] sm:$0xff]
  %332 = vmatprep.subr.mxu0 %v45
  %333 = vmatpush1.msra.mxu0 %v44
  %334 = vmatprep.subr.mxu0 %v47
  %335 = vmatpush1.msra.mxu0 %v46
  %336 = vmatprep.subr.mxu0 %v49
  %337 = vmatpush1.msra.mxu0 %v48
  %338 = vmatprep.subr.mxu0 %v51
  %339 = vmatpush1.msra.mxu0 %v50
  %340 = vmatprep.subr.mxu0 %v53
  %341 = vmatpush1.msra.mxu0 %v52
  %342 = vmatprep.subr.mxu0 %v55
  %343 = vmatpush1.msra.mxu0 %v54
  %344 = vmatprep.subr.mxu0 %v57
  %345 = vmatpush1.msra.mxu0 %v56
  %346 = vmatprep.subr.mxu0 %v59
  %347 = vmatpush1.msra.mxu0 %v58
  %348 = vmatprep.subr.mxu0 %v61
  %349 = vmatpush1.msra.mxu0 %v60
  %350 = vmatprep.subr.mxu0 %v63
  %351 = vmatpush1.msra.mxu0 %v62
  %352 = vmatprep.subr.mxu0 %v65
  %353 = vmatpush1.msra.mxu0 %v64
  %354 = vmatprep.subr.mxu0 %v67
  %355 = vmatpush1.msra.mxu0 %v66
  %356 = vmatprep.subr.mxu0 %v69
  %357 = vmatpush1.msra.mxu0 %v68
  %358 = vmatprep.subr.mxu0 %v71
  %359 = vmatpush1.msra.mxu0 %v70
  %360 = vmatprep.subr.mxu0 %v73
  %361 = vmatpush1.msra.mxu0 %v72
  %362 = vmatprep.subr.mxu0 %v75
  %363 = vmatpush1.msra.mxu0 %v74
  %364 = vmatprep.subr.mxu0 %v77
  %365 = vmatpush1.msra.mxu0 %v76
  %366 = vmatprep.subr.mxu0 %v79
  %367 = vmatpush1.msra.mxu0 %v78
  %368 = vmatprep.subr.mxu0 %v81
  %369 = vmatpush1.msra.mxu0 %v80
  %370 = vmatprep.subr.mxu0 %v83
  %371 = vmatpush1.msra.mxu0 %v82
  %372 = vmatprep.subr.mxu0 %v85
  %373 = vmatpush1.msra.mxu0 %v84
  %374 = vmatprep.subr.mxu0 %v87
  %375 = vmatpush1.msra.mxu0 %v86
  %376 = vmatprep.subr.mxu0 %v89
  %377 = vmatpush1.msra.mxu0 %v88
  %378 = vmatprep.subr.mxu0 %v91
  %379 = vmatpush1.msra.mxu0 %v90
  %380 = vmatprep.subr.mxu0 %v93
  %381 = vmatpush1.msra.mxu0 %v92
  %382 = vmatprep.subr.mxu0 %v95
  %383 = vmatpush1.msra.mxu0 %v94
  %384 = vmatprep.subr.mxu0 %v97
  %385 = vmatpush1.msra.mxu0 %v96
  %386 = vmatprep.subr.mxu0 %v99
  %387 = vmatpush1.msra.mxu0 %v98
  %388 = vmatprep.subr.mxu0 %v101
  %389 = vmatpush1.msra.mxu0 %v100
  %390 = vmatprep.subr.mxu0 %v103
  %391 = vmatpush1.msra.mxu0 %v102
  %392 = vmatprep.subr.mxu0 %v105
  %393 = vmatpush1.msra.mxu0 %v104
  %394 = vmatprep.subr.mxu0 %v107
  %395 = vmatpush1.msra.mxu0 %v106
  %396 = vmatprep.mubr.f32.mxu0 %v36
  %397 = vmatmul.mubr.f32.gmra.mrb[0].mxu0 %v35
  %v398 = vpop.f32.mrb[0].mxu0
  %v399 = vadd.f32 0.0, %v398
  %v400 = vpop.f32.mrb[0].mxu0
  %v401 = vadd.f32 0.0, %v400
  %402 = vdwg.mxu0
  %403 = vmatprep.subr.mxu0 %v109
  %404 = vmatpush1.msra.mxu0 %v108
  %405 = vmatprep.subr.mxu0 %v111
  %406 = vmatpush1.msra.mxu0 %v110
  %407 = vmatprep.subr.mxu0 %v113
  %408 = vmatpush1.msra.mxu0 %v112
  %409 = vmatprep.subr.mxu0 %v115
  %410 = vmatpush1.msra.mxu0 %v114
  %411 = vmatprep.subr.mxu0 %v117
  %412 = vmatpush1.msra.mxu0 %v116
  %413 = vmatprep.subr.mxu0 %v119
  %414 = vmatpush1.msra.mxu0 %v118
  %415 = vmatprep.subr.mxu0 %v121
  %416 = vmatpush1.msra.mxu0 %v120
  %417 = vmatprep.subr.mxu0 %v123
  %418 = vmatpush1.msra.mxu0 %v122
  %419 = vmatprep.subr.mxu0 %v125
  %420 = vmatpush1.msra.mxu0 %v124
  %421 = vmatprep.subr.mxu0 %v127
  %422 = vmatpush1.msra.mxu0 %v126
  %423 = vmatprep.subr.mxu0 %v129
  %424 = vmatpush1.msra.mxu0 %v128
  %425 = vmatprep.subr.mxu0 %v131
  %426 = vmatpush1.msra.mxu0 %v130
  %427 = vmatprep.subr.mxu0 %v133
  %428 = vmatpush1.msra.mxu0 %v132
  %429 = vmatprep.subr.mxu0 %v135
  %430 = vmatpush1.msra.mxu0 %v134
  %431 = vmatprep.subr.mxu0 %v137
  %432 = vmatpush1.msra.mxu0 %v136
  %433 = vmatprep.subr.mxu0 %v139
  %434 = vmatpush1.msra.mxu0 %v138
  %435 = vmatprep.subr.mxu0 %v141
  %436 = vmatpush1.msra.mxu0 %v140
  %437 = vmatprep.subr.mxu0 %v143
  %438 = vmatpush1.msra.mxu0 %v142
  %439 = vmatprep.subr.mxu0 %v145
  %440 = vmatpush1.msra.mxu0 %v144
  %441 = vmatprep.subr.mxu0 %v147
  %442 = vmatpush1.msra.mxu0 %v146
  %443 = vmatprep.subr.mxu0 %v149
  %444 = vmatpush1.msra.mxu0 %v148
  %445 = vmatprep.subr.mxu0 %v151
  %446 = vmatpush1.msra.mxu0 %v150
  %447 = vmatprep.subr.mxu0 %v153
  %448 = vmatpush1.msra.mxu0 %v152
  %449 = vmatprep.subr.mxu0 %v155
  %450 = vmatpush1.msra.mxu0 %v154
  %451 = vmatprep.subr.mxu0 %v157
  %452 = vmatpush1.msra.mxu0 %v156
  %453 = vmatprep.subr.mxu0 %v159
  %454 = vmatpush1.msra.mxu0 %v158
  %455 = vmatprep.subr.mxu0 %v161
  %456 = vmatpush1.msra.mxu0 %v160
  %457 = vmatprep.subr.mxu0 %v163
  %458 = vmatpush1.msra.mxu0 %v162
  %459 = vmatprep.subr.mxu0 %v165
  %460 = vmatpush1.msra.mxu0 %v164
  %461 = vmatprep.subr.mxu0 %v167
  %462 = vmatpush1.msra.mxu0 %v166
  %463 = vmatprep.subr.mxu0 %v169
  %464 = vmatpush1.msra.mxu0 %v168
  %465 = vmatprep.subr.mxu0 %v171
  %466 = vmatpush1.msra.mxu0 %v170
  %467 = vmatprep.mubr.f32.mxu0 %v38
  %468 = vmatmul.mubr.f32.gmra.mrb[0].mxu0 %v37
  %v469 = vpop.f32.mrb[0].mxu0
  %v470 = vadd.f32 %v399, %v469
  %v471 = vpop.f32.mrb[0].mxu0
  %v472 = vadd.f32 %v401, %v471
  %473 = vdwg.mxu0
  %474 = vmatprep.subr.mxu0 %v173
  %475 = vmatpush1.msra.mxu0 %v172
  %476 = vmatprep.subr.mxu0 %v175
  %477 = vmatpush1.msra.mxu0 %v174
  %478 = vmatprep.subr.mxu0 %v177
  %479 = vmatpush1.msra.mxu0 %v176
  %480 = vmatprep.subr.mxu0 %v179
  %481 = vmatpush1.msra.mxu0 %v178
  %482 = vmatprep.subr.mxu0 %v181
  %483 = vmatpush1.msra.mxu0 %v180
  %484 = vmatprep.subr.mxu0 %v183
  %485 = vmatpush1.msra.mxu0 %v182
  %486 = vmatprep.subr.mxu0 %v185
  %487 = vmatpush1.msra.mxu0 %v184
  %488 = vmatprep.subr.mxu0 %v187
  %489 = vmatpush1.msra.mxu0 %v186
  %490 = vmatprep.subr.mxu0 %v189
  %491 = vmatpush1.msra.mxu0 %v188
  %492 = vmatprep.subr.mxu0 %v191
  %493 = vmatpush1.msra.mxu0 %v190
  %494 = vmatprep.subr.mxu0 %v193
  %495 = vmatpush1.msra.mxu0 %v192
  %496 = vmatprep.subr.mxu0 %v195
  %497 = vmatpush1.msra.mxu0 %v194
  %498 = vmatprep.subr.mxu0 %v197
  %499 = vmatpush1.msra.mxu0 %v196
  %500 = vmatprep.subr.mxu0 %v199
  %501 = vmatpush1.msra.mxu0 %v198
  %502 = vmatprep.subr.mxu0 %v201
  %503 = vmatpush1.msra.mxu0 %v200
  %504 = vmatprep.subr.mxu0 %v203
  %505 = vmatpush1.msra.mxu0 %v202
  %506 = vmatprep.subr.mxu0 %v205
  %507 = vmatpush1.msra.mxu0 %v204
  %508 = vmatprep.subr.mxu0 %v207
  %509 = vmatpush1.msra.mxu0 %v206
  %510 = vmatprep.subr.mxu0 %v209
  %511 = vmatpush1.msra.mxu0 %v208
  %512 = vmatprep.subr.mxu0 %v211
  %513 = vmatpush1.msra.mxu0 %v210
  %514 = vmatprep.subr.mxu0 %v213
  %515 = vmatpush1.msra.mxu0 %v212
  %516 = vmatprep.subr.mxu0 %v215
  %517 = vmatpush1.msra.mxu0 %v214
  %518 = vmatprep.subr.mxu0 %v217
  %519 = vmatpush1.msra.mxu0 %v216
  %520 = vmatprep.subr.mxu0 %v219
  %521 = vmatpush1.msra.mxu0 %v218
  %522 = vmatprep.subr.mxu0 %v221
  %523 = vmatpush1.msra.mxu0 %v220
  %524 = vmatprep.subr.mxu0 %v223
  %525 = vmatpush1.msra.mxu0 %v222
  %526 = vmatprep.subr.mxu0 %v225
  %527 = vmatpush1.msra.mxu0 %v224
  %528 = vmatprep.subr.mxu0 %v227
  %529 = vmatpush1.msra.mxu0 %v226
  %530 = vmatprep.subr.mxu0 %v229
  %531 = vmatpush1.msra.mxu0 %v228
  %532 = vmatprep.subr.mxu0 %v231
  %533 = vmatpush1.msra.mxu0 %v230
  %534 = vmatprep.subr.mxu0 %v233
  %535 = vmatpush1.msra.mxu0 %v232
  %536 = vmatprep.subr.mxu0 %v235
  %537 = vmatpush1.msra.mxu0 %v234
  %538 = vmatprep.mubr.f32.mxu0 %v40
  %539 = vmatmul.mubr.f32.gmra.mrb[0].mxu0 %v39
  %v540 = vpop.f32.mrb[0].mxu0
  %v541 = vadd.f32 %v470, %v540
  %v542 = vpop.f32.mrb[0].mxu0
  %v543 = vadd.f32 %v472, %v542
  %544 = vdwg.mxu0
  %545 = vmatprep.subr.mxu0 %v237
  %546 = vmatpush1.msra.mxu0 %v236
  %547 = vmatprep.subr.mxu0 %v239
  %548 = vmatpush1.msra.mxu0 %v238
  %549 = vmatprep.subr.mxu0 %v241
  %550 = vmatpush1.msra.mxu0 %v240
  %551 = vmatprep.subr.mxu0 %v243
  %552 = vmatpush1.msra.mxu0 %v242
  %553 = vmatprep.subr.mxu0 %v245
  %554 = vmatpush1.msra.mxu0 %v244
  %555 = vmatprep.subr.mxu0 %v247
  %556 = vmatpush1.msra.mxu0 %v246
  %557 = vmatprep.subr.mxu0 %v249
  %558 = vmatpush1.msra.mxu0 %v248
  %559 = vmatprep.subr.mxu0 %v251
  %560 = vmatpush1.msra.mxu0 %v250
  %561 = vmatprep.subr.mxu0 %v253
  %562 = vmatpush1.msra.mxu0 %v252
  %563 = vmatprep.subr.mxu0 %v255
  %564 = vmatpush1.msra.mxu0 %v254
  %565 = vmatprep.subr.mxu0 %v257
  %566 = vmatpush1.msra.mxu0 %v256
  %567 = vmatprep.subr.mxu0 %v259
  %568 = vmatpush1.msra.mxu0 %v258
  %569 = vmatprep.subr.mxu0 %v261
  %570 = vmatpush1.msra.mxu0 %v260
  %571 = vmatprep.subr.mxu0 %v263
  %572 = vmatpush1.msra.mxu0 %v262
  %573 = vmatprep.subr.mxu0 %v265
  %574 = vmatpush1.msra.mxu0 %v264
  %575 = vmatprep.subr.mxu0 %v267
  %576 = vmatpush1.msra.mxu0 %v266
  %577 = vmatprep.subr.mxu0 %v269
  %578 = vmatpush1.msra.mxu0 %v268
  %579 = vmatprep.subr.mxu0 %v271
  %580 = vmatpush1.msra.mxu0 %v270
  %581 = vmatprep.subr.mxu0 %v273
  %582 = vmatpush1.msra.mxu0 %v272
  %583 = vmatprep.subr.mxu0 %v275
  %584 = vmatpush1.msra.mxu0 %v274
  %585 = vmatprep.subr.mxu0 %v277
  %586 = vmatpush1.msra.mxu0 %v276
  %587 = vmatprep.subr.mxu0 %v279
  %588 = vmatpush1.msra.mxu0 %v278
  %589 = vmatprep.subr.mxu0 %v281
  %590 = vmatpush1.msra.mxu0 %v280
  %591 = vmatprep.subr.mxu0 %v283
  %592 = vmatpush1.msra.mxu0 %v282
  %593 = vmatprep.subr.mxu0 %v285
  %594 = vmatpush1.msra.mxu0 %v284
  %595 = vmatprep.subr.mxu0 %v287
  %596 = vmatpush1.msra.mxu0 %v286
  %597 = vmatprep.subr.mxu0 %v289
  %598 = vmatpush1.msra.mxu0 %v288
  %599 = vmatprep.subr.mxu0 %v291
  %600 = vmatpush1.msra.mxu0 %v290
  %601 = vmatprep.subr.mxu0 %v293
  %602 = vmatpush1.msra.mxu0 %v292
  %603 = vmatprep.subr.mxu0 %v295
  %604 = vmatpush1.msra.mxu0 %v294
  %605 = vmatprep.subr.mxu0 %v297
  %606 = vmatpush1.msra.mxu0 %v296
  %607 = vmatprep.subr.mxu0 %v299
  %608 = vmatpush1.msra.mxu0 %v298
  %609 = vmatprep.mubr.f32.mxu0 %v42
  %610 = vmatmul.mubr.f32.gmra.mrb[0].mxu0 %v41
  %v611 = vpop.f32.mrb[0].mxu0
  %v612 = vadd.f32 %v541, %v611
  %v613 = vpop.f32.mrb[0].mxu0
  %v614 = vadd.f32 %v543, %v613
  %615 = vdwg.mxu0
  %616 = vmatprep.subr.mxu0 %v301
  %617 = vmatpush1.msra.mxu0 %v300
  %618 = vmatprep.subr.mxu0 %v303
  %619 = vmatpush1.msra.mxu0 %v302
  %620 = vmatprep.subr.mxu0 %v305
  %621 = vmatpush1.msra.mxu0 %v304
  %622 = vmatprep.subr.mxu0 %v307
  %623 = vmatpush1.msra.mxu0 %v306
  %624 = vmatprep.subr.mxu0 %v309
  %625 = vmatpush1.msra.mxu0 %v308
  %626 = vmatprep.subr.mxu0 %v311
  %627 = vmatpush1.msra.mxu0 %v310
  %628 = vmatprep.subr.mxu0 %v313
  %629 = vmatpush1.msra.mxu0 %v312
  %630 = vmatprep.subr.mxu0 %v315
  %631 = vmatpush1.msra.mxu0 %v314
  %632 = vmatprep.subr.mxu0 %v317
  %633 = vmatpush1.msra.mxu0 %v316
  %634 = vmatprep.subr.mxu0 %v319
  %635 = vmatpush1.msra.mxu0 %v318
  %636 = vmatprep.subr.mxu0 %v321
  %637 = vmatpush1.msra.mxu0 %v320
  %638 = vmatprep.subr.mxu0 %v323
  %639 = vmatpush1.msra.mxu0 %v322
  %640 = vmatprep.subr.mxu0 %v325
  %641 = vmatpush1.msra.mxu0 %v324
  %642 = vmatprep.subr.mxu0 %v327
  %643 = vmatpush1.msra.mxu0 %v326
  %644 = vmatprep.subr.mxu0 %v329
  %645 = vmatpush1.msra.mxu0 %v328
  %646 = vmatprep.subr.mxu0 %v331
  %647 = vmatpush1.msra.mxu0 %v330
  %648 = vmatprep.subr.mxu0 0.0
  %649 = vmatpush1.msra.mxu0 0.0
  %650 = vmatprep.subr.mxu0 0.0
  %651 = vmatpush1.msra.mxu0 0.0
  %652 = vmatprep.subr.mxu0 0.0
  %653 = vmatpush1.msra.mxu0 0.0
  %654 = vmatprep.subr.mxu0 0.0
  %655 = vmatpush1.msra.mxu0 0.0
  %656 = vmatprep.subr.mxu0 0.0
  %657 = vmatpush1.msra.mxu0 0.0
  %658 = vmatprep.subr.mxu0 0.0
  %659 = vmatpush1.msra.mxu0 0.0
  %660 = vmatprep.subr.mxu0 0.0
  %661 = vmatpush1.msra.mxu0 0.0
  %662 = vmatprep.subr.mxu0 0.0
  %663 = vmatpush1.msra.mxu0 0.0
  %664 = vmatprep.subr.mxu0 0.0
  %665 = vmatpush1.msra.mxu0 0.0
  %666 = vmatprep.subr.mxu0 0.0
  %667 = vmatpush1.msra.mxu0 0.0
  %668 = vmatprep.subr.mxu0 0.0
  %669 = vmatpush1.msra.mxu0 0.0
  %670 = vmatprep.subr.mxu0 0.0
  %671 = vmatpush1.msra.mxu0 0.0
  %672 = vmatprep.subr.mxu0 0.0
  %673 = vmatpush1.msra.mxu0 0.0
  %674 = vmatprep.subr.mxu0 0.0
  %675 = vmatpush1.msra.mxu0 0.0
  %676 = vmatprep.subr.mxu0 0.0
  %677 = vmatpush1.msra.mxu0 0.0
  %678 = vmatprep.subr.mxu0 0.0
  %679 = vmatpush1.msra.mxu0 0.0
  %680 = vmatprep.mubr.f32.mxu0 0.0
  %681 = vmatmul.mubr.f32.gmra.mrb[0].mxu0 %v43
  %v682 = vpop.f32.mrb[0].mxu0
  %v683 = vadd.f32 %v612, %v682
  %v684 = vpop.f32.mrb[0].mxu0
  %v685 = vadd.f32 %v614, %v684
  %686 = vdwg.mxu0
  %v687 = vld [vmem:[%s2] sm:$0x3]
  %v689 = vlaneseq
  %v690 = vshrl.u32 %v689, 7
  %v691 = vsub.s32 0, %v690
  %v692 = vrot.slane %v687, %v691
  %v693 = vlaneseq
  %v694 = vshrl.u32 %v693, 7
  %v695 = vsub.s32 1, %v694
  %v696 = vrot.slane %v687, %v695
  %v699 = vmul.f32 %v683, %v692
  %v700 = vmul.f32 %v685, %v696
  %v701 = vld [vmem:[%s3] sm:$0x3]
  %v703 = vlaneseq
  %v704 = vshrl.u32 %v703, 7
  %v705 = vsub.s32 0, %v704
  %v706 = vrot.slane %v701, %v705
  %v707 = vlaneseq
  %v708 = vshrl.u32 %v707, 7
  %v709 = vsub.s32 1, %v708
  %v710 = vrot.slane %v701, %v709
  %v713 = vadd.f32 %v699, %v706
  %v714 = vadd.f32 %v700, %v710
  %v715 = vmax.f32 %v713, 0.0
  %v716 = vmax.f32 %v714, 0.0
  %v717 = vld [vmem:[%s4] sm:$0x3]
  %vm718 = vcmask 64512
  %v720 = vsel %vm718, %v717, 0
  %722 = vmatprep.subr.mxu0 %v716
  %723 = vmatpush1.msra.mxu0 %v715
  %724 = vmatprep.subr.mxu0 0.0
  %725 = vmatpush1.msra.mxu0 0.0
  %726 = vmatprep.subr.mxu0 0.0
  %727 = vmatpush1.msra.mxu0 0.0
  %728 = vmatprep.subr.mxu0 0.0
  %729 = vmatpush1.msra.mxu0 0.0
  %730 = vmatprep.subr.mxu0 0.0
  %731 = vmatpush1.msra.mxu0 0.0
  %732 = vmatprep.subr.mxu0 0.0
  %733 = vmatpush1.msra.mxu0 0.0
  %734 = vmatprep.subr.mxu0 0.0
  %735 = vmatpush1.msra.mxu0 0.0
  %736 = vmatprep.subr.mxu0 0.0
  %737 = vmatpush1.msra.mxu0 0.0
  %738 = vmatprep.subr.mxu0 0.0
  %739 = vmatpush1.msra.mxu0 0.0
  %740 = vmatprep.subr.mxu0 0.0
  %741 = vmatpush1.msra.mxu0 0.0
  %742 = vmatprep.subr.mxu0 0.0
  %743 = vmatpush1.msra.mxu0 0.0
  %744 = vmatprep.subr.mxu0 0.0
  %745 = vmatpush1.msra.mxu0 0.0
  %746 = vmatprep.subr.mxu0 0.0
  %747 = vmatpush1.msra.mxu0 0.0
  %748 = vmatprep.subr.mxu0 0.0
  %749 = vmatpush1.msra.mxu0 0.0
  %750 = vmatprep.subr.mxu0 0.0
  %751 = vmatpush1.msra.mxu0 0.0
  %752 = vmatprep.subr.mxu0 0.0
  %753 = vmatpush1.msra.mxu0 0.0
  %754 = vmatprep.subr.mxu0 0.0
  %755 = vmatpush1.msra.mxu0 0.0
  %756 = vmatprep.subr.mxu0 0.0
  %757 = vmatpush1.msra.mxu0 0.0
  %758 = vmatprep.subr.mxu0 0.0
  %759 = vmatpush1.msra.mxu0 0.0
  %760 = vmatprep.subr.mxu0 0.0
  %761 = vmatpush1.msra.mxu0 0.0
  %762 = vmatprep.subr.mxu0 0.0
  %763 = vmatpush1.msra.mxu0 0.0
  %764 = vmatprep.subr.mxu0 0.0
  %765 = vmatpush1.msra.mxu0 0.0
  %766 = vmatprep.subr.mxu0 0.0
  %767 = vmatpush1.msra.mxu0 0.0
  %768 = vmatprep.subr.mxu0 0.0
  %769 = vmatpush1.msra.mxu0 0.0
  %770 = vmatprep.subr.mxu0 0.0
  %771 = vmatpush1.msra.mxu0 0.0
  %772 = vmatprep.subr.mxu0 0.0
  %773 = vmatpush1.msra.mxu0 0.0
  %774 = vmatprep.subr.mxu0 0.0
  %775 = vmatpush1.msra.mxu0 0.0
  %776 = vmatprep.subr.mxu0 0.0
  %777 = vmatpush1.msra.mxu0 0.0
  %778 = vmatprep.subr.mxu0 0.0
  %779 = vmatpush1.msra.mxu0 0.0
  %780 = vmatprep.subr.mxu0 0.0
  %781 = vmatpush1.msra.mxu0 0.0
  %782 = vmatprep.subr.mxu0 0.0
  %783 = vmatpush1.msra.mxu0 0.0
  %784 = vmatprep.subr.mxu0 0.0
  %785 = vmatpush1.msra.mxu0 0.0
  %786 = vmatprep.mubr.f32.mxu0 0.0
  %787 = vmatmul.mubr.f32.gmra.mrb[0].mxu0 %v720
  %v788 = vpop.f32.mrb[0].mxu0
  %v789 = vadd.f32 0.0, %v788
  %v790 = vpop.f32.mrb[0].mxu0
  %v791 = vadd.f32 0.0, %v790
  %792 = vdwg.mxu0
  %v793 = vld [vmem:[%s5] sm:$0xff]
  %v794 = vld [vmem:[%s5 + $0x8] sm:$0xff]
  %v795 = vld [vmem:[%s5 + $0x10] sm:$0xff]
  %v796 = vld [vmem:[%s5 + $0x18] sm:$0xff]
  %v797 = vld [vmem:[%s5 + $0x20] sm:$0xff]
  %v798 = vld [vmem:[%s5 + $0x28] sm:$0xff]
  %v799 = vld [vmem:[%s5 + $0x30] sm:$0xff]
  %v800 = vld [vmem:[%s5 + $0x38] sm:$0xff]
  %v801 = vld [vmem:[%s5 + $0x40] sm:$0xff]
  %v802 = vld [vmem:[%s5 + $0x48] sm:$0xff]
  %v803 = vld [vmem:[%s5 + $0x50] sm:$0xff]
  %v804 = vld [vmem:[%s5 + $0x58] sm:$0xff]
  %v805 = vld [vmem:[%s5 + $0x60] sm:$0xff]
  %v806 = vld [vmem:[%s5 + $0x68] sm:$0xff]
  %v807 = vld [vmem:[%s5 + $0x70] sm:$0xff]
  %v808 = vld [vmem:[%s5 + $0x78] sm:$0xff]
  %v809 = vld [vmem:[%s5 + $0x80] sm:$0xff]
  %v810 = vld [vmem:[%s5 + $0x88] sm:$0xff]
  %v811 = vld [vmem:[%s5 + $0x90] sm:$0xff]
  %v812 = vld [vmem:[%s5 + $0x98] sm:$0xff]
  %v813 = vld [vmem:[%s5 + $0xa0] sm:$0xff]
  %v814 = vld [vmem:[%s5 + $0xa8] sm:$0xff]
  %v815 = vld [vmem:[%s5 + $0xb0] sm:$0xff]
  %v816 = vld [vmem:[%s5 + $0xb8] sm:$0xff]
  %v817 = vld [vmem:[%s5 + $0xc0] sm:$0xff]
  %v818 = vld [vmem:[%s5 + $0xc8] sm:$0xff]
  %v819 = vld [vmem:[%s5 + $0xd0] sm:$0xff]
  %v820 = vld [vmem:[%s5 + $0xd8] sm:$0xff]
  %v821 = vld [vmem:[%s5 + $0xe0] sm:$0xff]
  %v822 = vld [vmem:[%s5 + $0xe8] sm:$0xff]
  %v823 = vld [vmem:[%s5 + $0xf0] sm:$0xff]
  %v824 = vld [vmem:[%s5 + $0xf8] sm:$0xff]
  %v825 = vld [vmem:[%s5 + $0x100] sm:$0xff]
  %v826 = vld [vmem:[%s5 + $0x108] sm:$0xff]
  %v827 = vld [vmem:[%s5 + $0x110] sm:$0xff]
  %v828 = vld [vmem:[%s5 + $0x118] sm:$0xff]
  %v829 = vld [vmem:[%s5 + $0x120] sm:$0xff]
  %v830 = vld [vmem:[%s5 + $0x128] sm:$0xff]
  %v831 = vld [vmem:[%s5 + $0x130] sm:$0xff]
  %v832 = vld [vmem:[%s5 + $0x138] sm:$0xff]
  %v833 = vld [vmem:[%s5 + $0x140] sm:$0xff]
  %v834 = vld [vmem:[%s5 + $0x148] sm:$0xff]
  %v835 = vld [vmem:[%s5 + $0x150] sm:$0xff]
  %v836 = vld [vmem:[%s5 + $0x158] sm:$0xff]
  %v837 = vld [vmem:[%s5 + $0x160] sm:$0xff]
  %v838 = vld [vmem:[%s5 + $0x168] sm:$0xff]
  %v839 = vld [vmem:[%s5 + $0x170] sm:$0xff]
  %v840 = vld [vmem:[%s5 + $0x178] sm:$0xff]
  %v841 = vld [vmem:[%s5 + $0x180] sm:$0xff]
  %v842 = vld [vmem:[%s5 + $0x188] sm:$0xff]
  %v843 = vld [vmem:[%s5 + $0x190] sm:$0xff]
  %v844 = vld [vmem:[%s5 + $0x198] sm:$0xff]
  %v845 = vld [vmem:[%s5 + $0x1a0] sm:$0xff]
  %v846 = vld [vmem:[%s5 + $0x1a8] sm:$0xff]
  %v847 = vld [vmem:[%s5 + $0x1b0] sm:$0xff]
  %v848 = vld [vmem:[%s5 + $0x1b8] sm:$0xff]
  %v849 = vld [vmem:[%s5 + $0x1c0] sm:$0xff]
  %v850 = vld [vmem:[%s5 + $0x1c8] sm:$0xff]
  %v851 = vld [vmem:[%s5 + $0x1d0] sm:$0xff]
  %v852 = vld [vmem:[%s5 + $0x1d8] sm:$0xff]
  %v853 = vld [vmem:[%s5 + $0x1e0] sm:$0xff]
  %v854 = vld [vmem:[%s5 + $0x1e8] sm:$0xff]
  %v855 = vld [vmem:[%s5 + $0x1f0] sm:$0xff]
  %v856 = vld [vmem:[%s5 + $0x1f8] sm:$0xff]
  %857 = vmatprep.subr.mxu0 %v794
  %858 = vmatpush1.msra.mxu0 %v793
  %859 = vmatprep.subr.mxu0 %v796
  %860 = vmatpush1.msra.mxu0 %v795
  %861 = vmatprep.subr.mxu0 %v798
  %862 = vmatpush1.msra.mxu0 %v797
  %863 = vmatprep.subr.mxu0 %v800
  %864 = vmatpush1.msra.mxu0 %v799
  %865 = vmatprep.subr.mxu0 %v802
  %866 = vmatpush1.msra.mxu0 %v801
  %867 = vmatprep.subr.mxu0 %v804
  %868 = vmatpush1.msra.mxu0 %v803
  %869 = vmatprep.subr.mxu0 %v806
  %870 = vmatpush1.msra.mxu0 %v805
  %871 = vmatprep.subr.mxu0 %v808
  %872 = vmatpush1.msra.mxu0 %v807
  %873 = vmatprep.subr.mxu0 %v810
  %874 = vmatpush1.msra.mxu0 %v809
  %875 = vmatprep.subr.mxu0 %v812
  %876 = vmatpush1.msra.mxu0 %v811
  %877 = vmatprep.subr.mxu0 %v814
  %878 = vmatpush1.msra.mxu0 %v813
  %879 = vmatprep.subr.mxu0 %v816
  %880 = vmatpush1.msra.mxu0 %v815
  %881 = vmatprep.subr.mxu0 %v818
  %882 = vmatpush1.msra.mxu0 %v817
  %883 = vmatprep.subr.mxu0 %v820
  %884 = vmatpush1.msra.mxu0 %v819
  %885 = vmatprep.subr.mxu0 %v822
  %886 = vmatpush1.msra.mxu0 %v821
  %887 = vmatprep.subr.mxu0 %v824
  %888 = vmatpush1.msra.mxu0 %v823
  %889 = vmatprep.subr.mxu0 %v826
  %890 = vmatpush1.msra.mxu0 %v825
  %891 = vmatprep.subr.mxu0 %v828
  %892 = vmatpush1.msra.mxu0 %v827
  %893 = vmatprep.subr.mxu0 %v830
  %894 = vmatpush1.msra.mxu0 %v829
  %895 = vmatprep.subr.mxu0 %v832
  %896 = vmatpush1.msra.mxu0 %v831
  %897 = vmatprep.subr.mxu0 %v834
  %898 = vmatpush1.msra.mxu0 %v833
  %899 = vmatprep.subr.mxu0 %v836
  %900 = vmatpush1.msra.mxu0 %v835
  %901 = vmatprep.subr.mxu0 %v838
  %902 = vmatpush1.msra.mxu0 %v837
  %903 = vmatprep.subr.mxu0 %v840
  %904 = vmatpush1.msra.mxu0 %v839
  %905 = vmatprep.subr.mxu0 %v842
  %906 = vmatpush1.msra.mxu0 %v841
  %907 = vmatprep.subr.mxu0 %v844
  %908 = vmatpush1.msra.mxu0 %v843
  %909 = vmatprep.subr.mxu0 %v846
  %910 = vmatpush1.msra.mxu0 %v845
  %911 = vmatprep.subr.mxu0 %v848
  %912 = vmatpush1.msra.mxu0 %v847
  %913 = vmatprep.subr.mxu0 %v850
  %914 = vmatpush1.msra.mxu0 %v849
  %915 = vmatprep.subr.mxu0 %v852
  %916 = vmatpush1.msra.mxu0 %v851
  %917 = vmatprep.subr.mxu0 %v854
  %918 = vmatpush1.msra.mxu0 %v853
  %919 = vmatprep.subr.mxu0 %v856
  %920 = vmatpush1.msra.mxu0 %v855
  %921 = vmatprep.mubr.f32.mxu0 %v791
  %922 = vmatmul.mubr.f32.gmra.mrb[0].mxu0 %v789
  %v923 = vpop.f32.mrb[0].mxu0
  %v924 = vadd.f32 0.0, %v923
  %v925 = vpop.f32.mrb[0].mxu0
  %v926 = vadd.f32 0.0, %v925
  %927 = vdwg.mxu0
  %v928 = vld [vmem:[%s6] sm:$0x3]
  %v930 = vlaneseq
  %v931 = vshrl.u32 %v930, 7
  %v932 = vsub.s32 0, %v931
  %v933 = vrot.slane %v928, %v932
  %v934 = vlaneseq
  %v935 = vshrl.u32 %v934, 7
  %v936 = vsub.s32 1, %v935
  %v937 = vrot.slane %v928, %v936
  %v940 = vmul.f32 %v924, %v933
  %v941 = vmul.f32 %v926, %v937
  %v942 = vld [vmem:[%s7] sm:$0x3]
  %v944 = vlaneseq
  %v945 = vshrl.u32 %v944, 7
  %v946 = vsub.s32 0, %v945
  %v947 = vrot.slane %v942, %v946
  %v948 = vlaneseq
  %v949 = vshrl.u32 %v948, 7
  %v950 = vsub.s32 1, %v949
  %v951 = vrot.slane %v942, %v950
  %v954 = vadd.f32 %v940, %v947
  %v955 = vadd.f32 %v941, %v951
  %v956 = vmax.f32 %v954, 0.0
  %v957 = vmax.f32 %v955, 0.0
  %v958 = vld [vmem:[%s8] sm:$0xff]
  %v959 = vld [vmem:[%s8 + $0x8] sm:$0xff]
  %v960 = vld [vmem:[%s8 + $0x10] sm:$0xff]
  %v961 = vld [vmem:[%s8 + $0x18] sm:$0xff]
  %v962 = vld [vmem:[%s8 + $0x20] sm:$0xff]
  %v963 = vld [vmem:[%s8 + $0x28] sm:$0xff]
  %v964 = vld [vmem:[%s8 + $0x30] sm:$0xff]
  %v965 = vld [vmem:[%s8 + $0x38] sm:$0xff]
  %v966 = vld [vmem:[%s8 + $0x40] sm:$0xff]
  %v967 = vld [vmem:[%s8 + $0x48] sm:$0xff]
  %v968 = vld [vmem:[%s8 + $0x50] sm:$0xff]
  %v969 = vld [vmem:[%s8 + $0x58] sm:$0xff]
  %v970 = vld [vmem:[%s8 + $0x60] sm:$0xff]
  %v971 = vld [vmem:[%s8 + $0x68] sm:$0xff]
  %v972 = vld [vmem:[%s8 + $0x70] sm:$0xff]
  %v973 = vld [vmem:[%s8 + $0x78] sm:$0xff]
  %v974 = vld [vmem:[%s8 + $0x80] sm:$0xff]
  %v975 = vld [vmem:[%s8 + $0x88] sm:$0xff]
  %v976 = vld [vmem:[%s8 + $0x90] sm:$0xff]
  %v977 = vld [vmem:[%s8 + $0x98] sm:$0xff]
  %v978 = vld [vmem:[%s8 + $0xa0] sm:$0xff]
  %v979 = vld [vmem:[%s8 + $0xa8] sm:$0xff]
  %v980 = vld [vmem:[%s8 + $0xb0] sm:$0xff]
  %v981 = vld [vmem:[%s8 + $0xb8] sm:$0xff]
  %v982 = vld [vmem:[%s8 + $0xc0] sm:$0xff]
  %v983 = vld [vmem:[%s8 + $0xc8] sm:$0xff]
  %v984 = vld [vmem:[%s8 + $0xd0] sm:$0xff]
  %v985 = vld [vmem:[%s8 + $0xd8] sm:$0xff]
  %v986 = vld [vmem:[%s8 + $0xe0] sm:$0xff]
  %v987 = vld [vmem:[%s8 + $0xe8] sm:$0xff]
  %v988 = vld [vmem:[%s8 + $0xf0] sm:$0xff]
  %v989 = vld [vmem:[%s8 + $0xf8] sm:$0xff]
  %v990 = vld [vmem:[%s8 + $0x100] sm:$0xff]
  %v991 = vld [vmem:[%s8 + $0x108] sm:$0xff]
  %v992 = vld [vmem:[%s8 + $0x110] sm:$0xff]
  %v993 = vld [vmem:[%s8 + $0x118] sm:$0xff]
  %v994 = vld [vmem:[%s8 + $0x120] sm:$0xff]
  %v995 = vld [vmem:[%s8 + $0x128] sm:$0xff]
  %v996 = vld [vmem:[%s8 + $0x130] sm:$0xff]
  %v997 = vld [vmem:[%s8 + $0x138] sm:$0xff]
  %v998 = vld [vmem:[%s8 + $0x140] sm:$0xff]
  %v999 = vld [vmem:[%s8 + $0x148] sm:$0xff]
  %v1000 = vld [vmem:[%s8 + $0x150] sm:$0xff]
  %v1001 = vld [vmem:[%s8 + $0x158] sm:$0xff]
  %v1002 = vld [vmem:[%s8 + $0x160] sm:$0xff]
  %v1003 = vld [vmem:[%s8 + $0x168] sm:$0xff]
  %v1004 = vld [vmem:[%s8 + $0x170] sm:$0xff]
  %v1005 = vld [vmem:[%s8 + $0x178] sm:$0xff]
  %v1006 = vld [vmem:[%s8 + $0x180] sm:$0xff]
  %v1007 = vld [vmem:[%s8 + $0x188] sm:$0xff]
  %v1008 = vld [vmem:[%s8 + $0x190] sm:$0xff]
  %v1009 = vld [vmem:[%s8 + $0x198] sm:$0xff]
  %v1010 = vld [vmem:[%s8 + $0x1a0] sm:$0xff]
  %v1011 = vld [vmem:[%s8 + $0x1a8] sm:$0xff]
  %v1012 = vld [vmem:[%s8 + $0x1b0] sm:$0xff]
  %v1013 = vld [vmem:[%s8 + $0x1b8] sm:$0xff]
  %v1014 = vld [vmem:[%s8 + $0x1c0] sm:$0xff]
  %v1015 = vld [vmem:[%s8 + $0x1c8] sm:$0xff]
  %v1016 = vld [vmem:[%s8 + $0x1d0] sm:$0xff]
  %v1017 = vld [vmem:[%s8 + $0x1d8] sm:$0xff]
  %v1018 = vld [vmem:[%s8 + $0x1e0] sm:$0xff]
  %v1019 = vld [vmem:[%s8 + $0x1e8] sm:$0xff]
  %v1020 = vld [vmem:[%s8 + $0x1f0] sm:$0xff]
  %v1021 = vld [vmem:[%s8 + $0x1f8] sm:$0xff]
  %v1022 = vld [vmem:[%s9] sm:$0x3]
  %v1024 = vlaneseq
  %v1025 = vshrl.u32 %v1024, 7
  %v1026 = vsub.s32 0, %v1025
  %v1027 = vrot.slane %v1022, %v1026
  %v1028 = vlaneseq
  %v1029 = vshrl.u32 %v1028, 7
  %v1030 = vsub.s32 1, %v1029
  %v1031 = vrot.slane %v1022, %v1030
  %1034 = vmatprep.subr.mxu0 %v959
  %1035 = vmatpush1.msra.mxu0 %v958
  %1036 = vmatprep.subr.mxu0 %v961
  %1037 = vmatpush1.msra.mxu0 %v960
  %1038 = vmatprep.subr.mxu0 %v963
  %1039 = vmatpush1.msra.mxu0 %v962
  %1040 = vmatprep.subr.mxu0 %v965
  %1041 = vmatpush1.msra.mxu0 %v964
  %1042 = vmatprep.subr.mxu0 %v967
  %1043 = vmatpush1.msra.mxu0 %v966
  %1044 = vmatprep.subr.mxu0 %v969
  %1045 = vmatpush1.msra.mxu0 %v968
  %1046 = vmatprep.subr.mxu0 %v971
  %1047 = vmatpush1.msra.mxu0 %v970
  %1048 = vmatprep.subr.mxu0 %v973
  %1049 = vmatpush1.msra.mxu0 %v972
  %1050 = vmatprep.subr.mxu0 %v975
  %1051 = vmatpush1.msra.mxu0 %v974
  %1052 = vmatprep.subr.mxu0 %v977
  %1053 = vmatpush1.msra.mxu0 %v976
  %1054 = vmatprep.subr.mxu0 %v979
  %1055 = vmatpush1.msra.mxu0 %v978
  %1056 = vmatprep.subr.mxu0 %v981
  %1057 = vmatpush1.msra.mxu0 %v980
  %1058 = vmatprep.subr.mxu0 %v983
  %1059 = vmatpush1.msra.mxu0 %v982
  %1060 = vmatprep.subr.mxu0 %v985
  %1061 = vmatpush1.msra.mxu0 %v984
  %1062 = vmatprep.subr.mxu0 %v987
  %1063 = vmatpush1.msra.mxu0 %v986
  %1064 = vmatprep.subr.mxu0 %v989
  %1065 = vmatpush1.msra.mxu0 %v988
  %1066 = vmatprep.subr.mxu0 %v991
  %1067 = vmatpush1.msra.mxu0 %v990
  %1068 = vmatprep.subr.mxu0 %v993
  %1069 = vmatpush1.msra.mxu0 %v992
  %1070 = vmatprep.subr.mxu0 %v995
  %1071 = vmatpush1.msra.mxu0 %v994
  %1072 = vmatprep.subr.mxu0 %v997
  %1073 = vmatpush1.msra.mxu0 %v996
  %1074 = vmatprep.subr.mxu0 %v999
  %1075 = vmatpush1.msra.mxu0 %v998
  %1076 = vmatprep.subr.mxu0 %v1001
  %1077 = vmatpush1.msra.mxu0 %v1000
  %1078 = vmatprep.subr.mxu0 %v1003
  %1079 = vmatpush1.msra.mxu0 %v1002
  %1080 = vmatprep.subr.mxu0 %v1005
  %1081 = vmatpush1.msra.mxu0 %v1004
  %1082 = vmatprep.subr.mxu0 %v1007
  %1083 = vmatpush1.msra.mxu0 %v1006
  %1084 = vmatprep.subr.mxu0 %v1009
  %1085 = vmatpush1.msra.mxu0 %v1008
  %1086 = vmatprep.subr.mxu0 %v1011
  %1087 = vmatpush1.msra.mxu0 %v1010
  %1088 = vmatprep.subr.mxu0 %v1013
  %1089 = vmatpush1.msra.mxu0 %v1012
  %1090 = vmatprep.subr.mxu0 %v1015
  %1091 = vmatpush1.msra.mxu0 %v1014
  %1092 = vmatprep.subr.mxu0 %v1017
  %1093 = vmatpush1.msra.mxu0 %v1016
  %1094 = vmatprep.subr.mxu0 %v1019
  %1095 = vmatpush1.msra.mxu0 %v1018
  %1096 = vmatprep.subr.mxu0 %v1021
  %1097 = vmatpush1.msra.mxu0 %v1020
  %1098 = vmatprep.mubr.f32.mxu0 %v957
  %1099 = vmatmul.mubr.f32.gmra.mrb[0].mxu0 %v956
  %v1100 = vpop.f32.mrb[0].mxu0
  %v1101 = vadd.f32 %v1027, %v1100
  %v1102 = vpop.f32.mrb[0].mxu0
  %v1103 = vadd.f32 %v1031, %v1102
  %1104 = vdwg.mxu0
  %v1105 = vmax.f32 %v1101, 0.0
  %v1106 = vmax.f32 %v1103, 0.0
  %v1109 = vcombine.low %v1105, %v1106
  %v1111 = vunpack.c.l.s4 1983009808
  %v1112 = vunpack.c.0.s8 %v1111
  %v1113 = vlaneseq
  %v1114 = vshrl.u32 %v1113, 7
  %v1115 = vsub.s32 %v1112, %v1114
  %v1116 = vrot.slane %v1109, %v1115
  %1118 = vst [vmem:[%s10] sm:$0xf] %v1116
  // Predicated region
  $region42: #{jepa_forward.8} parent=0 // pred_check
    _
  $region43: #{jepa_forward.8} parent=0 // pred_check_branch
    %1120 = sbr.rel (0) target = $region45
  $region44: #{jepa_forward.8} parent=0 // pred_region
    _
  $region45: #{jepa_forward.8} parent=0 // pred_fallthru
    _
  // Predicated region
  $region46: #{jepa_forward.8} parent=0 // pred_check
    _
  $region47: #{jepa_forward.8} parent=0 // pred_check_branch
    %1122 = sbr.rel (0) target = $region49
  $region48: #{jepa_forward.8} parent=0 // pred_region
    _
  $region49: #{jepa_forward.8} parent=0 // pred_fallthru
    _

</llo_original>
